<compile_context>
chip_gen: v7x
topology: tpu7x:2x2x1
jax: 0.10.0
libtpu: 0.0.40
codegen_flags: <defaults>
</compile_context>

<pallas_src>
import math
import functools

import jax
import jax.numpy as jnp
from jax.experimental import pallas as pl
from jax.experimental.pallas import tpu as pltpu

# ----------------- module-consistent config -----------------
IN_CHANNELS = 2
PATCH = (4, 4, 4)          # Conv3d kernel == stride
EMB = 32                   # emb_size
DEPTH = 2                  # depth
HEADS = 4                  # num_heads (EMB % HEADS == 0)
MLP_RATIO = 4.0
OUT_CHANNELS = 6
B, D, H, W = 2, 8, 8, 8    # input volume (NCDHW)

HIDDEN = int(EMB * MLP_RATIO)
K_PATCH = IN_CHANNELS * PATCH[0] * PATCH[1] * PATCH[2]
LN_EPS = 1e-5
PACK_W = 128               # packed-parameter lane width


def _round_up(x, m):
    return (x + m - 1) // m * m


# --------------------- packed-parameter layouts (static) ---------------------
def _build_w_layout():
    """Shelf-pack all weight matrices into one (rows, 128) slab.

    Matrices with the same row count share 128-lane-wide row shelves (each gets a column
    offset), removing most of the zero padding of a one-matrix-per-row-block layout
    (~144 KiB vs ~320 KiB for this config). Row offsets stay multiples of 8 (sublanes)."""
    mats = [('wconv', K_PATCH, EMB), ('wlin', EMB, EMB)]
    for d in range(DEPTH):
        mats += [(f'wqkv{d}', EMB, 3 * EMB), (f'wo{d}', EMB, EMB),
                 (f'w1{d}', EMB, HIDDEN), (f'w2{d}', HIDDEN, EMB)]
    mats.append(('wfc', EMB, OUT_CHANNELS))

    by_rows = {}
    for name, r, c in mats:
        by_rows.setdefault(r, []).append((name, c))

    layout, row_off = {}, 0
    for r in sorted(by_rows, reverse=True):
        shelf, col = 0, PACK_W                      # force a new shelf on first entry
        for name, c in sorted(by_rows[r], key=lambda t: -t[1]):
            if col + c > PACK_W:
                shelf, col = row_off, 0
                row_off += _round_up(r, 8)
            layout[name] = (shelf, col, r, c)       # (row_off, col_off, rows, cols)
            col += c
    return layout, row_off


def _build_v_layout():
    """One row per gamma/beta/bias vector; per-layer groups start on 8-row (sublane)
    boundaries so in-kernel row selects stay within one vreg group."""
    sizes = {'bconv': EMB, 'blin': EMB, 'gf': EMB, 'bf': EMB, 'bfc': OUT_CHANNELS}
    order = ['bconv', 'blin', 'gf', 'bf', 'bfc']
    layout = {n: (i, sizes[n]) for i, n in enumerate(order)}
    row = _round_up(len(order), 8)
    for d in range(DEPTH):
        for n, c in [(f'g1{d}', EMB), (f'b1{d}', EMB), (f'bqkv{d}', 3 * EMB),
                     (f'bo{d}', EMB), (f'g2{d}', EMB), (f'b2{d}', EMB),
                     (f'bb1{d}', HIDDEN), (f'bb2{d}', EMB)]:
            layout[n] = (row, c)
            row += 1
        row = _round_up(row, 8)
    return layout, row


W_LAYOUT, W_ROWS = _build_w_layout()
V_LAYOUT, V_ROWS = _build_v_layout()


# ----------------------------- kernel helpers -----------------------------
def _layernorm(x, gamma, beta):
    mu = jnp.mean(x, axis=-1, keepdims=True)
    xc = x - mu
    var = jnp.mean(xc * xc, axis=-1, keepdims=True)          # biased var (PyTorch LN)
    return xc * jax.lax.rsqrt(var + LN_EPS) * gamma + beta


def _gelu_exact(x):
    # nn.GELU default (approximate='none'), erf-based
    return 0.5 * x * (1.0 + jax.lax.erf(x * 0.7071067811865476))


# ------------------------------- fused kernel ------------------------------
def vit_fused_kernel(p_ref, w_ref, v_ref, o_ref, *, batch, n_tokens, emb, heads, depth):
    bn = batch * n_tokens
    hd = emb // heads
    f32 = jnp.float32

    def Wm(name):                                   # packed weight-matrix view (ref slice)
        ro, co, r, c = W_LAYOUT[name]
        return w_ref[ro:ro + r, co:co + c]

    vecs = v_ref[...]                               # (V_ROWS, 128): tiny, read once

    def Vv(name):                                   # packed (1, c) row vector
        row, c = V_LAYOUT[name]
        return vecs[row:row + 1, 0:c]

    # ---- PatchEmbedding: Conv3d(stride=patch) as a patch matmul, then Linear ----
    h0 = jnp.dot(p_ref[...], Wm('wconv'), preferred_element_type=f32) + Vv('bconv')
    x = jnp.dot(h0, Wm('wlin'), preferred_element_type=f32) + Vv('blin')          # (BN, E)

    # Static attention mask: row b*N+n may only attend to rows with the same patch index n
    # (reproduces nn.MultiheadAttention over (B, N, E) with batch_first=False).
    rq = jax.lax.broadcasted_iota(jnp.int32, (bn, bn), 0)
    rk = jax.lax.broadcasted_iota(jnp.int32, (bn, bn), 1)
    if (n_tokens & (n_tokens - 1)) == 0:            # power of two: & instead of %
        same = (rq & (n_tokens - 1)) == (rk & (n_tokens - 1))
    else:
        same = (rq % n_tokens) == (rk % n_tokens)
    mask_bias = jnp.where(same, f32(0), f32(-1e30))                                # (BN, BN)

    for d in range(depth):
        # ---- attention branch: x + out_proj(softmax(q k^T / sqrt(hd)) v) ----
        xn = _layernorm(x, Vv(f'g1{d}'), Vv(f'b1{d}'))
        # 1/sqrt(hd) is folded into the packed Q weights / bias at pack time
        qkv = jnp.dot(xn, Wm(f'wqkv{d}'), preferred_element_type=f32) + Vv(f'bqkv{d}')
        ctx_parts = []
        for hh in range(heads):                     # static unroll; lane slices per head
            q_h = qkv[:, hh * hd:(hh + 1) * hd]
            k_h = qkv[:, emb + hh * hd:emb + (hh + 1) * hd]
            v_h = qkv[:, 2 * emb + hh * hd:2 * emb + (hh + 1) * hd]
            s = jax.lax.dot_general(q_h, k_h, (((1,), (1,)), ((), ())),
                                    preferred_element_type=f32) + mask_bias       # (BN, BN)
            s = s - jnp.max(s, axis=-1, keepdims=True)
            e = jnp.exp(s)
            p = e / jnp.sum(e, axis=-1, keepdims=True)                             # exact softmax
            ctx_parts.append(jnp.dot(p, v_h, preferred_element_type=f32))          # (BN, hd)
        ctx = jnp.concatenate(ctx_parts, axis=-1)                                  # (BN, E)
        x = x + jnp.dot(ctx, Wm(f'wo{d}'), preferred_element_type=f32) + Vv(f'bo{d}')

        # ---- MLP branch: x + Linear(GELU(Linear(LN(x))))  (dropouts identity in eval) ----
        xn2 = _layernorm(x, Vv(f'g2{d}'), Vv(f'b2{d}'))
        hmid = _gelu_exact(jnp.dot(xn2, Wm(f'w1{d}'), preferred_element_type=f32)
                           + Vv(f'bb1{d}'))
        x = x + jnp.dot(hmid, Wm(f'w2{d}'), preferred_element_type=f32) + Vv(f'bb2{d}')

    # ---- final LayerNorm, AdaptiveAvgPool1d(1) over tokens, classifier fc ----
    xn = _layernorm(x, Vv('gf'), Vv('bf'))
    # token mean-pool as a constant (B, BN) averaging matrix on the MXU (no reshape/
    # cross-sublane reduce on the critical path)
    col = jax.lax.broadcasted_iota(jnp.int32, (batch, bn), 1)
    row = jax.lax.broadcasted_iota(jnp.int32, (batch, bn), 0)
    lo = row * n_tokens
    pool = jnp.where((col >= lo) & (col < lo + n_tokens), f32(1.0 / n_tokens), f32(0))
    pooled = jnp.dot(pool, xn, preferred_element_type=f32)                          # (B, E)
    o_ref[...] = jnp.dot(pooled, Wm('wfc'), preferred_element_type=f32) + Vv('bfc')


# ----------------------------- forward (glue) ------------------------------
def vit_radiology_forward(x, w_slab, vec_slab):
    Bx, C, Dd, Hh, Ww = x.shape
    pd, ph, pw = PATCH
    Dp, Hp, Wp = Dd // pd, Hh // ph, Ww // pw
    N = Dp * Hp * Wp
    K = C * pd * ph * pw

    # Patch extraction: pure layout plumbing matching Conv3d(kernel=stride=patch).
    # allow_input_fusion below lets XLA fuse this transpose into the Pallas call's input
    # DMA instead of paying a separate kernel launch for it.
    patches = x.reshape(Bx, C, Dp, pd, Hp, ph, Wp, pw)
    patches = patches.transpose(0, 2, 4, 6, 1, 3, 5, 7).reshape(Bx * N, K)

    kernel = functools.partial(vit_fused_kernel, batch=Bx, n_tokens=N,
                               emb=EMB, heads=HEADS, depth=DEPTH)
    return pl.pallas_call(
        kernel,
        out_shape=jax.ShapeDtypeStruct((Bx, OUT_CHANNELS), jnp.float32),
        in_specs=[pl.BlockSpec(memory_space=pltpu.MemorySpace.VMEM)] * 3,
        out_specs=pl.BlockSpec(memory_space=pltpu.MemorySpace.VMEM),
        compiler_params=pltpu.CompilerParams(
            allow_input_fusion=[True, False, False]),
    )(patches, w_slab, vec_slab)


# ------------------------- parameter packing -------------------------
def pack_params(params):
    """Pack all parameters into two dense (rows, 128) slabs (matrices / row-vectors)."""
    scale = 1.0 / math.sqrt(EMB // HEADS)

    w_parts = {'wconv': params['wconv'], 'wlin': params['wlin'], 'wfc': params['wfc']}
    v_parts = {'bconv': params['bconv'], 'blin': params['blin'],
               'gf': params['gf'], 'bf': params['bf'], 'bfc': params['bfc']}
    for d, blk in enumerate(params['blocks']):
        # fold the 1/sqrt(head_dim) attention scale into the Q projection columns
        w_parts[f'wqkv{d}'] = blk['wqkv'].at[:, :EMB].multiply(scale)
        v_parts[f'bqkv{d}'] = blk['bqkv'].at[:, :EMB].multiply(scale)
        w_parts[f'wo{d}'] = blk['wo']
        w_parts[f'w1{d}'] = blk['w1']
        w_parts[f'w2{d}'] = blk['w2']
        v_parts[f'g1{d}'] = blk['g1']
        v_parts[f'b1{d}'] = blk['b1']
        v_parts[f'bo{d}'] = blk['bo']
        v_parts[f'g2{d}'] = blk['g2']
        v_parts[f'b2{d}'] = blk['b2']
        v_parts[f'bb1{d}'] = blk['bb1']
        v_parts[f'bb2{d}'] = blk['bb2']

    w_slab = jnp.zeros((W_ROWS, PACK_W), jnp.float32)
    for name, (ro, co, r, c) in W_LAYOUT.items():
        w_slab = w_slab.at[ro:ro + r, co:co + c].set(jnp.asarray(w_parts[name], jnp.float32))

    v_slab = jnp.zeros((V_ROWS, PACK_W), jnp.float32)
    for name, (row, c) in V_LAYOUT.items():
        v_slab = v_slab.at[row, :c].set(jnp.asarray(v_parts[name], jnp.float32).reshape(-1))
    return w_slab, v_slab


# ------------------------- deterministic parameters -------------------------
def init_params(key):
    def lin(k, fan_in, fan_out):
        return (jax.random.normal(k, (fan_in, fan_out), jnp.float32)
                / jnp.sqrt(jnp.float32(fan_in)))

    keys = jax.random.split(key, 6 + DEPTH)
    params = {
        'wconv': lin(keys[0], K_PATCH, EMB),                      # Conv3d weight (flattened)
        'bconv': 0.02 * jax.random.normal(keys[1], (1, EMB), jnp.float32),
        'wlin': lin(keys[2], EMB, EMB),                           # PatchEmbedding.linear
        'blin': 0.02 * jax.random.normal(keys[3], (1, EMB), jnp.float32),
        'gf': jnp.ones((1, EMB), jnp.float32),                    # final LayerNorm
        'bf': jnp.zeros((1, EMB), jnp.float32),
        'wfc': lin(keys[4], EMB, OUT_CHANNELS),                   # classifier fc
        'bfc': 0.02 * jax.random.normal(keys[5], (1, OUT_CHANNELS), jnp.float32),
        'blocks': [],
    }
    for d in range(DEPTH):
        bk = jax.random.split(keys[6 + d], 8)
        params['blocks'].append({
            'g1': jnp.ones((1, EMB), jnp.float32),
            'b1': jnp.zeros((1, EMB), jnp.float32),
            'wqkv': lin(bk[0], EMB, 3 * EMB),                     # in_proj_weight^T
            'bqkv': 0.02 * jax.random.normal(bk[1], (1, 3 * EMB), jnp.float32),
            'wo': lin(bk[2], EMB, EMB),                           # out_proj^T
            'bo': 0.02 * jax.random.normal(bk[3], (1, EMB), jnp.float32),
            'g2': jnp.ones((1, EMB), jnp.float32),
            'b2': jnp.zeros((1, EMB), jnp.float32),
            'w1': lin(bk[4], EMB, HIDDEN),
            'bb1': 0.02 * jax.random.normal(bk[5], (1, HIDDEN), jnp.float32),
            'w2': lin(bk[6], HIDDEN, EMB),
            'bb2': 0.02 * jax.random.normal(bk[7], (1, EMB), jnp.float32),
        })
    return params


if __name__ == "__main__":
    key = jax.random.PRNGKey(0)
    pkey, xkey = jax.random.split(key)
    params = init_params(pkey)
    w_slab, vec_slab = pack_params(params)
    x = jax.random.normal(xkey, (B, IN_CHANNELS, D, H, W), jnp.float32)

    fwd = jax.jit(vit_radiology_forward)
    out = jax.block_until_ready(fwd(x, w_slab, vec_slab))
    assert out.shape == (B, OUT_CHANNELS), out.shape
    assert bool(jnp.all(jnp.isfinite(out)))
    print("KERNEL_OK")
</pallas_src>

<mosaic_0001>
module attributes {stable_mosaic.version = 11 : i64} {
  func.func @vit_fused_kernel(%arg0: memref<16x128xf32, #tpu.memory_space<vmem>>, %arg1: memref<288x128xf32, #tpu.memory_space<vmem>>, %arg2: memref<24x128xf32, #tpu.memory_space<vmem>>, %arg3: memref<2x6xf32, #tpu.memory_space<vmem>>) attributes {dimension_semantics = [], scalar_prefetch = 0 : i64, scratch_operands = 0 : i64, tpu.core_type = #tpu.core_type<tc>} {
    %c0 = arith.constant 0 : index
    %c0_0 = arith.constant 0 : index
    %0 = vector.load %arg2[%c0, %c0_0] : memref<24x128xf32, #tpu.memory_space<vmem>>, vector<24x128xf32>
    %c0_1 = arith.constant 0 : index
    %c0_2 = arith.constant 0 : index
    %1 = vector.load %arg0[%c0_1, %c0_2] : memref<16x128xf32, #tpu.memory_space<vmem>>, vector<16x128xf32>
    %c0_3 = arith.constant 0 : index
    %c0_4 = arith.constant 0 : index
    %2 = vector.load %arg1[%c0_3, %c0_4] : memref<288x128xf32, #tpu.memory_space<vmem>>, vector<128x32xf32>
    %cst = arith.constant dense<0.000000e+00> : vector<16x32xf32>
    %3 = tpu.matmul %1, %2, %cst {dimension_numbers = #tpu.dot_dimension_numbers<[1], [0], [0], [1], [0, 0, 1, 1], [], []>} : vector<16x128xf32>, vector<128x32xf32>, vector<16x32xf32> -> vector<16x32xf32>
    %4 = vector.extract_strided_slice %0 {offsets = [0, 0], sizes = [1, 32], strides = [1, 1]} : vector<24x128xf32> to vector<1x32xf32>
    %5 = vector.broadcast %4 : vector<1x32xf32> to vector<16x32xf32>
    %6 = arith.addf %3, %5 : vector<16x32xf32>
    %c224 = arith.constant 224 : index
    %c96 = arith.constant 96 : index
    %7 = vector.load %arg1[%c224, %c96] : memref<288x128xf32, #tpu.memory_space<vmem>>, vector<32x32xf32>
    %cst_5 = arith.constant dense<0.000000e+00> : vector<16x32xf32>
    %8 = tpu.matmul %6, %7, %cst_5 {dimension_numbers = #tpu.dot_dimension_numbers<[1], [0], [0], [1], [0, 0, 1, 1], [], []>} : vector<16x32xf32>, vector<32x32xf32>, vector<16x32xf32> -> vector<16x32xf32>
    %9 = vector.extract_strided_slice %0 {offsets = [1, 0], sizes = [1, 32], strides = [1, 1]} : vector<24x128xf32> to vector<1x32xf32>
    %10 = vector.broadcast %9 : vector<1x32xf32> to vector<16x32xf32>
    %11 = arith.addf %8, %10 : vector<16x32xf32>
    %12 = tpu.iota {dimensions = array<i32: 0>} : vector<16x16xi32>
    %13 = tpu.iota {dimensions = array<i32: 1>} : vector<16x16xi32>
    %c7_i32 = arith.constant 7 : i32
    %14 = vector.broadcast %c7_i32 : i32 to vector<16x16xi32>
    %15 = arith.andi %12, %14 : vector<16x16xi32>
    %c7_i32_6 = arith.constant 7 : i32
    %16 = vector.broadcast %c7_i32_6 : i32 to vector<16x16xi32>
    %17 = arith.andi %13, %16 : vector<16x16xi32>
    %18 = arith.cmpi eq, %15, %17 : vector<16x16xi32>
    %cst_7 = arith.constant 0.000000e+00 : f32
    %cst_8 = arith.constant -1.000000e+30 : f32
    %19 = vector.broadcast %cst_7 : f32 to vector<16x16xf32>
    %20 = vector.broadcast %cst_8 : f32 to vector<16x16xf32>
    %21 = arith.select %18, %19, %20 : vector<16x16xi1>, vector<16x16xf32>
    %22 = vector.extract_strided_slice %0 {offsets = [8, 0], sizes = [1, 32], strides = [1, 1]} : vector<24x128xf32> to vector<1x32xf32>
    %23 = vector.extract_strided_slice %0 {offsets = [9, 0], sizes = [1, 32], strides = [1, 1]} : vector<24x128xf32> to vector<1x32xf32>
    %cst_9 = arith.constant dense<0.000000e+00> : vector<16xf32>
    %24 = vector.multi_reduction <add>, %11, %cst_9 [1] : vector<16x32xf32> to vector<16xf32>
    %25 = vector.shape_cast %24 : vector<16xf32> to vector<16x1xf32>
    %cst_10 = arith.constant 3.200000e+01 : f32
    %26 = vector.broadcast %cst_10 : f32 to vector<16x1xf32>
    %27 = arith.divf %25, %26 : vector<16x1xf32>
    %28 = vector.broadcast %27 : vector<16x1xf32> to vector<16x32xf32>
    %29 = arith.subf %11, %28 : vector<16x32xf32>
    %30 = arith.mulf %29, %29 : vector<16x32xf32>
    %cst_11 = arith.constant dense<0.000000e+00> : vector<16xf32>
    %31 = vector.multi_reduction <add>, %30, %cst_11 [1] : vector<16x32xf32> to vector<16xf32>
    %32 = vector.shape_cast %31 : vector<16xf32> to vector<16x1xf32>
    %cst_12 = arith.constant 3.200000e+01 : f32
    %33 = vector.broadcast %cst_12 : f32 to vector<16x1xf32>
    %34 = arith.divf %32, %33 : vector<16x1xf32>
    %cst_13 = arith.constant 9.99999974E-6 : f32
    %35 = vector.broadcast %cst_13 : f32 to vector<16x1xf32>
    %36 = arith.addf %34, %35 : vector<16x1xf32>
    %37 = math.rsqrt %36 : vector<16x1xf32>
    %38 = vector.broadcast %37 : vector<16x1xf32> to vector<16x32xf32>
    %39 = arith.mulf %29, %38 : vector<16x32xf32>
    %40 = vector.broadcast %22 : vector<1x32xf32> to vector<16x32xf32>
    %41 = arith.mulf %39, %40 : vector<16x32xf32>
    %42 = vector.broadcast %23 : vector<1x32xf32> to vector<16x32xf32>
    %43 = arith.addf %41, %42 : vector<16x32xf32>
    %c192 = arith.constant 192 : index
    %c0_14 = arith.constant 0 : index
    %44 = vector.load %arg1[%c192, %c0_14] : memref<288x128xf32, #tpu.memory_space<vmem>>, vector<32x96xf32>
    %cst_15 = arith.constant dense<0.000000e+00> : vector<16x96xf32>
    %45 = tpu.matmul %43, %44, %cst_15 {dimension_numbers = #tpu.dot_dimension_numbers<[1], [0], [0], [1], [0, 0, 1, 1], [], []>} : vector<16x32xf32>, vector<32x96xf32>, vector<16x96xf32> -> vector<16x96xf32>
    %46 = vector.extract_strided_slice %0 {offsets = [10, 0], sizes = [1, 96], strides = [1, 1]} : vector<24x128xf32> to vector<1x96xf32>
    %47 = vector.broadcast %46 : vector<1x96xf32> to vector<16x96xf32>
    %48 = arith.addf %45, %47 : vector<16x96xf32>
    %49 = vector.extract_strided_slice %48 {offsets = [0, 0], sizes = [16, 8], strides = [1, 1]} : vector<16x96xf32> to vector<16x8xf32>
    %50 = vector.extract_strided_slice %48 {offsets = [0, 32], sizes = [16, 8], strides = [1, 1]} : vector<16x96xf32> to vector<16x8xf32>
    %51 = vector.extract_strided_slice %48 {offsets = [0, 64], sizes = [16, 8], strides = [1, 1]} : vector<16x96xf32> to vector<16x8xf32>
    %cst_16 = arith.constant dense<0.000000e+00> : vector<16x16xf32>
    %52 = tpu.matmul %49, %50, %cst_16 {dimension_numbers = #tpu.dot_dimension_numbers<[1], [1], [0], [0], [0, 0, 1, 0], [], []>} : vector<16x8xf32>, vector<16x8xf32>, vector<16x16xf32> -> vector<16x16xf32>
    %53 = arith.addf %52, %21 : vector<16x16xf32>
    %cst_17 = arith.constant dense<0xFF800000> : vector<16xf32>
    %54 = vector.multi_reduction <maximumf>, %53, %cst_17 [1] : vector<16x16xf32> to vector<16xf32>
    %55 = vector.shape_cast %54 : vector<16xf32> to vector<16x1xf32>
    %56 = vector.broadcast %55 : vector<16x1xf32> to vector<16x16xf32>
    %57 = arith.subf %53, %56 : vector<16x16xf32>
    %58 = math.exp %57 : vector<16x16xf32>
    %cst_18 = arith.constant dense<0.000000e+00> : vector<16xf32>
    %59 = vector.multi_reduction <add>, %58, %cst_18 [1] : vector<16x16xf32> to vector<16xf32>
    %60 = vector.shape_cast %59 : vector<16xf32> to vector<16x1xf32>
    %61 = vector.broadcast %60 : vector<16x1xf32> to vector<16x16xf32>
    %62 = arith.divf %58, %61 : vector<16x16xf32>
    %cst_19 = arith.constant dense<0.000000e+00> : vector<16x8xf32>
    %63 = tpu.matmul %62, %51, %cst_19 {dimension_numbers = #tpu.dot_dimension_numbers<[1], [0], [0], [1], [0, 0, 1, 1], [], []>} : vector<16x16xf32>, vector<16x8xf32>, vector<16x8xf32> -> vector<16x8xf32>
    %64 = vector.extract_strided_slice %48 {offsets = [0, 8], sizes = [16, 8], strides = [1, 1]} : vector<16x96xf32> to vector<16x8xf32>
    %65 = vector.extract_strided_slice %48 {offsets = [0, 40], sizes = [16, 8], strides = [1, 1]} : vector<16x96xf32> to vector<16x8xf32>
    %66 = vector.extract_strided_slice %48 {offsets = [0, 72], sizes = [16, 8], strides = [1, 1]} : vector<16x96xf32> to vector<16x8xf32>
    %cst_20 = arith.constant dense<0.000000e+00> : vector<16x16xf32>
    %67 = tpu.matmul %64, %65, %cst_20 {dimension_numbers = #tpu.dot_dimension_numbers<[1], [1], [0], [0], [0, 0, 1, 0], [], []>} : vector<16x8xf32>, vector<16x8xf32>, vector<16x16xf32> -> vector<16x16xf32>
    %68 = arith.addf %67, %21 : vector<16x16xf32>
    %cst_21 = arith.constant dense<0xFF800000> : vector<16xf32>
    %69 = vector.multi_reduction <maximumf>, %68, %cst_21 [1] : vector<16x16xf32> to vector<16xf32>
    %70 = vector.shape_cast %69 : vector<16xf32> to vector<16x1xf32>
    %71 = vector.broadcast %70 : vector<16x1xf32> to vector<16x16xf32>
    %72 = arith.subf %68, %71 : vector<16x16xf32>
    %73 = math.exp %72 : vector<16x16xf32>
    %cst_22 = arith.constant dense<0.000000e+00> : vector<16xf32>
    %74 = vector.multi_reduction <add>, %73, %cst_22 [1] : vector<16x16xf32> to vector<16xf32>
    %75 = vector.shape_cast %74 : vector<16xf32> to vector<16x1xf32>
    %76 = vector.broadcast %75 : vector<16x1xf32> to vector<16x16xf32>
    %77 = arith.divf %73, %76 : vector<16x16xf32>
    %cst_23 = arith.constant dense<0.000000e+00> : vector<16x8xf32>
    %78 = tpu.matmul %77, %66, %cst_23 {dimension_numbers = #tpu.dot_dimension_numbers<[1], [0], [0], [1], [0, 0, 1, 1], [], []>} : vector<16x16xf32>, vector<16x8xf32>, vector<16x8xf32> -> vector<16x8xf32>
    %79 = vector.extract_strided_slice %48 {offsets = [0, 16], sizes = [16, 8], strides = [1, 1]} : vector<16x96xf32> to vector<16x8xf32>
    %80 = vector.extract_strided_slice %48 {offsets = [0, 48], sizes = [16, 8], strides = [1, 1]} : vector<16x96xf32> to vector<16x8xf32>
    %81 = vector.extract_strided_slice %48 {offsets = [0, 80], sizes = [16, 8], strides = [1, 1]} : vector<16x96xf32> to vector<16x8xf32>
    %cst_24 = arith.constant dense<0.000000e+00> : vector<16x16xf32>
    %82 = tpu.matmul %79, %80, %cst_24 {dimension_numbers = #tpu.dot_dimension_numbers<[1], [1], [0], [0], [0, 0, 1, 0], [], []>} : vector<16x8xf32>, vector<16x8xf32>, vector<16x16xf32> -> vector<16x16xf32>
    %83 = arith.addf %82, %21 : vector<16x16xf32>
    %cst_25 = arith.constant dense<0xFF800000> : vector<16xf32>
    %84 = vector.multi_reduction <maximumf>, %83, %cst_25 [1] : vector<16x16xf32> to vector<16xf32>
    %85 = vector.shape_cast %84 : vector<16xf32> to vector<16x1xf32>
    %86 = vector.broadcast %85 : vector<16x1xf32> to vector<16x16xf32>
    %87 = arith.subf %83, %86 : vector<16x16xf32>
    %88 = math.exp %87 : vector<16x16xf32>
    %cst_26 = arith.constant dense<0.000000e+00> : vector<16xf32>
    %89 = vector.multi_reduction <add>, %88, %cst_26 [1] : vector<16x16xf32> to vector<16xf32>
    %90 = vector.shape_cast %89 : vector<16xf32> to vector<16x1xf32>
    %91 = vector.broadcast %90 : vector<16x1xf32> to vector<16x16xf32>
    %92 = arith.divf %88, %91 : vector<16x16xf32>
    %cst_27 = arith.constant dense<0.000000e+00> : vector<16x8xf32>
    %93 = tpu.matmul %92, %81, %cst_27 {dimension_numbers = #tpu.dot_dimension_numbers<[1], [0], [0], [1], [0, 0, 1, 1], [], []>} : vector<16x16xf32>, vector<16x8xf32>, vector<16x8xf32> -> vector<16x8xf32>
    %94 = vector.extract_strided_slice %48 {offsets = [0, 24], sizes = [16, 8], strides = [1, 1]} : vector<16x96xf32> to vector<16x8xf32>
    %95 = vector.extract_strided_slice %48 {offsets = [0, 56], sizes = [16, 8], strides = [1, 1]} : vector<16x96xf32> to vector<16x8xf32>
    %96 = vector.extract_strided_slice %48 {offsets = [0, 88], sizes = [16, 8], strides = [1, 1]} : vector<16x96xf32> to vector<16x8xf32>
    %cst_28 = arith.constant dense<0.000000e+00> : vector<16x16xf32>
    %97 = tpu.matmul %94, %95, %cst_28 {dimension_numbers = #tpu.dot_dimension_numbers<[1], [1], [0], [0], [0, 0, 1, 0], [], []>} : vector<16x8xf32>, vector<16x8xf32>, vector<16x16xf32> -> vector<16x16xf32>
    %98 = arith.addf %97, %21 : vector<16x16xf32>
    %cst_29 = arith.constant dense<0xFF800000> : vector<16xf32>
    %99 = vector.multi_reduction <maximumf>, %98, %cst_29 [1] : vector<16x16xf32> to vector<16xf32>
    %100 = vector.shape_cast %99 : vector<16xf32> to vector<16x1xf32>
    %101 = vector.broadcast %100 : vector<16x1xf32> to vector<16x16xf32>
    %102 = arith.subf %98, %101 : vector<16x16xf32>
    %103 = math.exp %102 : vector<16x16xf32>
    %cst_30 = arith.constant dense<0.000000e+00> : vector<16xf32>
    %104 = vector.multi_reduction <add>, %103, %cst_30 [1] : vector<16x16xf32> to vector<16xf32>
    %105 = vector.shape_cast %104 : vector<16xf32> to vector<16x1xf32>
    %106 = vector.broadcast %105 : vector<16x1xf32> to vector<16x16xf32>
    %107 = arith.divf %103, %106 : vector<16x16xf32>
    %cst_31 = arith.constant dense<0.000000e+00> : vector<16x8xf32>
    %108 = tpu.matmul %107, %96, %cst_31 {dimension_numbers = #tpu.dot_dimension_numbers<[1], [0], [0], [1], [0, 0, 1, 1], [], []>} : vector<16x16xf32>, vector<16x8xf32>, vector<16x8xf32> -> vector<16x8xf32>
    %109 = tpu.concatenate %63, %78, %93, %108 in 1 : vector<16x8xf32>, vector<16x8xf32>, vector<16x8xf32>, vector<16x8xf32> -> vector<16x32xf32>
    %c256 = arith.constant 256 : index
    %c0_32 = arith.constant 0 : index
    %110 = vector.load %arg1[%c256, %c0_32] : memref<288x128xf32, #tpu.memory_space<vmem>>, vector<32x32xf32>
    %cst_33 = arith.constant dense<0.000000e+00> : vector<16x32xf32>
    %111 = tpu.matmul %109, %110, %cst_33 {dimension_numbers = #tpu.dot_dimension_numbers<[1], [0], [0], [1], [0, 0, 1, 1], [], []>} : vector<16x32xf32>, vector<32x32xf32>, vector<16x32xf32> -> vector<16x32xf32>
    %112 = arith.addf %11, %111 : vector<16x32xf32>
    %113 = vector.extract_strided_slice %0 {offsets = [11, 0], sizes = [1, 32], strides = [1, 1]} : vector<24x128xf32> to vector<1x32xf32>
    %114 = vector.broadcast %113 : vector<1x32xf32> to vector<16x32xf32>
    %115 = arith.addf %112, %114 : vector<16x32xf32>
    %116 = vector.extract_strided_slice %0 {offsets = [12, 0], sizes = [1, 32], strides = [1, 1]} : vector<24x128xf32> to vector<1x32xf32>
    %117 = vector.extract_strided_slice %0 {offsets = [13, 0], sizes = [1, 32], strides = [1, 1]} : vector<24x128xf32> to vector<1x32xf32>
    %cst_34 = arith.constant dense<0.000000e+00> : vector<16xf32>
    %118 = vector.multi_reduction <add>, %115, %cst_34 [1] : vector<16x32xf32> to vector<16xf32>
    %119 = vector.shape_cast %118 : vector<16xf32> to vector<16x1xf32>
    %cst_35 = arith.constant 3.200000e+01 : f32
    %120 = vector.broadcast %cst_35 : f32 to vector<16x1xf32>
    %121 = arith.divf %119, %120 : vector<16x1xf32>
    %122 = vector.broadcast %121 : vector<16x1xf32> to vector<16x32xf32>
    %123 = arith.subf %115, %122 : vector<16x32xf32>
    %124 = arith.mulf %123, %123 : vector<16x32xf32>
    %cst_36 = arith.constant dense<0.000000e+00> : vector<16xf32>
    %125 = vector.multi_reduction <add>, %124, %cst_36 [1] : vector<16x32xf32> to vector<16xf32>
    %126 = vector.shape_cast %125 : vector<16xf32> to vector<16x1xf32>
    %cst_37 = arith.constant 3.200000e+01 : f32
    %127 = vector.broadcast %cst_37 : f32 to vector<16x1xf32>
    %128 = arith.divf %126, %127 : vector<16x1xf32>
    %cst_38 = arith.constant 9.99999974E-6 : f32
    %129 = vector.broadcast %cst_38 : f32 to vector<16x1xf32>
    %130 = arith.addf %128, %129 : vector<16x1xf32>
    %131 = math.rsqrt %130 : vector<16x1xf32>
    %132 = vector.broadcast %131 : vector<16x1xf32> to vector<16x32xf32>
    %133 = arith.mulf %123, %132 : vector<16x32xf32>
    %134 = vector.broadcast %116 : vector<1x32xf32> to vector<16x32xf32>
    %135 = arith.mulf %133, %134 : vector<16x32xf32>
    %136 = vector.broadcast %117 : vector<1x32xf32> to vector<16x32xf32>
    %137 = arith.addf %135, %136 : vector<16x32xf32>
    %c128 = arith.constant 128 : index
    %c0_39 = arith.constant 0 : index
    %138 = vector.load %arg1[%c128, %c0_39] : memref<288x128xf32, #tpu.memory_space<vmem>>, vector<32x128xf32>
    %cst_40 = arith.constant dense<0.000000e+00> : vector<16x128xf32>
    %139 = tpu.matmul %137, %138, %cst_40 {dimension_numbers = #tpu.dot_dimension_numbers<[1], [0], [0], [1], [0, 0, 1, 1], [], []>} : vector<16x32xf32>, vector<32x128xf32>, vector<16x128xf32> -> vector<16x128xf32>
    %140 = vector.extract_strided_slice %0 {offsets = [14, 0], sizes = [1, 128], strides = [1, 1]} : vector<24x128xf32> to vector<1x128xf32>
    %141 = vector.broadcast %140 : vector<1x128xf32> to vector<16x128xf32>
    %142 = arith.addf %139, %141 : vector<16x128xf32>
    %cst_41 = arith.constant 5.000000e-01 : f32
    %143 = vector.broadcast %cst_41 : f32 to vector<16x128xf32>
    %144 = arith.mulf %143, %142 : vector<16x128xf32>
    %cst_42 = arith.constant 0.707106769 : f32
    %145 = vector.broadcast %cst_42 : f32 to vector<16x128xf32>
    %146 = arith.mulf %142, %145 : vector<16x128xf32>
    %147 = math.erf %146 : vector<16x128xf32>
    %cst_43 = arith.constant 1.000000e+00 : f32
    %148 = vector.broadcast %cst_43 : f32 to vector<16x128xf32>
    %149 = arith.addf %148, %147 : vector<16x128xf32>
    %150 = arith.mulf %144, %149 : vector<16x128xf32>
    %c0_44 = arith.constant 0 : index
    %c32 = arith.constant 32 : index
    %151 = vector.load %arg1[%c0_44, %c32] : memref<288x128xf32, #tpu.memory_space<vmem>>, vector<128x32xf32>
    %cst_45 = arith.constant dense<0.000000e+00> : vector<16x32xf32>
    %152 = tpu.matmul %150, %151, %cst_45 {dimension_numbers = #tpu.dot_dimension_numbers<[1], [0], [0], [1], [0, 0, 1, 1], [], []>} : vector<16x128xf32>, vector<128x32xf32>, vector<16x32xf32> -> vector<16x32xf32>
    %153 = arith.addf %115, %152 : vector<16x32xf32>
    %154 = vector.extract_strided_slice %0 {offsets = [15, 0], sizes = [1, 32], strides = [1, 1]} : vector<24x128xf32> to vector<1x32xf32>
    %155 = vector.broadcast %154 : vector<1x32xf32> to vector<16x32xf32>
    %156 = arith.addf %153, %155 : vector<16x32xf32>
    %157 = vector.extract_strided_slice %0 {offsets = [16, 0], sizes = [1, 32], strides = [1, 1]} : vector<24x128xf32> to vector<1x32xf32>
    %158 = vector.extract_strided_slice %0 {offsets = [17, 0], sizes = [1, 32], strides = [1, 1]} : vector<24x128xf32> to vector<1x32xf32>
    %cst_46 = arith.constant dense<0.000000e+00> : vector<16xf32>
    %159 = vector.multi_reduction <add>, %156, %cst_46 [1] : vector<16x32xf32> to vector<16xf32>
    %160 = vector.shape_cast %159 : vector<16xf32> to vector<16x1xf32>
    %cst_47 = arith.constant 3.200000e+01 : f32
    %161 = vector.broadcast %cst_47 : f32 to vector<16x1xf32>
    %162 = arith.divf %160, %161 : vector<16x1xf32>
    %163 = vector.broadcast %162 : vector<16x1xf32> to vector<16x32xf32>
    %164 = arith.subf %156, %163 : vector<16x32xf32>
    %165 = arith.mulf %164, %164 : vector<16x32xf32>
    %cst_48 = arith.constant dense<0.000000e+00> : vector<16xf32>
    %166 = vector.multi_reduction <add>, %165, %cst_48 [1] : vector<16x32xf32> to vector<16xf32>
    %167 = vector.shape_cast %166 : vector<16xf32> to vector<16x1xf32>
    %cst_49 = arith.constant 3.200000e+01 : f32
    %168 = vector.broadcast %cst_49 : f32 to vector<16x1xf32>
    %169 = arith.divf %167, %168 : vector<16x1xf32>
    %cst_50 = arith.constant 9.99999974E-6 : f32
    %170 = vector.broadcast %cst_50 : f32 to vector<16x1xf32>
    %171 = arith.addf %169, %170 : vector<16x1xf32>
    %172 = math.rsqrt %171 : vector<16x1xf32>
    %173 = vector.broadcast %172 : vector<16x1xf32> to vector<16x32xf32>
    %174 = arith.mulf %164, %173 : vector<16x32xf32>
    %175 = vector.broadcast %157 : vector<1x32xf32> to vector<16x32xf32>
    %176 = arith.mulf %174, %175 : vector<16x32xf32>
    %177 = vector.broadcast %158 : vector<1x32xf32> to vector<16x32xf32>
    %178 = arith.addf %176, %177 : vector<16x32xf32>
    %c224_51 = arith.constant 224 : index
    %c0_52 = arith.constant 0 : index
    %179 = vector.load %arg1[%c224_51, %c0_52] : memref<288x128xf32, #tpu.memory_space<vmem>>, vector<32x96xf32>
    %cst_53 = arith.constant dense<0.000000e+00> : vector<16x96xf32>
    %180 = tpu.matmul %178, %179, %cst_53 {dimension_numbers = #tpu.dot_dimension_numbers<[1], [0], [0], [1], [0, 0, 1, 1], [], []>} : vector<16x32xf32>, vector<32x96xf32>, vector<16x96xf32> -> vector<16x96xf32>
    %181 = vector.extract_strided_slice %0 {offsets = [18, 0], sizes = [1, 96], strides = [1, 1]} : vector<24x128xf32> to vector<1x96xf32>
    %182 = vector.broadcast %181 : vector<1x96xf32> to vector<16x96xf32>
    %183 = arith.addf %180, %182 : vector<16x96xf32>
    %184 = vector.extract_strided_slice %183 {offsets = [0, 0], sizes = [16, 8], strides = [1, 1]} : vector<16x96xf32> to vector<16x8xf32>
    %185 = vector.extract_strided_slice %183 {offsets = [0, 32], sizes = [16, 8], strides = [1, 1]} : vector<16x96xf32> to vector<16x8xf32>
    %186 = vector.extract_strided_slice %183 {offsets = [0, 64], sizes = [16, 8], strides = [1, 1]} : vector<16x96xf32> to vector<16x8xf32>
    %cst_54 = arith.constant dense<0.000000e+00> : vector<16x16xf32>
    %187 = tpu.matmul %184, %185, %cst_54 {dimension_numbers = #tpu.dot_dimension_numbers<[1], [1], [0], [0], [0, 0, 1, 0], [], []>} : vector<16x8xf32>, vector<16x8xf32>, vector<16x16xf32> -> vector<16x16xf32>
    %188 = arith.addf %187, %21 : vector<16x16xf32>
    %cst_55 = arith.constant dense<0xFF800000> : vector<16xf32>
    %189 = vector.multi_reduction <maximumf>, %188, %cst_55 [1] : vector<16x16xf32> to vector<16xf32>
    %190 = vector.shape_cast %189 : vector<16xf32> to vector<16x1xf32>
    %191 = vector.broadcast %190 : vector<16x1xf32> to vector<16x16xf32>
    %192 = arith.subf %188, %191 : vector<16x16xf32>
    %193 = math.exp %192 : vector<16x16xf32>
    %cst_56 = arith.constant dense<0.000000e+00> : vector<16xf32>
    %194 = vector.multi_reduction <add>, %193, %cst_56 [1] : vector<16x16xf32> to vector<16xf32>
    %195 = vector.shape_cast %194 : vector<16xf32> to vector<16x1xf32>
    %196 = vector.broadcast %195 : vector<16x1xf32> to vector<16x16xf32>
    %197 = arith.divf %193, %196 : vector<16x16xf32>
    %cst_57 = arith.constant dense<0.000000e+00> : vector<16x8xf32>
    %198 = tpu.matmul %197, %186, %cst_57 {dimension_numbers = #tpu.dot_dimension_numbers<[1], [0], [0], [1], [0, 0, 1, 1], [], []>} : vector<16x16xf32>, vector<16x8xf32>, vector<16x8xf32> -> vector<16x8xf32>
    %199 = vector.extract_strided_slice %183 {offsets = [0, 8], sizes = [16, 8], strides = [1, 1]} : vector<16x96xf32> to vector<16x8xf32>
    %200 = vector.extract_strided_slice %183 {offsets = [0, 40], sizes = [16, 8], strides = [1, 1]} : vector<16x96xf32> to vector<16x8xf32>
    %201 = vector.extract_strided_slice %183 {offsets = [0, 72], sizes = [16, 8], strides = [1, 1]} : vector<16x96xf32> to vector<16x8xf32>
    %cst_58 = arith.constant dense<0.000000e+00> : vector<16x16xf32>
    %202 = tpu.matmul %199, %200, %cst_58 {dimension_numbers = #tpu.dot_dimension_numbers<[1], [1], [0], [0], [0, 0, 1, 0], [], []>} : vector<16x8xf32>, vector<16x8xf32>, vector<16x16xf32> -> vector<16x16xf32>
    %203 = arith.addf %202, %21 : vector<16x16xf32>
    %cst_59 = arith.constant dense<0xFF800000> : vector<16xf32>
    %204 = vector.multi_reduction <maximumf>, %203, %cst_59 [1] : vector<16x16xf32> to vector<16xf32>
    %205 = vector.shape_cast %204 : vector<16xf32> to vector<16x1xf32>
    %206 = vector.broadcast %205 : vector<16x1xf32> to vector<16x16xf32>
    %207 = arith.subf %203, %206 : vector<16x16xf32>
    %208 = math.exp %207 : vector<16x16xf32>
    %cst_60 = arith.constant dense<0.000000e+00> : vector<16xf32>
    %209 = vector.multi_reduction <add>, %208, %cst_60 [1] : vector<16x16xf32> to vector<16xf32>
    %210 = vector.shape_cast %209 : vector<16xf32> to vector<16x1xf32>
    %211 = vector.broadcast %210 : vector<16x1xf32> to vector<16x16xf32>
    %212 = arith.divf %208, %211 : vector<16x16xf32>
    %cst_61 = arith.constant dense<0.000000e+00> : vector<16x8xf32>
    %213 = tpu.matmul %212, %201, %cst_61 {dimension_numbers = #tpu.dot_dimension_numbers<[1], [0], [0], [1], [0, 0, 1, 1], [], []>} : vector<16x16xf32>, vector<16x8xf32>, vector<16x8xf32> -> vector<16x8xf32>
    %214 = vector.extract_strided_slice %183 {offsets = [0, 16], sizes = [16, 8], strides = [1, 1]} : vector<16x96xf32> to vector<16x8xf32>
    %215 = vector.extract_strided_slice %183 {offsets = [0, 48], sizes = [16, 8], strides = [1, 1]} : vector<16x96xf32> to vector<16x8xf32>
    %216 = vector.extract_strided_slice %183 {offsets = [0, 80], sizes = [16, 8], strides = [1, 1]} : vector<16x96xf32> to vector<16x8xf32>
    %cst_62 = arith.constant dense<0.000000e+00> : vector<16x16xf32>
    %217 = tpu.matmul %214, %215, %cst_62 {dimension_numbers = #tpu.dot_dimension_numbers<[1], [1], [0], [0], [0, 0, 1, 0], [], []>} : vector<16x8xf32>, vector<16x8xf32>, vector<16x16xf32> -> vector<16x16xf32>
    %218 = arith.addf %217, %21 : vector<16x16xf32>
    %cst_63 = arith.constant dense<0xFF800000> : vector<16xf32>
    %219 = vector.multi_reduction <maximumf>, %218, %cst_63 [1] : vector<16x16xf32> to vector<16xf32>
    %220 = vector.shape_cast %219 : vector<16xf32> to vector<16x1xf32>
    %221 = vector.broadcast %220 : vector<16x1xf32> to vector<16x16xf32>
    %222 = arith.subf %218, %221 : vector<16x16xf32>
    %223 = math.exp %222 : vector<16x16xf32>
    %cst_64 = arith.constant dense<0.000000e+00> : vector<16xf32>
    %224 = vector.multi_reduction <add>, %223, %cst_64 [1] : vector<16x16xf32> to vector<16xf32>
    %225 = vector.shape_cast %224 : vector<16xf32> to vector<16x1xf32>
    %226 = vector.broadcast %225 : vector<16x1xf32> to vector<16x16xf32>
    %227 = arith.divf %223, %226 : vector<16x16xf32>
    %cst_65 = arith.constant dense<0.000000e+00> : vector<16x8xf32>
    %228 = tpu.matmul %227, %216, %cst_65 {dimension_numbers = #tpu.dot_dimension_numbers<[1], [0], [0], [1], [0, 0, 1, 1], [], []>} : vector<16x16xf32>, vector<16x8xf32>, vector<16x8xf32> -> vector<16x8xf32>
    %229 = vector.extract_strided_slice %183 {offsets = [0, 24], sizes = [16, 8], strides = [1, 1]} : vector<16x96xf32> to vector<16x8xf32>
    %230 = vector.extract_strided_slice %183 {offsets = [0, 56], sizes = [16, 8], strides = [1, 1]} : vector<16x96xf32> to vector<16x8xf32>
    %231 = vector.extract_strided_slice %183 {offsets = [0, 88], sizes = [16, 8], strides = [1, 1]} : vector<16x96xf32> to vector<16x8xf32>
    %cst_66 = arith.constant dense<0.000000e+00> : vector<16x16xf32>
    %232 = tpu.matmul %229, %230, %cst_66 {dimension_numbers = #tpu.dot_dimension_numbers<[1], [1], [0], [0], [0, 0, 1, 0], [], []>} : vector<16x8xf32>, vector<16x8xf32>, vector<16x16xf32> -> vector<16x16xf32>
    %233 = arith.addf %232, %21 : vector<16x16xf32>
    %cst_67 = arith.constant dense<0xFF800000> : vector<16xf32>
    %234 = vector.multi_reduction <maximumf>, %233, %cst_67 [1] : vector<16x16xf32> to vector<16xf32>
    %235 = vector.shape_cast %234 : vector<16xf32> to vector<16x1xf32>
    %236 = vector.broadcast %235 : vector<16x1xf32> to vector<16x16xf32>
    %237 = arith.subf %233, %236 : vector<16x16xf32>
    %238 = math.exp %237 : vector<16x16xf32>
    %cst_68 = arith.constant dense<0.000000e+00> : vector<16xf32>
    %239 = vector.multi_reduction <add>, %238, %cst_68 [1] : vector<16x16xf32> to vector<16xf32>
    %240 = vector.shape_cast %239 : vector<16xf32> to vector<16x1xf32>
    %241 = vector.broadcast %240 : vector<16x1xf32> to vector<16x16xf32>
    %242 = arith.divf %238, %241 : vector<16x16xf32>
    %cst_69 = arith.constant dense<0.000000e+00> : vector<16x8xf32>
    %243 = tpu.matmul %242, %231, %cst_69 {dimension_numbers = #tpu.dot_dimension_numbers<[1], [0], [0], [1], [0, 0, 1, 1], [], []>} : vector<16x16xf32>, vector<16x8xf32>, vector<16x8xf32> -> vector<16x8xf32>
    %244 = tpu.concatenate %198, %213, %228, %243 in 1 : vector<16x8xf32>, vector<16x8xf32>, vector<16x8xf32>, vector<16x8xf32> -> vector<16x32xf32>
    %c256_70 = arith.constant 256 : index
    %c32_71 = arith.constant 32 : index
    %245 = vector.load %arg1[%c256_70, %c32_71] : memref<288x128xf32, #tpu.memory_space<vmem>>, vector<32x32xf32>
    %cst_72 = arith.constant dense<0.000000e+00> : vector<16x32xf32>
    %246 = tpu.matmul %244, %245, %cst_72 {dimension_numbers = #tpu.dot_dimension_numbers<[1], [0], [0], [1], [0, 0, 1, 1], [], []>} : vector<16x32xf32>, vector<32x32xf32>, vector<16x32xf32> -> vector<16x32xf32>
    %247 = arith.addf %156, %246 : vector<16x32xf32>
    %248 = vector.extract_strided_slice %0 {offsets = [19, 0], sizes = [1, 32], strides = [1, 1]} : vector<24x128xf32> to vector<1x32xf32>
    %249 = vector.broadcast %248 : vector<1x32xf32> to vector<16x32xf32>
    %250 = arith.addf %247, %249 : vector<16x32xf32>
    %251 = vector.extract_strided_slice %0 {offsets = [20, 0], sizes = [1, 32], strides = [1, 1]} : vector<24x128xf32> to vector<1x32xf32>
    %252 = vector.extract_strided_slice %0 {offsets = [21, 0], sizes = [1, 32], strides = [1, 1]} : vector<24x128xf32> to vector<1x32xf32>
    %cst_73 = arith.constant dense<0.000000e+00> : vector<16xf32>
    %253 = vector.multi_reduction <add>, %250, %cst_73 [1] : vector<16x32xf32> to vector<16xf32>
    %254 = vector.shape_cast %253 : vector<16xf32> to vector<16x1xf32>
    %cst_74 = arith.constant 3.200000e+01 : f32
    %255 = vector.broadcast %cst_74 : f32 to vector<16x1xf32>
    %256 = arith.divf %254, %255 : vector<16x1xf32>
    %257 = vector.broadcast %256 : vector<16x1xf32> to vector<16x32xf32>
    %258 = arith.subf %250, %257 : vector<16x32xf32>
    %259 = arith.mulf %258, %258 : vector<16x32xf32>
    %cst_75 = arith.constant dense<0.000000e+00> : vector<16xf32>
    %260 = vector.multi_reduction <add>, %259, %cst_75 [1] : vector<16x32xf32> to vector<16xf32>
    %261 = vector.shape_cast %260 : vector<16xf32> to vector<16x1xf32>
    %cst_76 = arith.constant 3.200000e+01 : f32
    %262 = vector.broadcast %cst_76 : f32 to vector<16x1xf32>
    %263 = arith.divf %261, %262 : vector<16x1xf32>
    %cst_77 = arith.constant 9.99999974E-6 : f32
    %264 = vector.broadcast %cst_77 : f32 to vector<16x1xf32>
    %265 = arith.addf %263, %264 : vector<16x1xf32>
    %266 = math.rsqrt %265 : vector<16x1xf32>
    %267 = vector.broadcast %266 : vector<16x1xf32> to vector<16x32xf32>
    %268 = arith.mulf %258, %267 : vector<16x32xf32>
    %269 = vector.broadcast %251 : vector<1x32xf32> to vector<16x32xf32>
    %270 = arith.mulf %268, %269 : vector<16x32xf32>
    %271 = vector.broadcast %252 : vector<1x32xf32> to vector<16x32xf32>
    %272 = arith.addf %270, %271 : vector<16x32xf32>
    %c160 = arith.constant 160 : index
    %c0_78 = arith.constant 0 : index
    %273 = vector.load %arg1[%c160, %c0_78] : memref<288x128xf32, #tpu.memory_space<vmem>>, vector<32x128xf32>
    %cst_79 = arith.constant dense<0.000000e+00> : vector<16x128xf32>
    %274 = tpu.matmul %272, %273, %cst_79 {dimension_numbers = #tpu.dot_dimension_numbers<[1], [0], [0], [1], [0, 0, 1, 1], [], []>} : vector<16x32xf32>, vector<32x128xf32>, vector<16x128xf32> -> vector<16x128xf32>
    %275 = vector.extract_strided_slice %0 {offsets = [22, 0], sizes = [1, 128], strides = [1, 1]} : vector<24x128xf32> to vector<1x128xf32>
    %276 = vector.broadcast %275 : vector<1x128xf32> to vector<16x128xf32>
    %277 = arith.addf %274, %276 : vector<16x128xf32>
    %cst_80 = arith.constant 5.000000e-01 : f32
    %278 = vector.broadcast %cst_80 : f32 to vector<16x128xf32>
    %279 = arith.mulf %278, %277 : vector<16x128xf32>
    %cst_81 = arith.constant 0.707106769 : f32
    %280 = vector.broadcast %cst_81 : f32 to vector<16x128xf32>
    %281 = arith.mulf %277, %280 : vector<16x128xf32>
    %282 = math.erf %281 : vector<16x128xf32>
    %cst_82 = arith.constant 1.000000e+00 : f32
    %283 = vector.broadcast %cst_82 : f32 to vector<16x128xf32>
    %284 = arith.addf %283, %282 : vector<16x128xf32>
    %285 = arith.mulf %279, %284 : vector<16x128xf32>
    %c0_83 = arith.constant 0 : index
    %c64 = arith.constant 64 : index
    %286 = vector.load %arg1[%c0_83, %c64] : memref<288x128xf32, #tpu.memory_space<vmem>>, vector<128x32xf32>
    %cst_84 = arith.constant dense<0.000000e+00> : vector<16x32xf32>
    %287 = tpu.matmul %285, %286, %cst_84 {dimension_numbers = #tpu.dot_dimension_numbers<[1], [0], [0], [1], [0, 0, 1, 1], [], []>} : vector<16x128xf32>, vector<128x32xf32>, vector<16x32xf32> -> vector<16x32xf32>
    %288 = arith.addf %250, %287 : vector<16x32xf32>
    %289 = vector.extract_strided_slice %0 {offsets = [23, 0], sizes = [1, 32], strides = [1, 1]} : vector<24x128xf32> to vector<1x32xf32>
    %290 = vector.broadcast %289 : vector<1x32xf32> to vector<16x32xf32>
    %291 = arith.addf %288, %290 : vector<16x32xf32>
    %292 = vector.extract_strided_slice %0 {offsets = [2, 0], sizes = [1, 32], strides = [1, 1]} : vector<24x128xf32> to vector<1x32xf32>
    %293 = vector.extract_strided_slice %0 {offsets = [3, 0], sizes = [1, 32], strides = [1, 1]} : vector<24x128xf32> to vector<1x32xf32>
    %cst_85 = arith.constant dense<0.000000e+00> : vector<16xf32>
    %294 = vector.multi_reduction <add>, %291, %cst_85 [1] : vector<16x32xf32> to vector<16xf32>
    %295 = vector.shape_cast %294 : vector<16xf32> to vector<16x1xf32>
    %cst_86 = arith.constant 3.200000e+01 : f32
    %296 = vector.broadcast %cst_86 : f32 to vector<16x1xf32>
    %297 = arith.divf %295, %296 : vector<16x1xf32>
    %298 = vector.broadcast %297 : vector<16x1xf32> to vector<16x32xf32>
    %299 = arith.subf %291, %298 : vector<16x32xf32>
    %300 = arith.mulf %299, %299 : vector<16x32xf32>
    %cst_87 = arith.constant dense<0.000000e+00> : vector<16xf32>
    %301 = vector.multi_reduction <add>, %300, %cst_87 [1] : vector<16x32xf32> to vector<16xf32>
    %302 = vector.shape_cast %301 : vector<16xf32> to vector<16x1xf32>
    %cst_88 = arith.constant 3.200000e+01 : f32
    %303 = vector.broadcast %cst_88 : f32 to vector<16x1xf32>
    %304 = arith.divf %302, %303 : vector<16x1xf32>
    %cst_89 = arith.constant 9.99999974E-6 : f32
    %305 = vector.broadcast %cst_89 : f32 to vector<16x1xf32>
    %306 = arith.addf %304, %305 : vector<16x1xf32>
    %307 = math.rsqrt %306 : vector<16x1xf32>
    %308 = vector.broadcast %307 : vector<16x1xf32> to vector<16x32xf32>
    %309 = arith.mulf %299, %308 : vector<16x32xf32>
    %310 = vector.broadcast %292 : vector<1x32xf32> to vector<16x32xf32>
    %311 = arith.mulf %309, %310 : vector<16x32xf32>
    %312 = vector.broadcast %293 : vector<1x32xf32> to vector<16x32xf32>
    %313 = arith.addf %311, %312 : vector<16x32xf32>
    %314 = tpu.iota {dimensions = array<i32: 1>} : vector<2x16xi32>
    %315 = tpu.iota {dimensions = array<i32: 0>} : vector<2x16xi32>
    %c8_i32 = arith.constant 8 : i32
    %316 = vector.broadcast %c8_i32 : i32 to vector<2x16xi32>
    %317 = arith.muli %315, %316 : vector<2x16xi32>
    %318 = arith.cmpi sge, %314, %317 : vector<2x16xi32>
    %c8_i32_90 = arith.constant 8 : i32
    %319 = vector.broadcast %c8_i32_90 : i32 to vector<2x16xi32>
    %320 = arith.addi %317, %319 : vector<2x16xi32>
    %321 = arith.cmpi slt, %314, %320 : vector<2x16xi32>
    %322 = arith.andi %318, %321 : vector<2x16xi1>
    %cst_91 = arith.constant 1.250000e-01 : f32
    %cst_92 = arith.constant 0.000000e+00 : f32
    %323 = vector.broadcast %cst_91 : f32 to vector<2x16xf32>
    %324 = vector.broadcast %cst_92 : f32 to vector<2x16xf32>
    %325 = arith.select %322, %323, %324 : vector<2x16xi1>, vector<2x16xf32>
    %cst_93 = arith.constant dense<0.000000e+00> : vector<2x32xf32>
    %326 = tpu.matmul %325, %313, %cst_93 {dimension_numbers = #tpu.dot_dimension_numbers<[1], [0], [0], [1], [0, 0, 1, 1], [], []>} : vector<2x16xf32>, vector<16x32xf32>, vector<2x32xf32> -> vector<2x32xf32>
    %c256_94 = arith.constant 256 : index
    %c64_95 = arith.constant 64 : index
    %327 = vector.load %arg1[%c256_94, %c64_95] : memref<288x128xf32, #tpu.memory_space<vmem>>, vector<32x6xf32>
    %cst_96 = arith.constant dense<0.000000e+00> : vector<2x6xf32>
    %328 = tpu.matmul %326, %327, %cst_96 {dimension_numbers = #tpu.dot_dimension_numbers<[1], [0], [0], [1], [0, 0, 1, 1], [], []>} : vector<2x32xf32>, vector<32x6xf32>, vector<2x6xf32> -> vector<2x6xf32>
    %329 = vector.extract_strided_slice %0 {offsets = [4, 0], sizes = [1, 6], strides = [1, 1]} : vector<24x128xf32> to vector<1x6xf32>
    %330 = vector.broadcast %329 : vector<1x6xf32> to vector<2x6xf32>
    %331 = arith.addf %328, %330 : vector<2x6xf32>
    %c0_97 = arith.constant 0 : index
    %c0_98 = arith.constant 0 : index
    %332 = vector.load %arg3[%c0_97, %c0_98] : memref<2x6xf32, #tpu.memory_space<vmem>>, vector<2x6xf32>
    tpu.vector_store %arg3[%c0_97, %c0_98], %331 {strides = array<i32>} : memref<2x6xf32, #tpu.memory_space<vmem>>, vector<2x6xf32>,
    return
  }
}

</mosaic_0001>

<llo_original>
// kernel: vit_radiology_forward.1
$region0: #{vit_radiology_forward.1}
  #allocation0 [shape = 'u32[]', space=smem, size = 0x4, offset = 0x4, fixed_abs, tag = 'smem constant byte address 0x4 - core index']
  #allocation1 [shape = 'u32[144,128]{1,0:T(1,128)}', space=vmem, size = 0x12000, scoped, tag = 'internal scratch']
  %s0 = inlined_call_operand.vmem [shape: f32[16,128], index: 0, kind: input, shape index: {}]
  %s1 = inlined_call_operand.vmem [shape: f32[288,128], index: 1, kind: input, shape index: {}]
  %s2 = inlined_call_operand.vmem [shape: f32[24,128], index: 2, kind: input, shape index: {}]
  %s3 = inlined_call_operand.hbm [shape: f32[2,6], index: 3, kind: output, shape index: {}]
  %s4 = sld [smem:[#allocation0]]
  $region22: #{vit_radiology_forward.1} parent=0
    _
  %s6 = ssub.s32 1, %s4
  %s7 = scalar_select 0, %s6, %s4
  $region1: #{vit_radiology_forward.1} parent=0
    #allocation2 [shape = 'u8[1024]{0}', space=vmem, size = 0x400, scoped, tag = 'output window, operand 0, single buffered']
    #allocation3 [shape = 's32[1]{0}', space=sflag, size = 0x4, scoped, tag = 'scoped memory for vit_radiology_forward.1']
    %8 = vsyncpa [#allocation3], 0
    // Predicated region
    $region2: #{vit_radiology_forward.1} parent=1 // pred_check
      _
    $region3: #{vit_radiology_forward.1} parent=1 // pred_check_branch
      %10 = sbr.rel (0) target = $region5
    $region4: #{vit_radiology_forward.1} parent=1 // pred_region
      _
    $region5: #{vit_radiology_forward.1} parent=1 // pred_fallthru
      _
    // Predicated region
    $region6: #{vit_radiology_forward.1} parent=1 // pred_check
      _
    $region7: #{vit_radiology_forward.1} parent=1 // pred_check_branch
      %12 = sbr.rel (0) target = $region9
    $region8: #{vit_radiology_forward.1} parent=1 // pred_region
      _
    $region9: #{vit_radiology_forward.1} parent=1 // pred_fallthru
      _
    // Predicated region
    $region10: #{vit_radiology_forward.1} parent=1 // pred_check
      _
    $region11: #{vit_radiology_forward.1} parent=1 // pred_check_branch
      %14 = sbr.rel (0) target = $region13
    $region12: #{vit_radiology_forward.1} parent=1 // pred_region
      _
    $region13: #{vit_radiology_forward.1} parent=1 // pred_fallthru
      _
    %v15 = vld [vmem:[%s2] sm:$0xff]
    %v16 = vld [vmem:[%s2 + $0x8] sm:$0xff]
    %v17 = vld [vmem:[%s2 + $0x10] sm:$0xff]
    %v18 = vld [vmem:[%s0] sm:$0xff]
    %v19 = vld [vmem:[%s0 + $0x8] sm:$0xff]
    %v20 = vld [vmem:[%s1] sm:$0xff]
    %v21 = vld [vmem:[%s1 + $0x8] sm:$0xff]
    %v22 = vld [vmem:[%s1 + $0x10] sm:$0xff]
    %v23 = vld [vmem:[%s1 + $0x18] sm:$0xff]
    %v24 = vld [vmem:[%s1 + $0x20] sm:$0xff]
    %v25 = vld [vmem:[%s1 + $0x28] sm:$0xff]
    %v26 = vld [vmem:[%s1 + $0x30] sm:$0xff]
    %v27 = vld [vmem:[%s1 + $0x38] sm:$0xff]
    %v28 = vld [vmem:[%s1 + $0x40] sm:$0xff]
    %v29 = vld [vmem:[%s1 + $0x48] sm:$0xff]
    %v30 = vld [vmem:[%s1 + $0x50] sm:$0xff]
    %v31 = vld [vmem:[%s1 + $0x58] sm:$0xff]
    %v32 = vld [vmem:[%s1 + $0x60] sm:$0xff]
    %v33 = vld [vmem:[%s1 + $0x68] sm:$0xff]
    %v34 = vld [vmem:[%s1 + $0x70] sm:$0xff]
    %v35 = vld [vmem:[%s1 + $0x78] sm:$0xff]
    %v36 = vlaneseq
    %v37 = vshrl.u32 %v36, 7
    %v38 = vsub.s32 0, %v37
    %v39 = vrot.slane %v15, %v38
    %40 = vmatprep.subr.mxu0 0.0
    %41 = vmatpush1.msra.mxu0 %v20
    %42 = vmatprep.subr.mxu0 0.0
    %43 = vmatpush1.msra.mxu0 %v21
    %44 = vmatprep.subr.mxu0 0.0
    %45 = vmatpush1.msra.mxu0 %v22
    %46 = vmatprep.subr.mxu0 0.0
    %47 = vmatpush1.msra.mxu0 %v23
    %48 = vmatprep.subr.mxu0 0.0
    %49 = vmatpush1.msra.mxu0 %v24
    %50 = vmatprep.subr.mxu0 0.0
    %51 = vmatpush1.msra.mxu0 %v25
    %52 = vmatprep.subr.mxu0 0.0
    %53 = vmatpush1.msra.mxu0 %v26
    %54 = vmatprep.subr.mxu0 0.0
    %55 = vmatpush1.msra.mxu0 %v27
    %56 = vmatprep.subr.mxu0 0.0
    %57 = vmatpush1.msra.mxu0 %v28
    %58 = vmatprep.subr.mxu0 0.0
    %59 = vmatpush1.msra.mxu0 %v29
    %60 = vmatprep.subr.mxu0 0.0
    %61 = vmatpush1.msra.mxu0 %v30
    %62 = vmatprep.subr.mxu0 0.0
    %63 = vmatpush1.msra.mxu0 %v31
    %64 = vmatprep.subr.mxu0 0.0
    %65 = vmatpush1.msra.mxu0 %v32
    %66 = vmatprep.subr.mxu0 0.0
    %67 = vmatpush1.msra.mxu0 %v33
    %68 = vmatprep.subr.mxu0 0.0
    %69 = vmatpush1.msra.mxu0 %v34
    %70 = vmatprep.subr.mxu0 0.0
    %71 = vmatpush1.msra.mxu0 %v35
    %72 = vmatprep.subr.mxu0 0.0
    %73 = vmatpush1.msra.mxu0 0.0
    %74 = vmatprep.subr.mxu0 0.0
    %75 = vmatpush1.msra.mxu0 0.0
    %76 = vmatprep.subr.mxu0 0.0
    %77 = vmatpush1.msra.mxu0 0.0
    %78 = vmatprep.subr.mxu0 0.0
    %79 = vmatpush1.msra.mxu0 0.0
    %80 = vmatprep.subr.mxu0 0.0
    %81 = vmatpush1.msra.mxu0 0.0
    %82 = vmatprep.subr.mxu0 0.0
    %83 = vmatpush1.msra.mxu0 0.0
    %84 = vmatprep.subr.mxu0 0.0
    %85 = vmatpush1.msra.mxu0 0.0
    %86 = vmatprep.subr.mxu0 0.0
    %87 = vmatpush1.msra.mxu0 0.0
    %88 = vmatprep.subr.mxu0 0.0
    %89 = vmatpush1.msra.mxu0 0.0
    %90 = vmatprep.subr.mxu0 0.0
    %91 = vmatpush1.msra.mxu0 0.0
    %92 = vmatprep.subr.mxu0 0.0
    %93 = vmatpush1.msra.mxu0 0.0
    %94 = vmatprep.subr.mxu0 0.0
    %95 = vmatpush1.msra.mxu0 0.0
    %96 = vmatprep.subr.mxu0 0.0
    %97 = vmatpush1.msra.mxu0 0.0
    %98 = vmatprep.subr.mxu0 0.0
    %99 = vmatpush1.msra.mxu0 0.0
    %100 = vmatprep.subr.mxu0 0.0
    %101 = vmatpush1.msra.mxu0 0.0
    %102 = vmatprep.subr.mxu0 0.0
    %103 = vmatpush1.msra.mxu0 0.0
    %104 = vmatprep.mubr.f32.mxu0 0.0
    %105 = vmatmul.mubr.f32.gmra.mrb[0].mxu0 %v18
    %v106 = vpop.f32.mrb[0].mxu0
    %v107 = vadd.f32 %v39, %v106
    %v108 = vpop.f32.mrb[0].mxu0
    %109 = vmatprep.mubr.f32.mxu0 0.0
    %110 = vmatmul.mubr.f32.gmra.mrb[0].mxu0 %v19
    %v111 = vpop.f32.mrb[0].mxu0
    %v112 = vadd.f32 %v39, %v111
    %v113 = vpop.f32.mrb[0].mxu0
    %114 = vdwg.mxu0
    %v115 = vld [vmem:[%s1 + $0xe0] sm:$0xff]
    %v116 = vld [vmem:[%s1 + $0xe8] sm:$0xff]
    %v117 = vld [vmem:[%s1 + $0xf0] sm:$0xff]
    %v118 = vld [vmem:[%s1 + $0xf8] sm:$0xff]
    %v119 = vlaneseq
    %v120 = vshrl.u32 %v119, 7
    %v121 = vsub.s32 1, %v120
    %v122 = vrot.slane %v15, %v121
    %127 = vrot.lane.b32.xlu0 %v115, 32
    %v128 = vpop.permute.xlu0 %127
    %129 = vrot.lane.b32.xlu0 %v116, 32
    %v130 = vpop.permute.xlu0 %129
    %131 = vrot.lane.b32.xlu0 %v117, 32
    %v132 = vpop.permute.xlu0 %131
    %133 = vrot.lane.b32.xlu0 %v118, 32
    %v134 = vpop.permute.xlu0 %133
    %vm139 = vcmask 261120
    %v141 = vsel %vm139, %v107, 0
    %v144 = vsel %vm139, %v112, 0
    %146 = vmatprep.subr.mxu0 0.0
    %147 = vmatpush1.msra.mxu0 %v128
    %148 = vmatprep.subr.mxu0 0.0
    %149 = vmatpush1.msra.mxu0 %v130
    %150 = vmatprep.subr.mxu0 0.0
    %151 = vmatpush1.msra.mxu0 %v132
    %152 = vmatprep.subr.mxu0 0.0
    %153 = vmatpush1.msra.mxu0 %v134
    %154 = vmatprep.subr.mxu0 0.0
    %155 = vmatpush1.msra.mxu0 0.0
    %156 = vmatprep.subr.mxu0 0.0
    %157 = vmatpush1.msra.mxu0 0.0
    %158 = vmatprep.subr.mxu0 0.0
    %159 = vmatpush1.msra.mxu0 0.0
    %160 = vmatprep.subr.mxu0 0.0
    %161 = vmatpush1.msra.mxu0 0.0
    %162 = vmatprep.subr.mxu0 0.0
    %163 = vmatpush1.msra.mxu0 0.0
    %164 = vmatprep.subr.mxu0 0.0
    %165 = vmatpush1.msra.mxu0 0.0
    %166 = vmatprep.subr.mxu0 0.0
    %167 = vmatpush1.msra.mxu0 0.0
    %168 = vmatprep.subr.mxu0 0.0
    %169 = vmatpush1.msra.mxu0 0.0
    %170 = vmatprep.subr.mxu0 0.0
    %171 = vmatpush1.msra.mxu0 0.0
    %172 = vmatprep.subr.mxu0 0.0
    %173 = vmatpush1.msra.mxu0 0.0
    %174 = vmatprep.subr.mxu0 0.0
    %175 = vmatpush1.msra.mxu0 0.0
    %176 = vmatprep.subr.mxu0 0.0
    %177 = vmatpush1.msra.mxu0 0.0
    %178 = vmatprep.subr.mxu0 0.0
    %179 = vmatpush1.msra.mxu0 0.0
    %180 = vmatprep.subr.mxu0 0.0
    %181 = vmatpush1.msra.mxu0 0.0
    %182 = vmatprep.subr.mxu0 0.0
    %183 = vmatpush1.msra.mxu0 0.0
    %184 = vmatprep.subr.mxu0 0.0
    %185 = vmatpush1.msra.mxu0 0.0
    %186 = vmatprep.subr.mxu0 0.0
    %187 = vmatpush1.msra.mxu0 0.0
    %188 = vmatprep.subr.mxu0 0.0
    %189 = vmatpush1.msra.mxu0 0.0
    %190 = vmatprep.subr.mxu0 0.0
    %191 = vmatpush1.msra.mxu0 0.0
    %192 = vmatprep.subr.mxu0 0.0
    %193 = vmatpush1.msra.mxu0 0.0
    %194 = vmatprep.subr.mxu0 0.0
    %195 = vmatpush1.msra.mxu0 0.0
    %196 = vmatprep.subr.mxu0 0.0
    %197 = vmatpush1.msra.mxu0 0.0
    %198 = vmatprep.subr.mxu0 0.0
    %199 = vmatpush1.msra.mxu0 0.0
    %200 = vmatprep.subr.mxu0 0.0
    %201 = vmatpush1.msra.mxu0 0.0
    %202 = vmatprep.subr.mxu0 0.0
    %203 = vmatpush1.msra.mxu0 0.0
    %204 = vmatprep.subr.mxu0 0.0
    %205 = vmatpush1.msra.mxu0 0.0
    %206 = vmatprep.subr.mxu0 0.0
    %207 = vmatpush1.msra.mxu0 0.0
    %208 = vmatprep.subr.mxu0 0.0
    %209 = vmatpush1.msra.mxu0 0.0
    %210 = vmatprep.mubr.f32.mxu0 0.0
    %211 = vmatmul.mubr.f32.gmra.mrb[0].mxu0 %v141
    %v212 = vpop.f32.mrb[0].mxu0
    %v213 = vadd.f32 %v122, %v212
    %v214 = vpop.f32.mrb[0].mxu0
    %215 = vmatprep.mubr.f32.mxu0 0.0
    %216 = vmatmul.mubr.f32.gmra.mrb[0].mxu0 %v144
    %v217 = vpop.f32.mrb[0].mxu0
    %v218 = vadd.f32 %v122, %v217
    %v219 = vpop.f32.mrb[0].mxu0
    %220 = vdwg.mxu0
    %v221 = vlaneseq
    %v222 = vshrl.u32 %v221, 7
    %v223 = vadd.s32 %v222, 8
    %v224 = vlaneseq
    %v225 = vand.u32 %v224, 127
    %v226 = vand.u32 %v222, 7
    %v227 = vand.u32 %v223, 7
    %v228 = vand.u32 %v225, 7
    %vm229 = vcmp.eq.s32.totalorder %v226, %v228
    %vm230 = vcmp.eq.s32.totalorder %v227, %v228
    %v231 = vsel %vm229, 0.0, -1e+30
    %v232 = vsel %vm230, 0.0, -1e+30
    %v233 = vsel %vm139, %v213, 0.0
    %234 = vadd.xlane.f32.xlu0 %v233
    %v235 = vpop.xlane.xlu0 %234
    %v236 = vsel %vm139, %v218, 0.0
    %237 = vadd.xlane.f32.xlu0 %v236
    %v238 = vpop.xlane.xlu0 %237
    %v239 = vrcp.pop 32.0
    %v240 = vmul.f32 %v235, %v239
    %v241 = vmul.f32 %v238, %v239
    %v242 = vsub.f32 %v213, %v240
    %v243 = vsub.f32 %v218, %v241
    %v244 = vmul.f32 %v242, %v242
    %v245 = vmul.f32 %v243, %v243
    %v246 = vsel %vm139, %v244, 0.0
    %247 = vadd.xlane.f32.xlu0 %v246
    %v248 = vpop.xlane.xlu0 %247
    %v249 = vsel %vm139, %v245, 0.0
    %250 = vadd.xlane.f32.xlu0 %v249
    %v251 = vpop.xlane.xlu0 %250
    %v252 = vmul.f32 %v248, %v239
    %v253 = vmul.f32 %v251, %v239
    %v254 = vadd.f32 %v252, 1e-05
    %v255 = vadd.f32 %v253, 1e-05
    %v256 = vrsqrt.pop %v254
    %v257 = vrsqrt.pop %v255
    %v258 = vmul.f32 %v242, %v256
    %v259 = vmul.f32 %v243, %v257
    %v260 = vlaneseq
    %v261 = vshrl.u32 %v260, 7
    %v262 = vsub.s32 0, %v261
    %v263 = vrot.slane %v16, %v262
    %v264 = vmul.f32 %v258, %v263
    %v265 = vmul.f32 %v259, %v263
    %v266 = vlaneseq
    %v267 = vshrl.u32 %v266, 7
    %v268 = vsub.s32 1, %v267
    %v269 = vrot.slane %v16, %v268
    %v270 = vadd.f32 %v264, %v269
    %v271 = vadd.f32 %v265, %v269
    %v272 = vld [vmem:[%s1 + $0xc0] sm:$0xff]
    %v273 = vld [vmem:[%s1 + $0xc8] sm:$0xff]
    %v274 = vld [vmem:[%s1 + $0xd0] sm:$0xff]
    %v275 = vld [vmem:[%s1 + $0xd8] sm:$0xff]
    %v276 = vlaneseq
    %v277 = vshrl.u32 %v276, 7
    %v278 = vsub.s32 2, %v277
    %v279 = vrot.slane %v16, %v278
    %v281 = vsel %vm139, %v270, 0
    %v284 = vsel %vm139, %v271, 0
    %286 = vmatprep.subr.mxu0 0.0
    %287 = vmatpush1.msra.mxu0 %v272
    %288 = vmatprep.subr.mxu0 0.0
    %289 = vmatpush1.msra.mxu0 %v273
    %290 = vmatprep.subr.mxu0 0.0
    %291 = vmatpush1.msra.mxu0 %v274
    %292 = vmatprep.subr.mxu0 0.0
    %293 = vmatpush1.msra.mxu0 %v275
    %294 = vmatprep.subr.mxu0 0.0
    %295 = vmatpush1.msra.mxu0 0.0
    %296 = vmatprep.subr.mxu0 0.0
    %297 = vmatpush1.msra.mxu0 0.0
    %298 = vmatprep.subr.mxu0 0.0
    %299 = vmatpush1.msra.mxu0 0.0
    %300 = vmatprep.subr.mxu0 0.0
    %301 = vmatpush1.msra.mxu0 0.0
    %302 = vmatprep.subr.mxu0 0.0
    %303 = vmatpush1.msra.mxu0 0.0
    %304 = vmatprep.subr.mxu0 0.0
    %305 = vmatpush1.msra.mxu0 0.0
    %306 = vmatprep.subr.mxu0 0.0
    %307 = vmatpush1.msra.mxu0 0.0
    %308 = vmatprep.subr.mxu0 0.0
    %309 = vmatpush1.msra.mxu0 0.0
    %310 = vmatprep.subr.mxu0 0.0
    %311 = vmatpush1.msra.mxu0 0.0
    %312 = vmatprep.subr.mxu0 0.0
    %313 = vmatpush1.msra.mxu0 0.0
    %314 = vmatprep.subr.mxu0 0.0
    %315 = vmatpush1.msra.mxu0 0.0
    %316 = vmatprep.subr.mxu0 0.0
    %317 = vmatpush1.msra.mxu0 0.0
    %318 = vmatprep.subr.mxu0 0.0
    %319 = vmatpush1.msra.mxu0 0.0
    %320 = vmatprep.subr.mxu0 0.0
    %321 = vmatpush1.msra.mxu0 0.0
    %322 = vmatprep.subr.mxu0 0.0
    %323 = vmatpush1.msra.mxu0 0.0
    %324 = vmatprep.subr.mxu0 0.0
    %325 = vmatpush1.msra.mxu0 0.0
    %326 = vmatprep.subr.mxu0 0.0
    %327 = vmatpush1.msra.mxu0 0.0
    %328 = vmatprep.subr.mxu0 0.0
    %329 = vmatpush1.msra.mxu0 0.0
    %330 = vmatprep.subr.mxu0 0.0
    %331 = vmatpush1.msra.mxu0 0.0
    %332 = vmatprep.subr.mxu0 0.0
    %333 = vmatpush1.msra.mxu0 0.0
    %334 = vmatprep.subr.mxu0 0.0
    %335 = vmatpush1.msra.mxu0 0.0
    %336 = vmatprep.subr.mxu0 0.0
    %337 = vmatpush1.msra.mxu0 0.0
    %338 = vmatprep.subr.mxu0 0.0
    %339 = vmatpush1.msra.mxu0 0.0
    %340 = vmatprep.subr.mxu0 0.0
    %341 = vmatpush1.msra.mxu0 0.0
    %342 = vmatprep.subr.mxu0 0.0
    %343 = vmatpush1.msra.mxu0 0.0
    %344 = vmatprep.subr.mxu0 0.0
    %345 = vmatpush1.msra.mxu0 0.0
    %346 = vmatprep.subr.mxu0 0.0
    %347 = vmatpush1.msra.mxu0 0.0
    %348 = vmatprep.subr.mxu0 0.0
    %349 = vmatpush1.msra.mxu0 0.0
    %350 = vmatprep.mubr.f32.mxu0 0.0
    %351 = vmatmul.mubr.f32.gmra.mrb[0].mxu0 %v281
    %v352 = vpop.f32.mrb[0].mxu0
    %v353 = vadd.f32 %v279, %v352
    %v354 = vpop.f32.mrb[0].mxu0
    %355 = vmatprep.mubr.f32.mxu0 0.0
    %356 = vmatmul.mubr.f32.gmra.mrb[0].mxu0 %v284
    %v357 = vpop.f32.mrb[0].mxu0
    %v358 = vadd.f32 %v279, %v357
    %v359 = vpop.f32.mrb[0].mxu0
    %360 = vdwg.mxu0
    %363 = vrot.lane.b32.xlu0 %v353, 96
    %v364 = vpop.permute.xlu0 %363
    %365 = vrot.lane.b32.xlu0 %v358, 96
    %v366 = vpop.permute.xlu0 %365
    %vm367 = vcmask 64512
    %v368 = vsel %vm367, %v353, 0
    %v370 = vsel %vm367, %v358, 0
    %v372 = vsel %vm367, %v364, 0
    %v374 = vsel %vm367, %v366, 0
    %376 = vmatprep.subr.mxu0 0.0
    %377 = vmatpush1.xpose.msra.mxu0 %v372
    %378 = vmatprep.subr.mxu0 0.0
    %379 = vmatpush1.xpose.msra.mxu0 %v374
    %380 = vmatprep.subr.mxu0 0.0
    %381 = vmatpush1.xpose.msra.mxu0 0.0
    %382 = vmatprep.subr.mxu0 0.0
    %383 = vmatpush1.xpose.msra.mxu0 0.0
    %384 = vmatprep.subr.mxu0 0.0
    %385 = vmatpush1.xpose.msra.mxu0 0.0
    %386 = vmatprep.subr.mxu0 0.0
    %387 = vmatpush1.xpose.msra.mxu0 0.0
    %388 = vmatprep.subr.mxu0 0.0
    %389 = vmatpush1.xpose.msra.mxu0 0.0
    %390 = vmatprep.subr.mxu0 0.0
    %391 = vmatpush1.xpose.msra.mxu0 0.0
    %392 = vmatprep.subr.mxu0 0.0
    %393 = vmatpush1.xpose.msra.mxu0 0.0
    %394 = vmatprep.subr.mxu0 0.0
    %395 = vmatpush1.xpose.msra.mxu0 0.0
    %396 = vmatprep.subr.mxu0 0.0
    %397 = vmatpush1.xpose.msra.mxu0 0.0
    %398 = vmatprep.subr.mxu0 0.0
    %399 = vmatpush1.xpose.msra.mxu0 0.0
    %400 = vmatprep.subr.mxu0 0.0
    %401 = vmatpush1.xpose.msra.mxu0 0.0
    %402 = vmatprep.subr.mxu0 0.0
    %403 = vmatpush1.xpose.msra.mxu0 0.0
    %404 = vmatprep.subr.mxu0 0.0
    %405 = vmatpush1.xpose.msra.mxu0 0.0
    %406 = vmatprep.subr.mxu0 0.0
    %407 = vmatpush1.xpose.msra.mxu0 0.0
    %408 = vmatprep.subr.mxu0 0.0
    %409 = vmatpush1.xpose.msra.mxu0 0.0
    %410 = vmatprep.subr.mxu0 0.0
    %411 = vmatpush1.xpose.msra.mxu0 0.0
    %412 = vmatprep.subr.mxu0 0.0
    %413 = vmatpush1.xpose.msra.mxu0 0.0
    %414 = vmatprep.subr.mxu0 0.0
    %415 = vmatpush1.xpose.msra.mxu0 0.0
    %416 = vmatprep.subr.mxu0 0.0
    %417 = vmatpush1.xpose.msra.mxu0 0.0
    %418 = vmatprep.subr.mxu0 0.0
    %419 = vmatpush1.xpose.msra.mxu0 0.0
    %420 = vmatprep.subr.mxu0 0.0
    %421 = vmatpush1.xpose.msra.mxu0 0.0
    %422 = vmatprep.subr.mxu0 0.0
    %423 = vmatpush1.xpose.msra.mxu0 0.0
    %424 = vmatprep.subr.mxu0 0.0
    %425 = vmatpush1.xpose.msra.mxu0 0.0
    %426 = vmatprep.subr.mxu0 0.0
    %427 = vmatpush1.xpose.msra.mxu0 0.0
    %428 = vmatprep.subr.mxu0 0.0
    %429 = vmatpush1.xpose.msra.mxu0 0.0
    %430 = vmatprep.subr.mxu0 0.0
    %431 = vmatpush1.xpose.msra.mxu0 0.0
    %432 = vmatprep.subr.mxu0 0.0
    %433 = vmatpush1.xpose.msra.mxu0 0.0
    %434 = vmatprep.subr.mxu0 0.0
    %435 = vmatpush1.xpose.msra.mxu0 0.0
    %436 = vmatprep.subr.mxu0 0.0
    %437 = vmatpush1.xpose.msra.mxu0 0.0
    %438 = vmatprep.subr.mxu0 0.0
    %439 = vmatpush1.xpose.msra.mxu0 0.0
    %440 = vmatprep.mubr.f32.mxu0 0.0
    %441 = vmatmul.mubr.f32.gmra.mrb[0].mxu0 %v368
    %v442 = vpop.f32.mrb[0].mxu0
    %v443 = vadd.f32 %v231, %v442
    %v444 = vpop.f32.mrb[0].mxu0
    %445 = vmatprep.mubr.f32.mxu0 0.0
    %446 = vmatmul.mubr.f32.gmra.mrb[0].mxu0 %v370
    %v447 = vpop.f32.mrb[0].mxu0
    %v448 = vadd.f32 %v232, %v447
    %v449 = vpop.f32.mrb[0].mxu0
    %450 = vdwg.mxu0
    %vm451 = vcmask 130048
    %v452 = vsel %vm451, %v443, -inf
    %453 = vmax.xlane.f32.xlu0 %v452
    %v454 = vpop.xlane.xlu0 %453
    %v455 = vsel %vm451, %v448, -inf
    %456 = vmax.xlane.f32.xlu0 %v455
    %v457 = vpop.xlane.xlu0 %456
    %v458 = vsub.f32 %v443, %v454
    %v459 = vsub.f32 %v448, %v457
    %v460 = vmul.f32 %v458, 1.442695
    %v461 = vpow.pop %v460
    %v462 = vmul.f32 %v459, 1.442695
    %v463 = vpow.pop %v462
    %v464 = vsel %vm451, %v461, 0.0
    %465 = vadd.xlane.f32.xlu0 %v464
    %v466 = vpop.xlane.xlu0 %465
    %v467 = vsel %vm451, %v463, 0.0
    %468 = vadd.xlane.f32.xlu0 %v467
    %v469 = vpop.xlane.xlu0 %468
    %v470 = vrcp.pop %v466
    %v471 = vmul.f32 %v461, %v470
    %v472 = vrcp.pop %v469
    %v473 = vmul.f32 %v463, %v472
    %474 = vrot.lane.b32.xlu0 %v353, 64
    %v475 = vpop.permute.xlu0 %474
    %476 = vrot.lane.b32.xlu0 %v358, 64
    %v477 = vpop.permute.xlu0 %476
    %v481 = vsel %vm451, %v471, 0
    %v484 = vsel %vm451, %v473, 0
    %486 = vmatprep.subr.mxu0 0.0
    %487 = vmatpush1.msra.mxu0 %v475
    %488 = vmatprep.subr.mxu0 0.0
    %489 = vmatpush1.msra.mxu0 %v477
    %490 = vmatprep.subr.mxu0 0.0
    %491 = vmatpush1.msra.mxu0 0.0
    %492 = vmatprep.subr.mxu0 0.0
    %493 = vmatpush1.msra.mxu0 0.0
    %494 = vmatprep.subr.mxu0 0.0
    %495 = vmatpush1.msra.mxu0 0.0
    %496 = vmatprep.subr.mxu0 0.0
    %497 = vmatpush1.msra.mxu0 0.0
    %498 = vmatprep.subr.mxu0 0.0
    %499 = vmatpush1.msra.mxu0 0.0
    %500 = vmatprep.subr.mxu0 0.0
    %501 = vmatpush1.msra.mxu0 0.0
    %502 = vmatprep.subr.mxu0 0.0
    %503 = vmatpush1.msra.mxu0 0.0
    %504 = vmatprep.subr.mxu0 0.0
    %505 = vmatpush1.msra.mxu0 0.0
    %506 = vmatprep.subr.mxu0 0.0
    %507 = vmatpush1.msra.mxu0 0.0
    %508 = vmatprep.subr.mxu0 0.0
    %509 = vmatpush1.msra.mxu0 0.0
    %510 = vmatprep.subr.mxu0 0.0
    %511 = vmatpush1.msra.mxu0 0.0
    %512 = vmatprep.subr.mxu0 0.0
    %513 = vmatpush1.msra.mxu0 0.0
    %514 = vmatprep.subr.mxu0 0.0
    %515 = vmatpush1.msra.mxu0 0.0
    %516 = vmatprep.subr.mxu0 0.0
    %517 = vmatpush1.msra.mxu0 0.0
    %518 = vmatprep.subr.mxu0 0.0
    %519 = vmatpush1.msra.mxu0 0.0
    %520 = vmatprep.subr.mxu0 0.0
    %521 = vmatpush1.msra.mxu0 0.0
    %522 = vmatprep.subr.mxu0 0.0
    %523 = vmatpush1.msra.mxu0 0.0
    %524 = vmatprep.subr.mxu0 0.0
    %525 = vmatpush1.msra.mxu0 0.0
    %526 = vmatprep.subr.mxu0 0.0
    %527 = vmatpush1.msra.mxu0 0.0
    %528 = vmatprep.subr.mxu0 0.0
    %529 = vmatpush1.msra.mxu0 0.0
    %530 = vmatprep.subr.mxu0 0.0
    %531 = vmatpush1.msra.mxu0 0.0
    %532 = vmatprep.subr.mxu0 0.0
    %533 = vmatpush1.msra.mxu0 0.0
    %534 = vmatprep.subr.mxu0 0.0
    %535 = vmatpush1.msra.mxu0 0.0
    %536 = vmatprep.subr.mxu0 0.0
    %537 = vmatpush1.msra.mxu0 0.0
    %538 = vmatprep.subr.mxu0 0.0
    %539 = vmatpush1.msra.mxu0 0.0
    %540 = vmatprep.subr.mxu0 0.0
    %541 = vmatpush1.msra.mxu0 0.0
    %542 = vmatprep.subr.mxu0 0.0
    %543 = vmatpush1.msra.mxu0 0.0
    %544 = vmatprep.subr.mxu0 0.0
    %545 = vmatpush1.msra.mxu0 0.0
    %546 = vmatprep.subr.mxu0 0.0
    %547 = vmatpush1.msra.mxu0 0.0
    %548 = vmatprep.subr.mxu0 0.0
    %549 = vmatpush1.msra.mxu0 0.0
    %550 = vmatprep.mubr.f32.mxu0 0.0
    %551 = vmatmul.mubr.f32.gmra.mrb[0].mxu0 %v481
    %v552 = vpop.f32.mrb[0].mxu0
    %v553 = vadd.f32 0.0, %v552
    %v554 = vpop.f32.mrb[0].mxu0
    %555 = vmatprep.mubr.f32.mxu0 0.0
    %556 = vmatmul.mubr.f32.gmra.mrb[0].mxu0 %v484
    %v557 = vpop.f32.mrb[0].mxu0
    %v558 = vadd.f32 0.0, %v557
    %v559 = vpop.f32.mrb[0].mxu0
    %560 = vdwg.mxu0
    %561 = vrot.lane.b32.xlu0 %v353, 120
    %v562 = vpop.permute.xlu0 %561
    %563 = vrot.lane.b32.xlu0 %v358, 120
    %v564 = vpop.permute.xlu0 %563
    %565 = vrot.lane.b32.xlu0 %v353, 88
    %v566 = vpop.permute.xlu0 %565
    %567 = vrot.lane.b32.xlu0 %v358, 88
    %v568 = vpop.permute.xlu0 %567
    %v569 = vsel %vm367, %v562, 0
    %v571 = vsel %vm367, %v564, 0
    %v573 = vsel %vm367, %v566, 0
    %v575 = vsel %vm367, %v568, 0
    %577 = vmatprep.subr.mxu0 0.0
    %578 = vmatpush1.xpose.msra.mxu0 %v573
    %579 = vmatprep.subr.mxu0 0.0
    %580 = vmatpush1.xpose.msra.mxu0 %v575
    %581 = vmatprep.subr.mxu0 0.0
    %582 = vmatpush1.xpose.msra.mxu0 0.0
    %583 = vmatprep.subr.mxu0 0.0
    %584 = vmatpush1.xpose.msra.mxu0 0.0
    %585 = vmatprep.subr.mxu0 0.0
    %586 = vmatpush1.xpose.msra.mxu0 0.0
    %587 = vmatprep.subr.mxu0 0.0
    %588 = vmatpush1.xpose.msra.mxu0 0.0
    %589 = vmatprep.subr.mxu0 0.0
    %590 = vmatpush1.xpose.msra.mxu0 0.0
    %591 = vmatprep.subr.mxu0 0.0
    %592 = vmatpush1.xpose.msra.mxu0 0.0
    %593 = vmatprep.subr.mxu0 0.0
    %594 = vmatpush1.xpose.msra.mxu0 0.0
    %595 = vmatprep.subr.mxu0 0.0
    %596 = vmatpush1.xpose.msra.mxu0 0.0
    %597 = vmatprep.subr.mxu0 0.0
    %598 = vmatpush1.xpose.msra.mxu0 0.0
    %599 = vmatprep.subr.mxu0 0.0
    %600 = vmatpush1.xpose.msra.mxu0 0.0
    %601 = vmatprep.subr.mxu0 0.0
    %602 = vmatpush1.xpose.msra.mxu0 0.0
    %603 = vmatprep.subr.mxu0 0.0
    %604 = vmatpush1.xpose.msra.mxu0 0.0
    %605 = vmatprep.subr.mxu0 0.0
    %606 = vmatpush1.xpose.msra.mxu0 0.0
    %607 = vmatprep.subr.mxu0 0.0
    %608 = vmatpush1.xpose.msra.mxu0 0.0
    %609 = vmatprep.subr.mxu0 0.0
    %610 = vmatpush1.xpose.msra.mxu0 0.0
    %611 = vmatprep.subr.mxu0 0.0
    %612 = vmatpush1.xpose.msra.mxu0 0.0
    %613 = vmatprep.subr.mxu0 0.0
    %614 = vmatpush1.xpose.msra.mxu0 0.0
    %615 = vmatprep.subr.mxu0 0.0
    %616 = vmatpush1.xpose.msra.mxu0 0.0
    %617 = vmatprep.subr.mxu0 0.0
    %618 = vmatpush1.xpose.msra.mxu0 0.0
    %619 = vmatprep.subr.mxu0 0.0
    %620 = vmatpush1.xpose.msra.mxu0 0.0
    %621 = vmatprep.subr.mxu0 0.0
    %622 = vmatpush1.xpose.msra.mxu0 0.0
    %623 = vmatprep.subr.mxu0 0.0
    %624 = vmatpush1.xpose.msra.mxu0 0.0
    %625 = vmatprep.subr.mxu0 0.0
    %626 = vmatpush1.xpose.msra.mxu0 0.0
    %627 = vmatprep.subr.mxu0 0.0
    %628 = vmatpush1.xpose.msra.mxu0 0.0
    %629 = vmatprep.subr.mxu0 0.0
    %630 = vmatpush1.xpose.msra.mxu0 0.0
    %631 = vmatprep.subr.mxu0 0.0
    %632 = vmatpush1.xpose.msra.mxu0 0.0
    %633 = vmatprep.subr.mxu0 0.0
    %634 = vmatpush1.xpose.msra.mxu0 0.0
    %635 = vmatprep.subr.mxu0 0.0
    %636 = vmatpush1.xpose.msra.mxu0 0.0
    %637 = vmatprep.subr.mxu0 0.0
    %638 = vmatpush1.xpose.msra.mxu0 0.0
    %639 = vmatprep.subr.mxu0 0.0
    %640 = vmatpush1.xpose.msra.mxu0 0.0
    %641 = vmatprep.mubr.f32.mxu0 0.0
    %642 = vmatmul.mubr.f32.gmra.mrb[0].mxu0 %v569
    %v643 = vpop.f32.mrb[0].mxu0
    %v644 = vadd.f32 %v231, %v643
    %v645 = vpop.f32.mrb[0].mxu0
    %646 = vmatprep.mubr.f32.mxu0 0.0
    %647 = vmatmul.mubr.f32.gmra.mrb[0].mxu0 %v571
    %v648 = vpop.f32.mrb[0].mxu0
    %v649 = vadd.f32 %v232, %v648
    %v650 = vpop.f32.mrb[0].mxu0
    %651 = vdwg.mxu0
    %v652 = vsel %vm451, %v644, -inf
    %653 = vmax.xlane.f32.xlu0 %v652
    %v654 = vpop.xlane.xlu0 %653
    %v655 = vsel %vm451, %v649, -inf
    %656 = vmax.xlane.f32.xlu0 %v655
    %v657 = vpop.xlane.xlu0 %656
    %v658 = vsub.f32 %v644, %v654
    %v659 = vsub.f32 %v649, %v657
    %v660 = vmul.f32 %v658, 1.442695
    %v661 = vpow.pop %v660
    %v662 = vmul.f32 %v659, 1.442695
    %v663 = vpow.pop %v662
    %v664 = vsel %vm451, %v661, 0.0
    %665 = vadd.xlane.f32.xlu0 %v664
    %v666 = vpop.xlane.xlu0 %665
    %v667 = vsel %vm451, %v663, 0.0
    %668 = vadd.xlane.f32.xlu0 %v667
    %v669 = vpop.xlane.xlu0 %668
    %v670 = vrcp.pop %v666
    %v671 = vmul.f32 %v661, %v670
    %v672 = vrcp.pop %v669
    %v673 = vmul.f32 %v663, %v672
    %674 = vrot.lane.b32.xlu0 %v353, 56
    %v675 = vpop.permute.xlu0 %674
    %676 = vrot.lane.b32.xlu0 %v358, 56
    %v677 = vpop.permute.xlu0 %676
    %v681 = vsel %vm451, %v671, 0
    %v684 = vsel %vm451, %v673, 0
    %686 = vmatprep.subr.mxu0 0.0
    %687 = vmatpush1.msra.mxu0 %v675
    %688 = vmatprep.subr.mxu0 0.0
    %689 = vmatpush1.msra.mxu0 %v677
    %690 = vmatprep.subr.mxu0 0.0
    %691 = vmatpush1.msra.mxu0 0.0
    %692 = vmatprep.subr.mxu0 0.0
    %693 = vmatpush1.msra.mxu0 0.0
    %694 = vmatprep.subr.mxu0 0.0
    %695 = vmatpush1.msra.mxu0 0.0
    %696 = vmatprep.subr.mxu0 0.0
    %697 = vmatpush1.msra.mxu0 0.0
    %698 = vmatprep.subr.mxu0 0.0
    %699 = vmatpush1.msra.mxu0 0.0
    %700 = vmatprep.subr.mxu0 0.0
    %701 = vmatpush1.msra.mxu0 0.0
    %702 = vmatprep.subr.mxu0 0.0
    %703 = vmatpush1.msra.mxu0 0.0
    %704 = vmatprep.subr.mxu0 0.0
    %705 = vmatpush1.msra.mxu0 0.0
    %706 = vmatprep.subr.mxu0 0.0
    %707 = vmatpush1.msra.mxu0 0.0
    %708 = vmatprep.subr.mxu0 0.0
    %709 = vmatpush1.msra.mxu0 0.0
    %710 = vmatprep.subr.mxu0 0.0
    %711 = vmatpush1.msra.mxu0 0.0
    %712 = vmatprep.subr.mxu0 0.0
    %713 = vmatpush1.msra.mxu0 0.0
    %714 = vmatprep.subr.mxu0 0.0
    %715 = vmatpush1.msra.mxu0 0.0
    %716 = vmatprep.subr.mxu0 0.0
    %717 = vmatpush1.msra.mxu0 0.0
    %718 = vmatprep.subr.mxu0 0.0
    %719 = vmatpush1.msra.mxu0 0.0
    %720 = vmatprep.subr.mxu0 0.0
    %721 = vmatpush1.msra.mxu0 0.0
    %722 = vmatprep.subr.mxu0 0.0
    %723 = vmatpush1.msra.mxu0 0.0
    %724 = vmatprep.subr.mxu0 0.0
    %725 = vmatpush1.msra.mxu0 0.0
    %726 = vmatprep.subr.mxu0 0.0
    %727 = vmatpush1.msra.mxu0 0.0
    %728 = vmatprep.subr.mxu0 0.0
    %729 = vmatpush1.msra.mxu0 0.0
    %730 = vmatprep.subr.mxu0 0.0
    %731 = vmatpush1.msra.mxu0 0.0
    %732 = vmatprep.subr.mxu0 0.0
    %733 = vmatpush1.msra.mxu0 0.0
    %734 = vmatprep.subr.mxu0 0.0
    %735 = vmatpush1.msra.mxu0 0.0
    %736 = vmatprep.subr.mxu0 0.0
    %737 = vmatpush1.msra.mxu0 0.0
    %738 = vmatprep.subr.mxu0 0.0
    %739 = vmatpush1.msra.mxu0 0.0
    %740 = vmatprep.subr.mxu0 0.0
    %741 = vmatpush1.msra.mxu0 0.0
    %742 = vmatprep.subr.mxu0 0.0
    %743 = vmatpush1.msra.mxu0 0.0
    %744 = vmatprep.subr.mxu0 0.0
    %745 = vmatpush1.msra.mxu0 0.0
    %746 = vmatprep.subr.mxu0 0.0
    %747 = vmatpush1.msra.mxu0 0.0
    %748 = vmatprep.subr.mxu0 0.0
    %749 = vmatpush1.msra.mxu0 0.0
    %750 = vmatprep.mubr.f32.mxu0 0.0
    %751 = vmatmul.mubr.f32.gmra.mrb[0].mxu0 %v681
    %v752 = vpop.f32.mrb[0].mxu0
    %v753 = vadd.f32 0.0, %v752
    %v754 = vpop.f32.mrb[0].mxu0
    %755 = vmatprep.mubr.f32.mxu0 0.0
    %756 = vmatmul.mubr.f32.gmra.mrb[0].mxu0 %v684
    %v757 = vpop.f32.mrb[0].mxu0
    %v758 = vadd.f32 0.0, %v757
    %v759 = vpop.f32.mrb[0].mxu0
    %760 = vdwg.mxu0
    %761 = vrot.lane.b32.xlu0 %v353, 112
    %v762 = vpop.permute.xlu0 %761
    %763 = vrot.lane.b32.xlu0 %v358, 112
    %v764 = vpop.permute.xlu0 %763
    %765 = vrot.lane.b32.xlu0 %v353, 80
    %v766 = vpop.permute.xlu0 %765
    %767 = vrot.lane.b32.xlu0 %v358, 80
    %v768 = vpop.permute.xlu0 %767
    %v769 = vsel %vm367, %v762, 0
    %v771 = vsel %vm367, %v764, 0
    %v773 = vsel %vm367, %v766, 0
    %v775 = vsel %vm367, %v768, 0
    %777 = vmatprep.subr.mxu0 0.0
    %778 = vmatpush1.xpose.msra.mxu0 %v773
    %779 = vmatprep.subr.mxu0 0.0
    %780 = vmatpush1.xpose.msra.mxu0 %v775
    %781 = vmatprep.subr.mxu0 0.0
    %782 = vmatpush1.xpose.msra.mxu0 0.0
    %783 = vmatprep.subr.mxu0 0.0
    %784 = vmatpush1.xpose.msra.mxu0 0.0
    %785 = vmatprep.subr.mxu0 0.0
    %786 = vmatpush1.xpose.msra.mxu0 0.0
    %787 = vmatprep.subr.mxu0 0.0
    %788 = vmatpush1.xpose.msra.mxu0 0.0
    %789 = vmatprep.subr.mxu0 0.0
    %790 = vmatpush1.xpose.msra.mxu0 0.0
    %791 = vmatprep.subr.mxu0 0.0
    %792 = vmatpush1.xpose.msra.mxu0 0.0
    %793 = vmatprep.subr.mxu0 0.0
    %794 = vmatpush1.xpose.msra.mxu0 0.0
    %795 = vmatprep.subr.mxu0 0.0
    %796 = vmatpush1.xpose.msra.mxu0 0.0
    %797 = vmatprep.subr.mxu0 0.0
    %798 = vmatpush1.xpose.msra.mxu0 0.0
    %799 = vmatprep.subr.mxu0 0.0
    %800 = vmatpush1.xpose.msra.mxu0 0.0
    %801 = vmatprep.subr.mxu0 0.0
    %802 = vmatpush1.xpose.msra.mxu0 0.0
    %803 = vmatprep.subr.mxu0 0.0
    %804 = vmatpush1.xpose.msra.mxu0 0.0
    %805 = vmatprep.subr.mxu0 0.0
    %806 = vmatpush1.xpose.msra.mxu0 0.0
    %807 = vmatprep.subr.mxu0 0.0
    %808 = vmatpush1.xpose.msra.mxu0 0.0
    %809 = vmatprep.subr.mxu0 0.0
    %810 = vmatpush1.xpose.msra.mxu0 0.0
    %811 = vmatprep.subr.mxu0 0.0
    %812 = vmatpush1.xpose.msra.mxu0 0.0
    %813 = vmatprep.subr.mxu0 0.0
    %814 = vmatpush1.xpose.msra.mxu0 0.0
    %815 = vmatprep.subr.mxu0 0.0
    %816 = vmatpush1.xpose.msra.mxu0 0.0
    %817 = vmatprep.subr.mxu0 0.0
    %818 = vmatpush1.xpose.msra.mxu0 0.0
    %819 = vmatprep.subr.mxu0 0.0
    %820 = vmatpush1.xpose.msra.mxu0 0.0
    %821 = vmatprep.subr.mxu0 0.0
    %822 = vmatpush1.xpose.msra.mxu0 0.0
    %823 = vmatprep.subr.mxu0 0.0
    %824 = vmatpush1.xpose.msra.mxu0 0.0
    %825 = vmatprep.subr.mxu0 0.0
    %826 = vmatpush1.xpose.msra.mxu0 0.0
    %827 = vmatprep.subr.mxu0 0.0
    %828 = vmatpush1.xpose.msra.mxu0 0.0
    %829 = vmatprep.subr.mxu0 0.0
    %830 = vmatpush1.xpose.msra.mxu0 0.0
    %831 = vmatprep.subr.mxu0 0.0
    %832 = vmatpush1.xpose.msra.mxu0 0.0
    %833 = vmatprep.subr.mxu0 0.0
    %834 = vmatpush1.xpose.msra.mxu0 0.0
    %835 = vmatprep.subr.mxu0 0.0
    %836 = vmatpush1.xpose.msra.mxu0 0.0
    %837 = vmatprep.subr.mxu0 0.0
    %838 = vmatpush1.xpose.msra.mxu0 0.0
    %839 = vmatprep.subr.mxu0 0.0
    %840 = vmatpush1.xpose.msra.mxu0 0.0
    %841 = vmatprep.mubr.f32.mxu0 0.0
    %842 = vmatmul.mubr.f32.gmra.mrb[0].mxu0 %v769
    %v843 = vpop.f32.mrb[0].mxu0
    %v844 = vadd.f32 %v231, %v843
    %v845 = vpop.f32.mrb[0].mxu0
    %846 = vmatprep.mubr.f32.mxu0 0.0
    %847 = vmatmul.mubr.f32.gmra.mrb[0].mxu0 %v771
    %v848 = vpop.f32.mrb[0].mxu0
    %v849 = vadd.f32 %v232, %v848
    %v850 = vpop.f32.mrb[0].mxu0
    %851 = vdwg.mxu0
    %v852 = vsel %vm451, %v844, -inf
    %853 = vmax.xlane.f32.xlu0 %v852
    %v854 = vpop.xlane.xlu0 %853
    %v855 = vsel %vm451, %v849, -inf
    %856 = vmax.xlane.f32.xlu0 %v855
    %v857 = vpop.xlane.xlu0 %856
    %v858 = vsub.f32 %v844, %v854
    %v859 = vsub.f32 %v849, %v857
    %v860 = vmul.f32 %v858, 1.442695
    %v861 = vpow.pop %v860
    %v862 = vmul.f32 %v859, 1.442695
    %v863 = vpow.pop %v862
    %v864 = vsel %vm451, %v861, 0.0
    %865 = vadd.xlane.f32.xlu0 %v864
    %v866 = vpop.xlane.xlu0 %865
    %v867 = vsel %vm451, %v863, 0.0
    %868 = vadd.xlane.f32.xlu0 %v867
    %v869 = vpop.xlane.xlu0 %868
    %v870 = vrcp.pop %v866
    %v871 = vmul.f32 %v861, %v870
    %v872 = vrcp.pop %v869
    %v873 = vmul.f32 %v863, %v872
    %874 = vrot.lane.b32.xlu0 %v353, 48
    %v875 = vpop.permute.xlu0 %874
    %876 = vrot.lane.b32.xlu0 %v358, 48
    %v877 = vpop.permute.xlu0 %876
    %v881 = vsel %vm451, %v871, 0
    %v884 = vsel %vm451, %v873, 0
    %886 = vmatprep.subr.mxu0 0.0
    %887 = vmatpush1.msra.mxu0 %v875
    %888 = vmatprep.subr.mxu0 0.0
    %889 = vmatpush1.msra.mxu0 %v877
    %890 = vmatprep.subr.mxu0 0.0
    %891 = vmatpush1.msra.mxu0 0.0
    %892 = vmatprep.subr.mxu0 0.0
    %893 = vmatpush1.msra.mxu0 0.0
    %894 = vmatprep.subr.mxu0 0.0
    %895 = vmatpush1.msra.mxu0 0.0
    %896 = vmatprep.subr.mxu0 0.0
    %897 = vmatpush1.msra.mxu0 0.0
    %898 = vmatprep.subr.mxu0 0.0
    %899 = vmatpush1.msra.mxu0 0.0
    %900 = vmatprep.subr.mxu0 0.0
    %901 = vmatpush1.msra.mxu0 0.0
    %902 = vmatprep.subr.mxu0 0.0
    %903 = vmatpush1.msra.mxu0 0.0
    %904 = vmatprep.subr.mxu0 0.0
    %905 = vmatpush1.msra.mxu0 0.0
    %906 = vmatprep.subr.mxu0 0.0
    %907 = vmatpush1.msra.mxu0 0.0
    %908 = vmatprep.subr.mxu0 0.0
    %909 = vmatpush1.msra.mxu0 0.0
    %910 = vmatprep.subr.mxu0 0.0
    %911 = vmatpush1.msra.mxu0 0.0
    %912 = vmatprep.subr.mxu0 0.0
    %913 = vmatpush1.msra.mxu0 0.0
    %914 = vmatprep.subr.mxu0 0.0
    %915 = vmatpush1.msra.mxu0 0.0
    %916 = vmatprep.subr.mxu0 0.0
    %917 = vmatpush1.msra.mxu0 0.0
    %918 = vmatprep.subr.mxu0 0.0
    %919 = vmatpush1.msra.mxu0 0.0
    %920 = vmatprep.subr.mxu0 0.0
    %921 = vmatpush1.msra.mxu0 0.0
    %922 = vmatprep.subr.mxu0 0.0
    %923 = vmatpush1.msra.mxu0 0.0
    %924 = vmatprep.subr.mxu0 0.0
    %925 = vmatpush1.msra.mxu0 0.0
    %926 = vmatprep.subr.mxu0 0.0
    %927 = vmatpush1.msra.mxu0 0.0
    %928 = vmatprep.subr.mxu0 0.0
    %929 = vmatpush1.msra.mxu0 0.0
    %930 = vmatprep.subr.mxu0 0.0
    %931 = vmatpush1.msra.mxu0 0.0
    %932 = vmatprep.subr.mxu0 0.0
    %933 = vmatpush1.msra.mxu0 0.0
    %934 = vmatprep.subr.mxu0 0.0
    %935 = vmatpush1.msra.mxu0 0.0
    %936 = vmatprep.subr.mxu0 0.0
    %937 = vmatpush1.msra.mxu0 0.0
    %938 = vmatprep.subr.mxu0 0.0
    %939 = vmatpush1.msra.mxu0 0.0
    %940 = vmatprep.subr.mxu0 0.0
    %941 = vmatpush1.msra.mxu0 0.0
    %942 = vmatprep.subr.mxu0 0.0
    %943 = vmatpush1.msra.mxu0 0.0
    %944 = vmatprep.subr.mxu0 0.0
    %945 = vmatpush1.msra.mxu0 0.0
    %946 = vmatprep.subr.mxu0 0.0
    %947 = vmatpush1.msra.mxu0 0.0
    %948 = vmatprep.subr.mxu0 0.0
    %949 = vmatpush1.msra.mxu0 0.0
    %950 = vmatprep.mubr.f32.mxu0 0.0
    %951 = vmatmul.mubr.f32.gmra.mrb[0].mxu0 %v881
    %v952 = vpop.f32.mrb[0].mxu0
    %v953 = vadd.f32 0.0, %v952
    %v954 = vpop.f32.mrb[0].mxu0
    %955 = vmatprep.mubr.f32.mxu0 0.0
    %956 = vmatmul.mubr.f32.gmra.mrb[0].mxu0 %v884
    %v957 = vpop.f32.mrb[0].mxu0
    %v958 = vadd.f32 0.0, %v957
    %v959 = vpop.f32.mrb[0].mxu0
    %960 = vdwg.mxu0
    %961 = vrot.lane.b32.xlu0 %v353, 104
    %v962 = vpop.permute.xlu0 %961
    %963 = vrot.lane.b32.xlu0 %v358, 104
    %v964 = vpop.permute.xlu0 %963
    %965 = vrot.lane.b32.xlu0 %v353, 72
    %v966 = vpop.permute.xlu0 %965
    %967 = vrot.lane.b32.xlu0 %v358, 72
    %v968 = vpop.permute.xlu0 %967
    %v969 = vsel %vm367, %v962, 0
    %v971 = vsel %vm367, %v964, 0
    %v973 = vsel %vm367, %v966, 0
    %v975 = vsel %vm367, %v968, 0
    %977 = vmatprep.subr.mxu0 0.0
    %978 = vmatpush1.xpose.msra.mxu0 %v973
    %979 = vmatprep.subr.mxu0 0.0
    %980 = vmatpush1.xpose.msra.mxu0 %v975
    %981 = vmatprep.subr.mxu0 0.0
    %982 = vmatpush1.xpose.msra.mxu0 0.0
    %983 = vmatprep.subr.mxu0 0.0
    %984 = vmatpush1.xpose.msra.mxu0 0.0
    %985 = vmatprep.subr.mxu0 0.0
    %986 = vmatpush1.xpose.msra.mxu0 0.0
    %987 = vmatprep.subr.mxu0 0.0
    %988 = vmatpush1.xpose.msra.mxu0 0.0
    %989 = vmatprep.subr.mxu0 0.0
    %990 = vmatpush1.xpose.msra.mxu0 0.0
    %991 = vmatprep.subr.mxu0 0.0
    %992 = vmatpush1.xpose.msra.mxu0 0.0
    %993 = vmatprep.subr.mxu0 0.0
    %994 = vmatpush1.xpose.msra.mxu0 0.0
    %995 = vmatprep.subr.mxu0 0.0
    %996 = vmatpush1.xpose.msra.mxu0 0.0
    %997 = vmatprep.subr.mxu0 0.0
    %998 = vmatpush1.xpose.msra.mxu0 0.0
    %999 = vmatprep.subr.mxu0 0.0
    %1000 = vmatpush1.xpose.msra.mxu0 0.0
    %1001 = vmatprep.subr.mxu0 0.0
    %1002 = vmatpush1.xpose.msra.mxu0 0.0
    %1003 = vmatprep.subr.mxu0 0.0
    %1004 = vmatpush1.xpose.msra.mxu0 0.0
    %1005 = vmatprep.subr.mxu0 0.0
    %1006 = vmatpush1.xpose.msra.mxu0 0.0
    %1007 = vmatprep.subr.mxu0 0.0
    %1008 = vmatpush1.xpose.msra.mxu0 0.0
    %1009 = vmatprep.subr.mxu0 0.0
    %1010 = vmatpush1.xpose.msra.mxu0 0.0
    %1011 = vmatprep.subr.mxu0 0.0
    %1012 = vmatpush1.xpose.msra.mxu0 0.0
    %1013 = vmatprep.subr.mxu0 0.0
    %1014 = vmatpush1.xpose.msra.mxu0 0.0
    %1015 = vmatprep.subr.mxu0 0.0
    %1016 = vmatpush1.xpose.msra.mxu0 0.0
    %1017 = vmatprep.subr.mxu0 0.0
    %1018 = vmatpush1.xpose.msra.mxu0 0.0
    %1019 = vmatprep.subr.mxu0 0.0
    %1020 = vmatpush1.xpose.msra.mxu0 0.0
    %1021 = vmatprep.subr.mxu0 0.0
    %1022 = vmatpush1.xpose.msra.mxu0 0.0
    %1023 = vmatprep.subr.mxu0 0.0
    %1024 = vmatpush1.xpose.msra.mxu0 0.0
    %1025 = vmatprep.subr.mxu0 0.0
    %1026 = vmatpush1.xpose.msra.mxu0 0.0
    %1027 = vmatprep.subr.mxu0 0.0
    %1028 = vmatpush1.xpose.msra.mxu0 0.0
    %1029 = vmatprep.subr.mxu0 0.0
    %1030 = vmatpush1.xpose.msra.mxu0 0.0
    %1031 = vmatprep.subr.mxu0 0.0
    %1032 = vmatpush1.xpose.msra.mxu0 0.0
    %1033 = vmatprep.subr.mxu0 0.0
    %1034 = vmatpush1.xpose.msra.mxu0 0.0
    %1035 = vmatprep.subr.mxu0 0.0
    %1036 = vmatpush1.xpose.msra.mxu0 0.0
    %1037 = vmatprep.subr.mxu0 0.0
    %1038 = vmatpush1.xpose.msra.mxu0 0.0
    %1039 = vmatprep.subr.mxu0 0.0
    %1040 = vmatpush1.xpose.msra.mxu0 0.0
    %1041 = vmatprep.mubr.f32.mxu0 0.0
    %1042 = vmatmul.mubr.f32.gmra.mrb[0].mxu0 %v969
    %v1043 = vpop.f32.mrb[0].mxu0
    %v1044 = vadd.f32 %v231, %v1043
    %v1045 = vpop.f32.mrb[0].mxu0
    %1046 = vmatprep.mubr.f32.mxu0 0.0
    %1047 = vmatmul.mubr.f32.gmra.mrb[0].mxu0 %v971
    %v1048 = vpop.f32.mrb[0].mxu0
    %v1049 = vadd.f32 %v232, %v1048
    %v1050 = vpop.f32.mrb[0].mxu0
    %1051 = vdwg.mxu0
    %v1052 = vsel %vm451, %v1044, -inf
    %1053 = vmax.xlane.f32.xlu0 %v1052
    %v1054 = vpop.xlane.xlu0 %1053
    %v1055 = vsel %vm451, %v1049, -inf
    %1056 = vmax.xlane.f32.xlu0 %v1055
    %v1057 = vpop.xlane.xlu0 %1056
    %v1058 = vsub.f32 %v1044, %v1054
    %v1059 = vsub.f32 %v1049, %v1057
    %v1060 = vmul.f32 %v1058, 1.442695
    %v1061 = vpow.pop %v1060
    %v1062 = vmul.f32 %v1059, 1.442695
    %v1063 = vpow.pop %v1062
    %v1064 = vsel %vm451, %v1061, 0.0
    %1065 = vadd.xlane.f32.xlu0 %v1064
    %v1066 = vpop.xlane.xlu0 %1065
    %v1067 = vsel %vm451, %v1063, 0.0
    %1068 = vadd.xlane.f32.xlu0 %v1067
    %v1069 = vpop.xlane.xlu0 %1068
    %v1070 = vrcp.pop %v1066
    %v1071 = vmul.f32 %v1061, %v1070
    %v1072 = vrcp.pop %v1069
    %v1073 = vmul.f32 %v1063, %v1072
    %1074 = vrot.lane.b32.xlu0 %v353, 40
    %v1075 = vpop.permute.xlu0 %1074
    %1076 = vrot.lane.b32.xlu0 %v358, 40
    %v1077 = vpop.permute.xlu0 %1076
    %v1081 = vsel %vm451, %v1071, 0
    %v1084 = vsel %vm451, %v1073, 0
    %1086 = vmatprep.subr.mxu0 0.0
    %1087 = vmatpush1.msra.mxu0 %v1075
    %1088 = vmatprep.subr.mxu0 0.0
    %1089 = vmatpush1.msra.mxu0 %v1077
    %1090 = vmatprep.subr.mxu0 0.0
    %1091 = vmatpush1.msra.mxu0 0.0
    %1092 = vmatprep.subr.mxu0 0.0
    %1093 = vmatpush1.msra.mxu0 0.0
    %1094 = vmatprep.subr.mxu0 0.0
    %1095 = vmatpush1.msra.mxu0 0.0
    %1096 = vmatprep.subr.mxu0 0.0
    %1097 = vmatpush1.msra.mxu0 0.0
    %1098 = vmatprep.subr.mxu0 0.0
    %1099 = vmatpush1.msra.mxu0 0.0
    %1100 = vmatprep.subr.mxu0 0.0
    %1101 = vmatpush1.msra.mxu0 0.0
    %1102 = vmatprep.subr.mxu0 0.0
    %1103 = vmatpush1.msra.mxu0 0.0
    %1104 = vmatprep.subr.mxu0 0.0
    %1105 = vmatpush1.msra.mxu0 0.0
    %1106 = vmatprep.subr.mxu0 0.0
    %1107 = vmatpush1.msra.mxu0 0.0
    %1108 = vmatprep.subr.mxu0 0.0
    %1109 = vmatpush1.msra.mxu0 0.0
    %1110 = vmatprep.subr.mxu0 0.0
    %1111 = vmatpush1.msra.mxu0 0.0
    %1112 = vmatprep.subr.mxu0 0.0
    %1113 = vmatpush1.msra.mxu0 0.0
    %1114 = vmatprep.subr.mxu0 0.0
    %1115 = vmatpush1.msra.mxu0 0.0
    %1116 = vmatprep.subr.mxu0 0.0
    %1117 = vmatpush1.msra.mxu0 0.0
    %1118 = vmatprep.subr.mxu0 0.0
    %1119 = vmatpush1.msra.mxu0 0.0
    %1120 = vmatprep.subr.mxu0 0.0
    %1121 = vmatpush1.msra.mxu0 0.0
    %1122 = vmatprep.subr.mxu0 0.0
    %1123 = vmatpush1.msra.mxu0 0.0
    %1124 = vmatprep.subr.mxu0 0.0
    %1125 = vmatpush1.msra.mxu0 0.0
    %1126 = vmatprep.subr.mxu0 0.0
    %1127 = vmatpush1.msra.mxu0 0.0
    %1128 = vmatprep.subr.mxu0 0.0
    %1129 = vmatpush1.msra.mxu0 0.0
    %1130 = vmatprep.subr.mxu0 0.0
    %1131 = vmatpush1.msra.mxu0 0.0
    %1132 = vmatprep.subr.mxu0 0.0
    %1133 = vmatpush1.msra.mxu0 0.0
    %1134 = vmatprep.subr.mxu0 0.0
    %1135 = vmatpush1.msra.mxu0 0.0
    %1136 = vmatprep.subr.mxu0 0.0
    %1137 = vmatpush1.msra.mxu0 0.0
    %1138 = vmatprep.subr.mxu0 0.0
    %1139 = vmatpush1.msra.mxu0 0.0
    %1140 = vmatprep.subr.mxu0 0.0
    %1141 = vmatpush1.msra.mxu0 0.0
    %1142 = vmatprep.subr.mxu0 0.0
    %1143 = vmatpush1.msra.mxu0 0.0
    %1144 = vmatprep.subr.mxu0 0.0
    %1145 = vmatpush1.msra.mxu0 0.0
    %1146 = vmatprep.subr.mxu0 0.0
    %1147 = vmatpush1.msra.mxu0 0.0
    %1148 = vmatprep.subr.mxu0 0.0
    %1149 = vmatpush1.msra.mxu0 0.0
    %1150 = vmatprep.mubr.f32.mxu0 0.0
    %1151 = vmatmul.mubr.f32.gmra.mrb[0].mxu0 %v1081
    %v1152 = vpop.f32.mrb[0].mxu0
    %v1153 = vadd.f32 0.0, %v1152
    %v1154 = vpop.f32.mrb[0].mxu0
    %1155 = vmatprep.mubr.f32.mxu0 0.0
    %1156 = vmatmul.mubr.f32.gmra.mrb[0].mxu0 %v1084
    %v1157 = vpop.f32.mrb[0].mxu0
    %v1158 = vadd.f32 0.0, %v1157
    %v1159 = vpop.f32.mrb[0].mxu0
    %1160 = vdwg.mxu0
    %1163 = vrot.lane.b32.xlu0 %v753, 8
    %v1164 = vpop.permute.xlu0 %1163
    %1165 = vrot.lane.b32.xlu0 %v758, 8
    %v1166 = vpop.permute.xlu0 %1165
    %1171 = vrot.lane.b32.xlu0 %v953, 16
    %v1172 = vpop.permute.xlu0 %1171
    %1173 = vrot.lane.b32.xlu0 %v958, 16
    %v1174 = vpop.permute.xlu0 %1173
    %1179 = vrot.lane.b32.xlu0 %v1153, 24
    %v1180 = vpop.permute.xlu0 %1179
    %1181 = vrot.lane.b32.xlu0 %v1158, 24
    %v1182 = vpop.permute.xlu0 %1181
    %v1185 = vsel %vm367, %v553, %v1164
    %v1186 = vsel %vm367, %v558, %v1166
    %v1187 = vsel %vm451, %v1185, %v1172
    %v1188 = vsel %vm451, %v1186, %v1174
    %vm1189 = vcmask 195584
    %v1190 = vsel %vm1189, %v1187, %v1180
    %v1191 = vsel %vm1189, %v1188, %v1182
    %v1192 = vld [vmem:[%s1 + $0x100] sm:$0xff]
    %v1193 = vld [vmem:[%s1 + $0x108] sm:$0xff]
    %v1194 = vld [vmem:[%s1 + $0x110] sm:$0xff]
    %v1195 = vld [vmem:[%s1 + $0x118] sm:$0xff]
    %v1197 = vsel %vm139, %v1190, 0
    %v1200 = vsel %vm139, %v1191, 0
    %1202 = vmatprep.subr.mxu0 0.0
    %1203 = vmatpush1.msra.mxu0 %v1192
    %1204 = vmatprep.subr.mxu0 0.0
    %1205 = vmatpush1.msra.mxu0 %v1193
    %1206 = vmatprep.subr.mxu0 0.0
    %1207 = vmatpush1.msra.mxu0 %v1194
    %1208 = vmatprep.subr.mxu0 0.0
    %1209 = vmatpush1.msra.mxu0 %v1195
    %1210 = vmatprep.subr.mxu0 0.0
    %1211 = vmatpush1.msra.mxu0 0.0
    %1212 = vmatprep.subr.mxu0 0.0
    %1213 = vmatpush1.msra.mxu0 0.0
    %1214 = vmatprep.subr.mxu0 0.0
    %1215 = vmatpush1.msra.mxu0 0.0
    %1216 = vmatprep.subr.mxu0 0.0
    %1217 = vmatpush1.msra.mxu0 0.0
    %1218 = vmatprep.subr.mxu0 0.0
    %1219 = vmatpush1.msra.mxu0 0.0
    %1220 = vmatprep.subr.mxu0 0.0
    %1221 = vmatpush1.msra.mxu0 0.0
    %1222 = vmatprep.subr.mxu0 0.0
    %1223 = vmatpush1.msra.mxu0 0.0
    %1224 = vmatprep.subr.mxu0 0.0
    %1225 = vmatpush1.msra.mxu0 0.0
    %1226 = vmatprep.subr.mxu0 0.0
    %1227 = vmatpush1.msra.mxu0 0.0
    %1228 = vmatprep.subr.mxu0 0.0
    %1229 = vmatpush1.msra.mxu0 0.0
    %1230 = vmatprep.subr.mxu0 0.0
    %1231 = vmatpush1.msra.mxu0 0.0
    %1232 = vmatprep.subr.mxu0 0.0
    %1233 = vmatpush1.msra.mxu0 0.0
    %1234 = vmatprep.subr.mxu0 0.0
    %1235 = vmatpush1.msra.mxu0 0.0
    %1236 = vmatprep.subr.mxu0 0.0
    %1237 = vmatpush1.msra.mxu0 0.0
    %1238 = vmatprep.subr.mxu0 0.0
    %1239 = vmatpush1.msra.mxu0 0.0
    %1240 = vmatprep.subr.mxu0 0.0
    %1241 = vmatpush1.msra.mxu0 0.0
    %1242 = vmatprep.subr.mxu0 0.0
    %1243 = vmatpush1.msra.mxu0 0.0
    %1244 = vmatprep.subr.mxu0 0.0
    %1245 = vmatpush1.msra.mxu0 0.0
    %1246 = vmatprep.subr.mxu0 0.0
    %1247 = vmatpush1.msra.mxu0 0.0
    %1248 = vmatprep.subr.mxu0 0.0
    %1249 = vmatpush1.msra.mxu0 0.0
    %1250 = vmatprep.subr.mxu0 0.0
    %1251 = vmatpush1.msra.mxu0 0.0
    %1252 = vmatprep.subr.mxu0 0.0
    %1253 = vmatpush1.msra.mxu0 0.0
    %1254 = vmatprep.subr.mxu0 0.0
    %1255 = vmatpush1.msra.mxu0 0.0
    %1256 = vmatprep.subr.mxu0 0.0
    %1257 = vmatpush1.msra.mxu0 0.0
    %1258 = vmatprep.subr.mxu0 0.0
    %1259 = vmatpush1.msra.mxu0 0.0
    %1260 = vmatprep.subr.mxu0 0.0
    %1261 = vmatpush1.msra.mxu0 0.0
    %1262 = vmatprep.subr.mxu0 0.0
    %1263 = vmatpush1.msra.mxu0 0.0
    %1264 = vmatprep.subr.mxu0 0.0
    %1265 = vmatpush1.msra.mxu0 0.0
    %1266 = vmatprep.mubr.f32.mxu0 0.0
    %1267 = vmatmul.mubr.f32.gmra.mrb[0].mxu0 %v1197
    %v1268 = vpop.f32.mrb[0].mxu0
    %v1269 = vadd.f32 0.0, %v1268
    %v1270 = vpop.f32.mrb[0].mxu0
    %1271 = vmatprep.mubr.f32.mxu0 0.0
    %1272 = vmatmul.mubr.f32.gmra.mrb[0].mxu0 %v1200
    %v1273 = vpop.f32.mrb[0].mxu0
    %v1274 = vadd.f32 0.0, %v1273
    %v1275 = vpop.f32.mrb[0].mxu0
    %1276 = vdwg.mxu0
    %v1277 = vadd.f32 %v213, %v1269
    %v1278 = vadd.f32 %v218, %v1274
    %v1279 = vlaneseq
    %v1280 = vshrl.u32 %v1279, 7
    %v1281 = vsub.s32 3, %v1280
    %v1282 = vrot.slane %v16, %v1281
    %v1283 = vadd.f32 %v1277, %v1282
    %v1284 = vadd.f32 %v1278, %v1282
    %v1285 = vsel %vm139, %v1283, 0.0
    %1286 = vadd.xlane.f32.xlu0 %v1285
    %v1287 = vpop.xlane.xlu0 %1286
    %v1288 = vsel %vm139, %v1284, 0.0
    %1289 = vadd.xlane.f32.xlu0 %v1288
    %v1290 = vpop.xlane.xlu0 %1289
    %v1291 = vmul.f32 %v1287, %v239
    %v1292 = vmul.f32 %v1290, %v239
    %v1293 = vsub.f32 %v1283, %v1291
    %v1294 = vsub.f32 %v1284, %v1292
    %v1295 = vmul.f32 %v1293, %v1293
    %v1296 = vmul.f32 %v1294, %v1294
    %v1297 = vsel %vm139, %v1295, 0.0
    %1298 = vadd.xlane.f32.xlu0 %v1297
    %v1299 = vpop.xlane.xlu0 %1298
    %v1300 = vsel %vm139, %v1296, 0.0
    %1301 = vadd.xlane.f32.xlu0 %v1300
    %v1302 = vpop.xlane.xlu0 %1301
    %v1303 = vmul.f32 %v1299, %v239
    %v1304 = vmul.f32 %v1302, %v239
    %v1305 = vadd.f32 %v1303, 1e-05
    %v1306 = vadd.f32 %v1304, 1e-05
    %v1307 = vrsqrt.pop %v1305
    %v1308 = vrsqrt.pop %v1306
    %v1309 = vmul.f32 %v1293, %v1307
    %v1310 = vmul.f32 %v1294, %v1308
    %v1311 = vlaneseq
    %v1312 = vshrl.u32 %v1311, 7
    %v1313 = vsub.s32 4, %v1312
    %v1314 = vrot.slane %v16, %v1313
    %v1315 = vmul.f32 %v1309, %v1314
    %v1316 = vmul.f32 %v1310, %v1314
    %v1317 = vlaneseq
    %v1318 = vshrl.u32 %v1317, 7
    %v1319 = vsub.s32 5, %v1318
    %v1320 = vrot.slane %v16, %v1319
    %v1321 = vadd.f32 %v1315, %v1320
    %v1322 = vadd.f32 %v1316, %v1320
    %v1323 = vld [vmem:[%s1 + $0x80] sm:$0xff]
    %v1324 = vld [vmem:[%s1 + $0x88] sm:$0xff]
    %v1325 = vld [vmem:[%s1 + $0x90] sm:$0xff]
    %v1326 = vld [vmem:[%s1 + $0x98] sm:$0xff]
    %v1327 = vlaneseq
    %v1328 = vshrl.u32 %v1327, 7
    %v1329 = vsub.s32 6, %v1328
    %v1330 = vrot.slane %v16, %v1329
    %v1332 = vsel %vm139, %v1321, 0
    %v1335 = vsel %vm139, %v1322, 0
    %1337 = vmatprep.subr.mxu0 0.0
    %1338 = vmatpush1.msra.mxu0 %v1323
    %1339 = vmatprep.subr.mxu0 0.0
    %1340 = vmatpush1.msra.mxu0 %v1324
    %1341 = vmatprep.subr.mxu0 0.0
    %1342 = vmatpush1.msra.mxu0 %v1325
    %1343 = vmatprep.subr.mxu0 0.0
    %1344 = vmatpush1.msra.mxu0 %v1326
    %1345 = vmatprep.subr.mxu0 0.0
    %1346 = vmatpush1.msra.mxu0 0.0
    %1347 = vmatprep.subr.mxu0 0.0
    %1348 = vmatpush1.msra.mxu0 0.0
    %1349 = vmatprep.subr.mxu0 0.0
    %1350 = vmatpush1.msra.mxu0 0.0
    %1351 = vmatprep.subr.mxu0 0.0
    %1352 = vmatpush1.msra.mxu0 0.0
    %1353 = vmatprep.subr.mxu0 0.0
    %1354 = vmatpush1.msra.mxu0 0.0
    %1355 = vmatprep.subr.mxu0 0.0
    %1356 = vmatpush1.msra.mxu0 0.0
    %1357 = vmatprep.subr.mxu0 0.0
    %1358 = vmatpush1.msra.mxu0 0.0
    %1359 = vmatprep.subr.mxu0 0.0
    %1360 = vmatpush1.msra.mxu0 0.0
    %1361 = vmatprep.subr.mxu0 0.0
    %1362 = vmatpush1.msra.mxu0 0.0
    %1363 = vmatprep.subr.mxu0 0.0
    %1364 = vmatpush1.msra.mxu0 0.0
    %1365 = vmatprep.subr.mxu0 0.0
    %1366 = vmatpush1.msra.mxu0 0.0
    %1367 = vmatprep.subr.mxu0 0.0
    %1368 = vmatpush1.msra.mxu0 0.0
    %1369 = vmatprep.subr.mxu0 0.0
    %1370 = vmatpush1.msra.mxu0 0.0
    %1371 = vmatprep.subr.mxu0 0.0
    %1372 = vmatpush1.msra.mxu0 0.0
    %1373 = vmatprep.subr.mxu0 0.0
    %1374 = vmatpush1.msra.mxu0 0.0
    %1375 = vmatprep.subr.mxu0 0.0
    %1376 = vmatpush1.msra.mxu0 0.0
    %1377 = vmatprep.subr.mxu0 0.0
    %1378 = vmatpush1.msra.mxu0 0.0
    %1379 = vmatprep.subr.mxu0 0.0
    %1380 = vmatpush1.msra.mxu0 0.0
    %1381 = vmatprep.subr.mxu0 0.0
    %1382 = vmatpush1.msra.mxu0 0.0
    %1383 = vmatprep.subr.mxu0 0.0
    %1384 = vmatpush1.msra.mxu0 0.0
    %1385 = vmatprep.subr.mxu0 0.0
    %1386 = vmatpush1.msra.mxu0 0.0
    %1387 = vmatprep.subr.mxu0 0.0
    %1388 = vmatpush1.msra.mxu0 0.0
    %1389 = vmatprep.subr.mxu0 0.0
    %1390 = vmatpush1.msra.mxu0 0.0
    %1391 = vmatprep.subr.mxu0 0.0
    %1392 = vmatpush1.msra.mxu0 0.0
    %1393 = vmatprep.subr.mxu0 0.0
    %1394 = vmatpush1.msra.mxu0 0.0
    %1395 = vmatprep.subr.mxu0 0.0
    %1396 = vmatpush1.msra.mxu0 0.0
    %1397 = vmatprep.subr.mxu0 0.0
    %1398 = vmatpush1.msra.mxu0 0.0
    %1399 = vmatprep.subr.mxu0 0.0
    %1400 = vmatpush1.msra.mxu0 0.0
    %1401 = vmatprep.mubr.f32.mxu0 0.0
    %1402 = vmatmul.mubr.f32.gmra.mrb[0].mxu0 %v1332
    %v1403 = vpop.f32.mrb[0].mxu0
    %v1404 = vadd.f32 %v1330, %v1403
    %v1405 = vpop.f32.mrb[0].mxu0
    %1406 = vmatprep.mubr.f32.mxu0 0.0
    %1407 = vmatmul.mubr.f32.gmra.mrb[0].mxu0 %v1335
    %v1408 = vpop.f32.mrb[0].mxu0
    %v1409 = vadd.f32 %v1330, %v1408
    %v1410 = vpop.f32.mrb[0].mxu0
    %1411 = vdwg.mxu0
    %v1412 = vmul.f32 %v1404, 0.5
    %v1413 = vmul.f32 %v1409, 0.5
    %v1414 = vmul.f32 %v1404, 0.70710677
    %v1415 = vmul.f32 %v1409, 0.70710677
    %v1416 = verf.f32.pop %v1414
    %v1417 = verf.f32.pop %v1415
    %v1418 = vadd.f32 %v1416, 1.0
    %v1419 = vadd.f32 %v1417, 1.0
    %v1420 = vmul.f32 %v1412, %v1418
    %v1421 = vmul.f32 %v1413, %v1419
    %1438 = vrot.lane.b32.xlu0 %v20, 96
    %v1439 = vpop.permute.xlu0 %1438
    %1440 = vrot.lane.b32.xlu0 %v21, 96
    %v1441 = vpop.permute.xlu0 %1440
    %1442 = vrot.lane.b32.xlu0 %v22, 96
    %v1443 = vpop.permute.xlu0 %1442
    %1444 = vrot.lane.b32.xlu0 %v23, 96
    %v1445 = vpop.permute.xlu0 %1444
    %1446 = vrot.lane.b32.xlu0 %v24, 96
    %v1447 = vpop.permute.xlu0 %1446
    %1448 = vrot.lane.b32.xlu0 %v25, 96
    %v1449 = vpop.permute.xlu0 %1448
    %1450 = vrot.lane.b32.xlu0 %v26, 96
    %v1451 = vpop.permute.xlu0 %1450
    %1452 = vrot.lane.b32.xlu0 %v27, 96
    %v1453 = vpop.permute.xlu0 %1452
    %1454 = vrot.lane.b32.xlu0 %v28, 96
    %v1455 = vpop.permute.xlu0 %1454
    %1456 = vrot.lane.b32.xlu0 %v29, 96
    %v1457 = vpop.permute.xlu0 %1456
    %1458 = vrot.lane.b32.xlu0 %v30, 96
    %v1459 = vpop.permute.xlu0 %1458
    %1460 = vrot.lane.b32.xlu0 %v31, 96
    %v1461 = vpop.permute.xlu0 %1460
    %1462 = vrot.lane.b32.xlu0 %v32, 96
    %v1463 = vpop.permute.xlu0 %1462
    %1464 = vrot.lane.b32.xlu0 %v33, 96
    %v1465 = vpop.permute.xlu0 %1464
    %1466 = vrot.lane.b32.xlu0 %v34, 96
    %v1467 = vpop.permute.xlu0 %1466
    %1468 = vrot.lane.b32.xlu0 %v35, 96
    %v1469 = vpop.permute.xlu0 %1468
    %1486 = vmatprep.subr.mxu0 0.0
    %1487 = vmatpush1.msra.mxu0 %v1439
    %1488 = vmatprep.subr.mxu0 0.0
    %1489 = vmatpush1.msra.mxu0 %v1441
    %1490 = vmatprep.subr.mxu0 0.0
    %1491 = vmatpush1.msra.mxu0 %v1443
    %1492 = vmatprep.subr.mxu0 0.0
    %1493 = vmatpush1.msra.mxu0 %v1445
    %1494 = vmatprep.subr.mxu0 0.0
    %1495 = vmatpush1.msra.mxu0 %v1447
    %1496 = vmatprep.subr.mxu0 0.0
    %1497 = vmatpush1.msra.mxu0 %v1449
    %1498 = vmatprep.subr.mxu0 0.0
    %1499 = vmatpush1.msra.mxu0 %v1451
    %1500 = vmatprep.subr.mxu0 0.0
    %1501 = vmatpush1.msra.mxu0 %v1453
    %1502 = vmatprep.subr.mxu0 0.0
    %1503 = vmatpush1.msra.mxu0 %v1455
    %1504 = vmatprep.subr.mxu0 0.0
    %1505 = vmatpush1.msra.mxu0 %v1457
    %1506 = vmatprep.subr.mxu0 0.0
    %1507 = vmatpush1.msra.mxu0 %v1459
    %1508 = vmatprep.subr.mxu0 0.0
    %1509 = vmatpush1.msra.mxu0 %v1461
    %1510 = vmatprep.subr.mxu0 0.0
    %1511 = vmatpush1.msra.mxu0 %v1463
    %1512 = vmatprep.subr.mxu0 0.0
    %1513 = vmatpush1.msra.mxu0 %v1465
    %1514 = vmatprep.subr.mxu0 0.0
    %1515 = vmatpush1.msra.mxu0 %v1467
    %1516 = vmatprep.subr.mxu0 0.0
    %1517 = vmatpush1.msra.mxu0 %v1469
    %1518 = vmatprep.subr.mxu0 0.0
    %1519 = vmatpush1.msra.mxu0 0.0
    %1520 = vmatprep.subr.mxu0 0.0
    %1521 = vmatpush1.msra.mxu0 0.0
    %1522 = vmatprep.subr.mxu0 0.0
    %1523 = vmatpush1.msra.mxu0 0.0
    %1524 = vmatprep.subr.mxu0 0.0
    %1525 = vmatpush1.msra.mxu0 0.0
    %1526 = vmatprep.subr.mxu0 0.0
    %1527 = vmatpush1.msra.mxu0 0.0
    %1528 = vmatprep.subr.mxu0 0.0
    %1529 = vmatpush1.msra.mxu0 0.0
    %1530 = vmatprep.subr.mxu0 0.0
    %1531 = vmatpush1.msra.mxu0 0.0
    %1532 = vmatprep.subr.mxu0 0.0
    %1533 = vmatpush1.msra.mxu0 0.0
    %1534 = vmatprep.subr.mxu0 0.0
    %1535 = vmatpush1.msra.mxu0 0.0
    %1536 = vmatprep.subr.mxu0 0.0
    %1537 = vmatpush1.msra.mxu0 0.0
    %1538 = vmatprep.subr.mxu0 0.0
    %1539 = vmatpush1.msra.mxu0 0.0
    %1540 = vmatprep.subr.mxu0 0.0
    %1541 = vmatpush1.msra.mxu0 0.0
    %1542 = vmatprep.subr.mxu0 0.0
    %1543 = vmatpush1.msra.mxu0 0.0
    %1544 = vmatprep.subr.mxu0 0.0
    %1545 = vmatpush1.msra.mxu0 0.0
    %1546 = vmatprep.subr.mxu0 0.0
    %1547 = vmatpush1.msra.mxu0 0.0
    %1548 = vmatprep.subr.mxu0 0.0
    %1549 = vmatpush1.msra.mxu0 0.0
    %1550 = vmatprep.mubr.f32.mxu0 0.0
    %1551 = vmatmul.mubr.f32.gmra.mrb[0].mxu0 %v1420
    %v1552 = vpop.f32.mrb[0].mxu0
    %v1553 = vadd.f32 0.0, %v1552
    %v1554 = vpop.f32.mrb[0].mxu0
    %1555 = vmatprep.mubr.f32.mxu0 0.0
    %1556 = vmatmul.mubr.f32.gmra.mrb[0].mxu0 %v1421
    %v1557 = vpop.f32.mrb[0].mxu0
    %v1558 = vadd.f32 0.0, %v1557
    %v1559 = vpop.f32.mrb[0].mxu0
    %1560 = vdwg.mxu0
    %v1561 = vadd.f32 %v1283, %v1553
    %v1562 = vadd.f32 %v1284, %v1558
    %v1563 = vlaneseq
    %v1564 = vshrl.u32 %v1563, 7
    %v1565 = vsub.s32 7, %v1564
    %v1566 = vrot.slane %v16, %v1565
    %v1567 = vadd.f32 %v1561, %v1566
    %v1568 = vadd.f32 %v1562, %v1566
    %v1569 = vsel %vm139, %v1567, 0.0
    %1570 = vadd.xlane.f32.xlu0 %v1569
    %v1571 = vpop.xlane.xlu0 %1570
    %v1572 = vsel %vm139, %v1568, 0.0
    %1573 = vadd.xlane.f32.xlu0 %v1572
    %v1574 = vpop.xlane.xlu0 %1573
    %v1575 = vmul.f32 %v1571, %v239
    %v1576 = vmul.f32 %v1574, %v239
    %v1577 = vsub.f32 %v1567, %v1575
    %v1578 = vsub.f32 %v1568, %v1576
    %v1579 = vmul.f32 %v1577, %v1577
    %v1580 = vmul.f32 %v1578, %v1578
    %v1581 = vsel %vm139, %v1579, 0.0
    %1582 = vadd.xlane.f32.xlu0 %v1581
    %v1583 = vpop.xlane.xlu0 %1582
    %v1584 = vsel %vm139, %v1580, 0.0
    %1585 = vadd.xlane.f32.xlu0 %v1584
    %v1586 = vpop.xlane.xlu0 %1585
    %v1587 = vmul.f32 %v1583, %v239
    %v1588 = vmul.f32 %v1586, %v239
    %v1589 = vadd.f32 %v1587, 1e-05
    %v1590 = vadd.f32 %v1588, 1e-05
    %v1591 = vrsqrt.pop %v1589
    %v1592 = vrsqrt.pop %v1590
    %v1593 = vmul.f32 %v1577, %v1591
    %v1594 = vmul.f32 %v1578, %v1592
    %v1595 = vlaneseq
    %v1596 = vshrl.u32 %v1595, 7
    %v1597 = vsub.s32 0, %v1596
    %v1598 = vrot.slane %v17, %v1597
    %v1599 = vmul.f32 %v1593, %v1598
    %v1600 = vmul.f32 %v1594, %v1598
    %v1601 = vlaneseq
    %v1602 = vshrl.u32 %v1601, 7
    %v1603 = vsub.s32 1, %v1602
    %v1604 = vrot.slane %v17, %v1603
    %v1605 = vadd.f32 %v1599, %v1604
    %v1606 = vadd.f32 %v1600, %v1604
    %v1607 = vlaneseq
    %v1608 = vshrl.u32 %v1607, 7
    %v1609 = vsub.s32 2, %v1608
    %v1610 = vrot.slane %v17, %v1609
    %v1612 = vsel %vm139, %v1605, 0
    %v1615 = vsel %vm139, %v1606, 0
    %1617 = vmatprep.subr.mxu0 0.0
    %1618 = vmatpush1.msra.mxu0 %v115
    %1619 = vmatprep.subr.mxu0 0.0
    %1620 = vmatpush1.msra.mxu0 %v116
    %1621 = vmatprep.subr.mxu0 0.0
    %1622 = vmatpush1.msra.mxu0 %v117
    %1623 = vmatprep.subr.mxu0 0.0
    %1624 = vmatpush1.msra.mxu0 %v118
    %1625 = vmatprep.subr.mxu0 0.0
    %1626 = vmatpush1.msra.mxu0 0.0
    %1627 = vmatprep.subr.mxu0 0.0
    %1628 = vmatpush1.msra.mxu0 0.0
    %1629 = vmatprep.subr.mxu0 0.0
    %1630 = vmatpush1.msra.mxu0 0.0
    %1631 = vmatprep.subr.mxu0 0.0
    %1632 = vmatpush1.msra.mxu0 0.0
    %1633 = vmatprep.subr.mxu0 0.0
    %1634 = vmatpush1.msra.mxu0 0.0
    %1635 = vmatprep.subr.mxu0 0.0
    %1636 = vmatpush1.msra.mxu0 0.0
    %1637 = vmatprep.subr.mxu0 0.0
    %1638 = vmatpush1.msra.mxu0 0.0
    %1639 = vmatprep.subr.mxu0 0.0
    %1640 = vmatpush1.msra.mxu0 0.0
    %1641 = vmatprep.subr.mxu0 0.0
    %1642 = vmatpush1.msra.mxu0 0.0
    %1643 = vmatprep.subr.mxu0 0.0
    %1644 = vmatpush1.msra.mxu0 0.0
    %1645 = vmatprep.subr.mxu0 0.0
    %1646 = vmatpush1.msra.mxu0 0.0
    %1647 = vmatprep.subr.mxu0 0.0
    %1648 = vmatpush1.msra.mxu0 0.0
    %1649 = vmatprep.subr.mxu0 0.0
    %1650 = vmatpush1.msra.mxu0 0.0
    %1651 = vmatprep.subr.mxu0 0.0
    %1652 = vmatpush1.msra.mxu0 0.0
    %1653 = vmatprep.subr.mxu0 0.0
    %1654 = vmatpush1.msra.mxu0 0.0
    %1655 = vmatprep.subr.mxu0 0.0
    %1656 = vmatpush1.msra.mxu0 0.0
    %1657 = vmatprep.subr.mxu0 0.0
    %1658 = vmatpush1.msra.mxu0 0.0
    %1659 = vmatprep.subr.mxu0 0.0
    %1660 = vmatpush1.msra.mxu0 0.0
    %1661 = vmatprep.subr.mxu0 0.0
    %1662 = vmatpush1.msra.mxu0 0.0
    %1663 = vmatprep.subr.mxu0 0.0
    %1664 = vmatpush1.msra.mxu0 0.0
    %1665 = vmatprep.subr.mxu0 0.0
    %1666 = vmatpush1.msra.mxu0 0.0
    %1667 = vmatprep.subr.mxu0 0.0
    %1668 = vmatpush1.msra.mxu0 0.0
    %1669 = vmatprep.subr.mxu0 0.0
    %1670 = vmatpush1.msra.mxu0 0.0
    %1671 = vmatprep.subr.mxu0 0.0
    %1672 = vmatpush1.msra.mxu0 0.0
    %1673 = vmatprep.subr.mxu0 0.0
    %1674 = vmatpush1.msra.mxu0 0.0
    %1675 = vmatprep.subr.mxu0 0.0
    %1676 = vmatpush1.msra.mxu0 0.0
    %1677 = vmatprep.subr.mxu0 0.0
    %1678 = vmatpush1.msra.mxu0 0.0
    %1679 = vmatprep.subr.mxu0 0.0
    %1680 = vmatpush1.msra.mxu0 0.0
    %1681 = vmatprep.mubr.f32.mxu0 0.0
    %1682 = vmatmul.mubr.f32.gmra.mrb[0].mxu0 %v1612
    %v1683 = vpop.f32.mrb[0].mxu0
    %v1684 = vadd.f32 %v1610, %v1683
    %v1685 = vpop.f32.mrb[0].mxu0
    %1686 = vmatprep.mubr.f32.mxu0 0.0
    %1687 = vmatmul.mubr.f32.gmra.mrb[0].mxu0 %v1615
    %v1688 = vpop.f32.mrb[0].mxu0
    %v1689 = vadd.f32 %v1610, %v1688
    %v1690 = vpop.f32.mrb[0].mxu0
    %1691 = vdwg.mxu0
    %1694 = vrot.lane.b32.xlu0 %v1684, 96
    %v1695 = vpop.permute.xlu0 %1694
    %1696 = vrot.lane.b32.xlu0 %v1689, 96
    %v1697 = vpop.permute.xlu0 %1696
    %v1698 = vsel %vm367, %v1684, 0
    %v1700 = vsel %vm367, %v1689, 0
    %v1702 = vsel %vm367, %v1695, 0
    %v1704 = vsel %vm367, %v1697, 0
    %1706 = vmatprep.subr.mxu0 0.0
    %1707 = vmatpush1.xpose.msra.mxu0 %v1702
    %1708 = vmatprep.subr.mxu0 0.0
    %1709 = vmatpush1.xpose.msra.mxu0 %v1704
    %1710 = vmatprep.subr.mxu0 0.0
    %1711 = vmatpush1.xpose.msra.mxu0 0.0
    %1712 = vmatprep.subr.mxu0 0.0
    %1713 = vmatpush1.xpose.msra.mxu0 0.0
    %1714 = vmatprep.subr.mxu0 0.0
    %1715 = vmatpush1.xpose.msra.mxu0 0.0
    %1716 = vmatprep.subr.mxu0 0.0
    %1717 = vmatpush1.xpose.msra.mxu0 0.0
    %1718 = vmatprep.subr.mxu0 0.0
    %1719 = vmatpush1.xpose.msra.mxu0 0.0
    %1720 = vmatprep.subr.mxu0 0.0
    %1721 = vmatpush1.xpose.msra.mxu0 0.0
    %1722 = vmatprep.subr.mxu0 0.0
    %1723 = vmatpush1.xpose.msra.mxu0 0.0
    %1724 = vmatprep.subr.mxu0 0.0
    %1725 = vmatpush1.xpose.msra.mxu0 0.0
    %1726 = vmatprep.subr.mxu0 0.0
    %1727 = vmatpush1.xpose.msra.mxu0 0.0
    %1728 = vmatprep.subr.mxu0 0.0
    %1729 = vmatpush1.xpose.msra.mxu0 0.0
    %1730 = vmatprep.subr.mxu0 0.0
    %1731 = vmatpush1.xpose.msra.mxu0 0.0
    %1732 = vmatprep.subr.mxu0 0.0
    %1733 = vmatpush1.xpose.msra.mxu0 0.0
    %1734 = vmatprep.subr.mxu0 0.0
    %1735 = vmatpush1.xpose.msra.mxu0 0.0
    %1736 = vmatprep.subr.mxu0 0.0
    %1737 = vmatpush1.xpose.msra.mxu0 0.0
    %1738 = vmatprep.subr.mxu0 0.0
    %1739 = vmatpush1.xpose.msra.mxu0 0.0
    %1740 = vmatprep.subr.mxu0 0.0
    %1741 = vmatpush1.xpose.msra.mxu0 0.0
    %1742 = vmatprep.subr.mxu0 0.0
    %1743 = vmatpush1.xpose.msra.mxu0 0.0
    %1744 = vmatprep.subr.mxu0 0.0
    %1745 = vmatpush1.xpose.msra.mxu0 0.0
    %1746 = vmatprep.subr.mxu0 0.0
    %1747 = vmatpush1.xpose.msra.mxu0 0.0
    %1748 = vmatprep.subr.mxu0 0.0
    %1749 = vmatpush1.xpose.msra.mxu0 0.0
    %1750 = vmatprep.subr.mxu0 0.0
    %1751 = vmatpush1.xpose.msra.mxu0 0.0
    %1752 = vmatprep.subr.mxu0 0.0
    %1753 = vmatpush1.xpose.msra.mxu0 0.0
    %1754 = vmatprep.subr.mxu0 0.0
    %1755 = vmatpush1.xpose.msra.mxu0 0.0
    %1756 = vmatprep.subr.mxu0 0.0
    %1757 = vmatpush1.xpose.msra.mxu0 0.0
    %1758 = vmatprep.subr.mxu0 0.0
    %1759 = vmatpush1.xpose.msra.mxu0 0.0
    %1760 = vmatprep.subr.mxu0 0.0
    %1761 = vmatpush1.xpose.msra.mxu0 0.0
    %1762 = vmatprep.subr.mxu0 0.0
    %1763 = vmatpush1.xpose.msra.mxu0 0.0
    %1764 = vmatprep.subr.mxu0 0.0
    %1765 = vmatpush1.xpose.msra.mxu0 0.0
    %1766 = vmatprep.subr.mxu0 0.0
    %1767 = vmatpush1.xpose.msra.mxu0 0.0
    %1768 = vmatprep.subr.mxu0 0.0
    %1769 = vmatpush1.xpose.msra.mxu0 0.0
    %1770 = vmatprep.mubr.f32.mxu0 0.0
    %1771 = vmatmul.mubr.f32.gmra.mrb[0].mxu0 %v1698
    %v1772 = vpop.f32.mrb[0].mxu0
    %v1773 = vadd.f32 %v231, %v1772
    %v1774 = vpop.f32.mrb[0].mxu0
    %1775 = vmatprep.mubr.f32.mxu0 0.0
    %1776 = vmatmul.mubr.f32.gmra.mrb[0].mxu0 %v1700
    %v1777 = vpop.f32.mrb[0].mxu0
    %v1778 = vadd.f32 %v232, %v1777
    %v1779 = vpop.f32.mrb[0].mxu0
    %1780 = vdwg.mxu0
    %v1781 = vsel %vm451, %v1773, -inf
    %1782 = vmax.xlane.f32.xlu0 %v1781
    %v1783 = vpop.xlane.xlu0 %1782
    %v1784 = vsel %vm451, %v1778, -inf
    %1785 = vmax.xlane.f32.xlu0 %v1784
    %v1786 = vpop.xlane.xlu0 %1785
    %v1787 = vsub.f32 %v1773, %v1783
    %v1788 = vsub.f32 %v1778, %v1786
    %v1789 = vmul.f32 %v1787, 1.442695
    %v1790 = vpow.pop %v1789
    %v1791 = vmul.f32 %v1788, 1.442695
    %v1792 = vpow.pop %v1791
    %v1793 = vsel %vm451, %v1790, 0.0
    %1794 = vadd.xlane.f32.xlu0 %v1793
    %v1795 = vpop.xlane.xlu0 %1794
    %v1796 = vsel %vm451, %v1792, 0.0
    %1797 = vadd.xlane.f32.xlu0 %v1796
    %v1798 = vpop.xlane.xlu0 %1797
    %v1799 = vrcp.pop %v1795
    %v1800 = vmul.f32 %v1790, %v1799
    %v1801 = vrcp.pop %v1798
    %v1802 = vmul.f32 %v1792, %v1801
    %1803 = vrot.lane.b32.xlu0 %v1684, 64
    %v1804 = vpop.permute.xlu0 %1803
    %1805 = vrot.lane.b32.xlu0 %v1689, 64
    %v1806 = vpop.permute.xlu0 %1805
    %v1810 = vsel %vm451, %v1800, 0
    %v1813 = vsel %vm451, %v1802, 0
    %1815 = vmatprep.subr.mxu0 0.0
    %1816 = vmatpush1.msra.mxu0 %v1804
    %1817 = vmatprep.subr.mxu0 0.0
    %1818 = vmatpush1.msra.mxu0 %v1806
    %1819 = vmatprep.subr.mxu0 0.0
    %1820 = vmatpush1.msra.mxu0 0.0
    %1821 = vmatprep.subr.mxu0 0.0
    %1822 = vmatpush1.msra.mxu0 0.0
    %1823 = vmatprep.subr.mxu0 0.0
    %1824 = vmatpush1.msra.mxu0 0.0
    %1825 = vmatprep.subr.mxu0 0.0
    %1826 = vmatpush1.msra.mxu0 0.0
    %1827 = vmatprep.subr.mxu0 0.0
    %1828 = vmatpush1.msra.mxu0 0.0
    %1829 = vmatprep.subr.mxu0 0.0
    %1830 = vmatpush1.msra.mxu0 0.0
    %1831 = vmatprep.subr.mxu0 0.0
    %1832 = vmatpush1.msra.mxu0 0.0
    %1833 = vmatprep.subr.mxu0 0.0
    %1834 = vmatpush1.msra.mxu0 0.0
    %1835 = vmatprep.subr.mxu0 0.0
    %1836 = vmatpush1.msra.mxu0 0.0
    %1837 = vmatprep.subr.mxu0 0.0
    %1838 = vmatpush1.msra.mxu0 0.0
    %1839 = vmatprep.subr.mxu0 0.0
    %1840 = vmatpush1.msra.mxu0 0.0
    %1841 = vmatprep.subr.mxu0 0.0
    %1842 = vmatpush1.msra.mxu0 0.0
    %1843 = vmatprep.subr.mxu0 0.0
    %1844 = vmatpush1.msra.mxu0 0.0
    %1845 = vmatprep.subr.mxu0 0.0
    %1846 = vmatpush1.msra.mxu0 0.0
    %1847 = vmatprep.subr.mxu0 0.0
    %1848 = vmatpush1.msra.mxu0 0.0
    %1849 = vmatprep.subr.mxu0 0.0
    %1850 = vmatpush1.msra.mxu0 0.0
    %1851 = vmatprep.subr.mxu0 0.0
    %1852 = vmatpush1.msra.mxu0 0.0
    %1853 = vmatprep.subr.mxu0 0.0
    %1854 = vmatpush1.msra.mxu0 0.0
    %1855 = vmatprep.subr.mxu0 0.0
    %1856 = vmatpush1.msra.mxu0 0.0
    %1857 = vmatprep.subr.mxu0 0.0
    %1858 = vmatpush1.msra.mxu0 0.0
    %1859 = vmatprep.subr.mxu0 0.0
    %1860 = vmatpush1.msra.mxu0 0.0
    %1861 = vmatprep.subr.mxu0 0.0
    %1862 = vmatpush1.msra.mxu0 0.0
    %1863 = vmatprep.subr.mxu0 0.0
    %1864 = vmatpush1.msra.mxu0 0.0
    %1865 = vmatprep.subr.mxu0 0.0
    %1866 = vmatpush1.msra.mxu0 0.0
    %1867 = vmatprep.subr.mxu0 0.0
    %1868 = vmatpush1.msra.mxu0 0.0
    %1869 = vmatprep.subr.mxu0 0.0
    %1870 = vmatpush1.msra.mxu0 0.0
    %1871 = vmatprep.subr.mxu0 0.0
    %1872 = vmatpush1.msra.mxu0 0.0
    %1873 = vmatprep.subr.mxu0 0.0
    %1874 = vmatpush1.msra.mxu0 0.0
    %1875 = vmatprep.subr.mxu0 0.0
    %1876 = vmatpush1.msra.mxu0 0.0
    %1877 = vmatprep.subr.mxu0 0.0
    %1878 = vmatpush1.msra.mxu0 0.0
    %1879 = vmatprep.mubr.f32.mxu0 0.0
    %1880 = vmatmul.mubr.f32.gmra.mrb[0].mxu0 %v1810
    %v1881 = vpop.f32.mrb[0].mxu0
    %v1882 = vadd.f32 0.0, %v1881
    %v1883 = vpop.f32.mrb[0].mxu0
    %1884 = vmatprep.mubr.f32.mxu0 0.0
    %1885 = vmatmul.mubr.f32.gmra.mrb[0].mxu0 %v1813
    %v1886 = vpop.f32.mrb[0].mxu0
    %v1887 = vadd.f32 0.0, %v1886
    %v1888 = vpop.f32.mrb[0].mxu0
    %1889 = vdwg.mxu0
    %1890 = vrot.lane.b32.xlu0 %v1684, 120
    %v1891 = vpop.permute.xlu0 %1890
    %1892 = vrot.lane.b32.xlu0 %v1689, 120
    %v1893 = vpop.permute.xlu0 %1892
    %1894 = vrot.lane.b32.xlu0 %v1684, 88
    %v1895 = vpop.permute.xlu0 %1894
    %1896 = vrot.lane.b32.xlu0 %v1689, 88
    %v1897 = vpop.permute.xlu0 %1896
    %v1898 = vsel %vm367, %v1891, 0
    %v1900 = vsel %vm367, %v1893, 0
    %v1902 = vsel %vm367, %v1895, 0
    %v1904 = vsel %vm367, %v1897, 0
    %1906 = vmatprep.subr.mxu0 0.0
    %1907 = vmatpush1.xpose.msra.mxu0 %v1902
    %1908 = vmatprep.subr.mxu0 0.0
    %1909 = vmatpush1.xpose.msra.mxu0 %v1904
    %1910 = vmatprep.subr.mxu0 0.0
    %1911 = vmatpush1.xpose.msra.mxu0 0.0
    %1912 = vmatprep.subr.mxu0 0.0
    %1913 = vmatpush1.xpose.msra.mxu0 0.0
    %1914 = vmatprep.subr.mxu0 0.0
    %1915 = vmatpush1.xpose.msra.mxu0 0.0
    %1916 = vmatprep.subr.mxu0 0.0
    %1917 = vmatpush1.xpose.msra.mxu0 0.0
    %1918 = vmatprep.subr.mxu0 0.0
    %1919 = vmatpush1.xpose.msra.mxu0 0.0
    %1920 = vmatprep.subr.mxu0 0.0
    %1921 = vmatpush1.xpose.msra.mxu0 0.0
    %1922 = vmatprep.subr.mxu0 0.0
    %1923 = vmatpush1.xpose.msra.mxu0 0.0
    %1924 = vmatprep.subr.mxu0 0.0
    %1925 = vmatpush1.xpose.msra.mxu0 0.0
    %1926 = vmatprep.subr.mxu0 0.0
    %1927 = vmatpush1.xpose.msra.mxu0 0.0
    %1928 = vmatprep.subr.mxu0 0.0
    %1929 = vmatpush1.xpose.msra.mxu0 0.0
    %1930 = vmatprep.subr.mxu0 0.0
    %1931 = vmatpush1.xpose.msra.mxu0 0.0
    %1932 = vmatprep.subr.mxu0 0.0
    %1933 = vmatpush1.xpose.msra.mxu0 0.0
    %1934 = vmatprep.subr.mxu0 0.0
    %1935 = vmatpush1.xpose.msra.mxu0 0.0
    %1936 = vmatprep.subr.mxu0 0.0
    %1937 = vmatpush1.xpose.msra.mxu0 0.0
    %1938 = vmatprep.subr.mxu0 0.0
    %1939 = vmatpush1.xpose.msra.mxu0 0.0
    %1940 = vmatprep.subr.mxu0 0.0
    %1941 = vmatpush1.xpose.msra.mxu0 0.0
    %1942 = vmatprep.subr.mxu0 0.0
    %1943 = vmatpush1.xpose.msra.mxu0 0.0
    %1944 = vmatprep.subr.mxu0 0.0
    %1945 = vmatpush1.xpose.msra.mxu0 0.0
    %1946 = vmatprep.subr.mxu0 0.0
    %1947 = vmatpush1.xpose.msra.mxu0 0.0
    %1948 = vmatprep.subr.mxu0 0.0
    %1949 = vmatpush1.xpose.msra.mxu0 0.0
    %1950 = vmatprep.subr.mxu0 0.0
    %1951 = vmatpush1.xpose.msra.mxu0 0.0
    %1952 = vmatprep.subr.mxu0 0.0
    %1953 = vmatpush1.xpose.msra.mxu0 0.0
    %1954 = vmatprep.subr.mxu0 0.0
    %1955 = vmatpush1.xpose.msra.mxu0 0.0
    %1956 = vmatprep.subr.mxu0 0.0
    %1957 = vmatpush1.xpose.msra.mxu0 0.0
    %1958 = vmatprep.subr.mxu0 0.0
    %1959 = vmatpush1.xpose.msra.mxu0 0.0
    %1960 = vmatprep.subr.mxu0 0.0
    %1961 = vmatpush1.xpose.msra.mxu0 0.0
    %1962 = vmatprep.subr.mxu0 0.0
    %1963 = vmatpush1.xpose.msra.mxu0 0.0
    %1964 = vmatprep.subr.mxu0 0.0
    %1965 = vmatpush1.xpose.msra.mxu0 0.0
    %1966 = vmatprep.subr.mxu0 0.0
    %1967 = vmatpush1.xpose.msra.mxu0 0.0
    %1968 = vmatprep.subr.mxu0 0.0
    %1969 = vmatpush1.xpose.msra.mxu0 0.0
    %1970 = vmatprep.mubr.f32.mxu0 0.0
    %1971 = vmatmul.mubr.f32.gmra.mrb[0].mxu0 %v1898
    %v1972 = vpop.f32.mrb[0].mxu0
    %v1973 = vadd.f32 %v231, %v1972
    %v1974 = vpop.f32.mrb[0].mxu0
    %1975 = vmatprep.mubr.f32.mxu0 0.0
    %1976 = vmatmul.mubr.f32.gmra.mrb[0].mxu0 %v1900
    %v1977 = vpop.f32.mrb[0].mxu0
    %v1978 = vadd.f32 %v232, %v1977
    %v1979 = vpop.f32.mrb[0].mxu0
    %1980 = vdwg.mxu0
    %v1981 = vsel %vm451, %v1973, -inf
    %1982 = vmax.xlane.f32.xlu0 %v1981
    %v1983 = vpop.xlane.xlu0 %1982
    %v1984 = vsel %vm451, %v1978, -inf
    %1985 = vmax.xlane.f32.xlu0 %v1984
    %v1986 = vpop.xlane.xlu0 %1985
    %v1987 = vsub.f32 %v1973, %v1983
    %v1988 = vsub.f32 %v1978, %v1986
    %v1989 = vmul.f32 %v1987, 1.442695
    %v1990 = vpow.pop %v1989
    %v1991 = vmul.f32 %v1988, 1.442695
    %v1992 = vpow.pop %v1991
    %v1993 = vsel %vm451, %v1990, 0.0
    %1994 = vadd.xlane.f32.xlu0 %v1993
    %v1995 = vpop.xlane.xlu0 %1994
    %v1996 = vsel %vm451, %v1992, 0.0
    %1997 = vadd.xlane.f32.xlu0 %v1996
    %v1998 = vpop.xlane.xlu0 %1997
    %v1999 = vrcp.pop %v1995
    %v2000 = vmul.f32 %v1990, %v1999
    %v2001 = vrcp.pop %v1998
    %v2002 = vmul.f32 %v1992, %v2001
    %2003 = vrot.lane.b32.xlu0 %v1684, 56
    %v2004 = vpop.permute.xlu0 %2003
    %2005 = vrot.lane.b32.xlu0 %v1689, 56
    %v2006 = vpop.permute.xlu0 %2005
    %v2010 = vsel %vm451, %v2000, 0
    %v2013 = vsel %vm451, %v2002, 0
    %2015 = vmatprep.subr.mxu0 0.0
    %2016 = vmatpush1.msra.mxu0 %v2004
    %2017 = vmatprep.subr.mxu0 0.0
    %2018 = vmatpush1.msra.mxu0 %v2006
    %2019 = vmatprep.subr.mxu0 0.0
    %2020 = vmatpush1.msra.mxu0 0.0
    %2021 = vmatprep.subr.mxu0 0.0
    %2022 = vmatpush1.msra.mxu0 0.0
    %2023 = vmatprep.subr.mxu0 0.0
    %2024 = vmatpush1.msra.mxu0 0.0
    %2025 = vmatprep.subr.mxu0 0.0
    %2026 = vmatpush1.msra.mxu0 0.0
    %2027 = vmatprep.subr.mxu0 0.0
    %2028 = vmatpush1.msra.mxu0 0.0
    %2029 = vmatprep.subr.mxu0 0.0
    %2030 = vmatpush1.msra.mxu0 0.0
    %2031 = vmatprep.subr.mxu0 0.0
    %2032 = vmatpush1.msra.mxu0 0.0
    %2033 = vmatprep.subr.mxu0 0.0
    %2034 = vmatpush1.msra.mxu0 0.0
    %2035 = vmatprep.subr.mxu0 0.0
    %2036 = vmatpush1.msra.mxu0 0.0
    %2037 = vmatprep.subr.mxu0 0.0
    %2038 = vmatpush1.msra.mxu0 0.0
    %2039 = vmatprep.subr.mxu0 0.0
    %2040 = vmatpush1.msra.mxu0 0.0
    %2041 = vmatprep.subr.mxu0 0.0
    %2042 = vmatpush1.msra.mxu0 0.0
    %2043 = vmatprep.subr.mxu0 0.0
    %2044 = vmatpush1.msra.mxu0 0.0
    %2045 = vmatprep.subr.mxu0 0.0
    %2046 = vmatpush1.msra.mxu0 0.0
    %2047 = vmatprep.subr.mxu0 0.0
    %2048 = vmatpush1.msra.mxu0 0.0
    %2049 = vmatprep.subr.mxu0 0.0
    %2050 = vmatpush1.msra.mxu0 0.0
    %2051 = vmatprep.subr.mxu0 0.0
    %2052 = vmatpush1.msra.mxu0 0.0
    %2053 = vmatprep.subr.mxu0 0.0
    %2054 = vmatpush1.msra.mxu0 0.0
    %2055 = vmatprep.subr.mxu0 0.0
    %2056 = vmatpush1.msra.mxu0 0.0
    %2057 = vmatprep.subr.mxu0 0.0
    %2058 = vmatpush1.msra.mxu0 0.0
    %2059 = vmatprep.subr.mxu0 0.0
    %2060 = vmatpush1.msra.mxu0 0.0
    %2061 = vmatprep.subr.mxu0 0.0
    %2062 = vmatpush1.msra.mxu0 0.0
    %2063 = vmatprep.subr.mxu0 0.0
    %2064 = vmatpush1.msra.mxu0 0.0
    %2065 = vmatprep.subr.mxu0 0.0
    %2066 = vmatpush1.msra.mxu0 0.0
    %2067 = vmatprep.subr.mxu0 0.0
    %2068 = vmatpush1.msra.mxu0 0.0
    %2069 = vmatprep.subr.mxu0 0.0
    %2070 = vmatpush1.msra.mxu0 0.0
    %2071 = vmatprep.subr.mxu0 0.0
    %2072 = vmatpush1.msra.mxu0 0.0
    %2073 = vmatprep.subr.mxu0 0.0
    %2074 = vmatpush1.msra.mxu0 0.0
    %2075 = vmatprep.subr.mxu0 0.0
    %2076 = vmatpush1.msra.mxu0 0.0
    %2077 = vmatprep.subr.mxu0 0.0
    %2078 = vmatpush1.msra.mxu0 0.0
    %2079 = vmatprep.mubr.f32.mxu0 0.0
    %2080 = vmatmul.mubr.f32.gmra.mrb[0].mxu0 %v2010
    %v2081 = vpop.f32.mrb[0].mxu0
    %v2082 = vadd.f32 0.0, %v2081
    %v2083 = vpop.f32.mrb[0].mxu0
    %2084 = vmatprep.mubr.f32.mxu0 0.0
    %2085 = vmatmul.mubr.f32.gmra.mrb[0].mxu0 %v2013
    %v2086 = vpop.f32.mrb[0].mxu0
    %v2087 = vadd.f32 0.0, %v2086
    %v2088 = vpop.f32.mrb[0].mxu0
    %2089 = vdwg.mxu0
    %2090 = vrot.lane.b32.xlu0 %v1684, 112
    %v2091 = vpop.permute.xlu0 %2090
    %2092 = vrot.lane.b32.xlu0 %v1689, 112
    %v2093 = vpop.permute.xlu0 %2092
    %2094 = vrot.lane.b32.xlu0 %v1684, 80
    %v2095 = vpop.permute.xlu0 %2094
    %2096 = vrot.lane.b32.xlu0 %v1689, 80
    %v2097 = vpop.permute.xlu0 %2096
    %v2098 = vsel %vm367, %v2091, 0
    %v2100 = vsel %vm367, %v2093, 0
    %v2102 = vsel %vm367, %v2095, 0
    %v2104 = vsel %vm367, %v2097, 0
    %2106 = vmatprep.subr.mxu0 0.0
    %2107 = vmatpush1.xpose.msra.mxu0 %v2102
    %2108 = vmatprep.subr.mxu0 0.0
    %2109 = vmatpush1.xpose.msra.mxu0 %v2104
    %2110 = vmatprep.subr.mxu0 0.0
    %2111 = vmatpush1.xpose.msra.mxu0 0.0
    %2112 = vmatprep.subr.mxu0 0.0
    %2113 = vmatpush1.xpose.msra.mxu0 0.0
    %2114 = vmatprep.subr.mxu0 0.0
    %2115 = vmatpush1.xpose.msra.mxu0 0.0
    %2116 = vmatprep.subr.mxu0 0.0
    %2117 = vmatpush1.xpose.msra.mxu0 0.0
    %2118 = vmatprep.subr.mxu0 0.0
    %2119 = vmatpush1.xpose.msra.mxu0 0.0
    %2120 = vmatprep.subr.mxu0 0.0
    %2121 = vmatpush1.xpose.msra.mxu0 0.0
    %2122 = vmatprep.subr.mxu0 0.0
    %2123 = vmatpush1.xpose.msra.mxu0 0.0
    %2124 = vmatprep.subr.mxu0 0.0
    %2125 = vmatpush1.xpose.msra.mxu0 0.0
    %2126 = vmatprep.subr.mxu0 0.0
    %2127 = vmatpush1.xpose.msra.mxu0 0.0
    %2128 = vmatprep.subr.mxu0 0.0
    %2129 = vmatpush1.xpose.msra.mxu0 0.0
    %2130 = vmatprep.subr.mxu0 0.0
    %2131 = vmatpush1.xpose.msra.mxu0 0.0
    %2132 = vmatprep.subr.mxu0 0.0
    %2133 = vmatpush1.xpose.msra.mxu0 0.0
    %2134 = vmatprep.subr.mxu0 0.0
    %2135 = vmatpush1.xpose.msra.mxu0 0.0
    %2136 = vmatprep.subr.mxu0 0.0
    %2137 = vmatpush1.xpose.msra.mxu0 0.0
    %2138 = vmatprep.subr.mxu0 0.0
    %2139 = vmatpush1.xpose.msra.mxu0 0.0
    %2140 = vmatprep.subr.mxu0 0.0
    %2141 = vmatpush1.xpose.msra.mxu0 0.0
    %2142 = vmatprep.subr.mxu0 0.0
    %2143 = vmatpush1.xpose.msra.mxu0 0.0
    %2144 = vmatprep.subr.mxu0 0.0
    %2145 = vmatpush1.xpose.msra.mxu0 0.0
    %2146 = vmatprep.subr.mxu0 0.0
    %2147 = vmatpush1.xpose.msra.mxu0 0.0
    %2148 = vmatprep.subr.mxu0 0.0
    %2149 = vmatpush1.xpose.msra.mxu0 0.0
    %2150 = vmatprep.subr.mxu0 0.0
    %2151 = vmatpush1.xpose.msra.mxu0 0.0
    %2152 = vmatprep.subr.mxu0 0.0
    %2153 = vmatpush1.xpose.msra.mxu0 0.0
    %2154 = vmatprep.subr.mxu0 0.0
    %2155 = vmatpush1.xpose.msra.mxu0 0.0
    %2156 = vmatprep.subr.mxu0 0.0
    %2157 = vmatpush1.xpose.msra.mxu0 0.0
    %2158 = vmatprep.subr.mxu0 0.0
    %2159 = vmatpush1.xpose.msra.mxu0 0.0
    %2160 = vmatprep.subr.mxu0 0.0
    %2161 = vmatpush1.xpose.msra.mxu0 0.0
    %2162 = vmatprep.subr.mxu0 0.0
    %2163 = vmatpush1.xpose.msra.mxu0 0.0
    %2164 = vmatprep.subr.mxu0 0.0
    %2165 = vmatpush1.xpose.msra.mxu0 0.0
    %2166 = vmatprep.subr.mxu0 0.0
    %2167 = vmatpush1.xpose.msra.mxu0 0.0
    %2168 = vmatprep.subr.mxu0 0.0
    %2169 = vmatpush1.xpose.msra.mxu0 0.0
    %2170 = vmatprep.mubr.f32.mxu0 0.0
    %2171 = vmatmul.mubr.f32.gmra.mrb[0].mxu0 %v2098
    %v2172 = vpop.f32.mrb[0].mxu0
    %v2173 = vadd.f32 %v231, %v2172
    %v2174 = vpop.f32.mrb[0].mxu0
    %2175 = vmatprep.mubr.f32.mxu0 0.0
    %2176 = vmatmul.mubr.f32.gmra.mrb[0].mxu0 %v2100
    %v2177 = vpop.f32.mrb[0].mxu0
    %v2178 = vadd.f32 %v232, %v2177
    %v2179 = vpop.f32.mrb[0].mxu0
    %2180 = vdwg.mxu0
    %v2181 = vsel %vm451, %v2173, -inf
    %2182 = vmax.xlane.f32.xlu0 %v2181
    %v2183 = vpop.xlane.xlu0 %2182
    %v2184 = vsel %vm451, %v2178, -inf
    %2185 = vmax.xlane.f32.xlu0 %v2184
    %v2186 = vpop.xlane.xlu0 %2185
    %v2187 = vsub.f32 %v2173, %v2183
    %v2188 = vsub.f32 %v2178, %v2186
    %v2189 = vmul.f32 %v2187, 1.442695
    %v2190 = vpow.pop %v2189
    %v2191 = vmul.f32 %v2188, 1.442695
    %v2192 = vpow.pop %v2191
    %v2193 = vsel %vm451, %v2190, 0.0
    %2194 = vadd.xlane.f32.xlu0 %v2193
    %v2195 = vpop.xlane.xlu0 %2194
    %v2196 = vsel %vm451, %v2192, 0.0
    %2197 = vadd.xlane.f32.xlu0 %v2196
    %v2198 = vpop.xlane.xlu0 %2197
    %v2199 = vrcp.pop %v2195
    %v2200 = vmul.f32 %v2190, %v2199
    %v2201 = vrcp.pop %v2198
    %v2202 = vmul.f32 %v2192, %v2201
    %2203 = vrot.lane.b32.xlu0 %v1684, 48
    %v2204 = vpop.permute.xlu0 %2203
    %2205 = vrot.lane.b32.xlu0 %v1689, 48
    %v2206 = vpop.permute.xlu0 %2205
    %v2210 = vsel %vm451, %v2200, 0
    %v2213 = vsel %vm451, %v2202, 0
    %2215 = vmatprep.subr.mxu0 0.0
    %2216 = vmatpush1.msra.mxu0 %v2204
    %2217 = vmatprep.subr.mxu0 0.0
    %2218 = vmatpush1.msra.mxu0 %v2206
    %2219 = vmatprep.subr.mxu0 0.0
    %2220 = vmatpush1.msra.mxu0 0.0
    %2221 = vmatprep.subr.mxu0 0.0
    %2222 = vmatpush1.msra.mxu0 0.0
    %2223 = vmatprep.subr.mxu0 0.0
    %2224 = vmatpush1.msra.mxu0 0.0
    %2225 = vmatprep.subr.mxu0 0.0
    %2226 = vmatpush1.msra.mxu0 0.0
    %2227 = vmatprep.subr.mxu0 0.0
    %2228 = vmatpush1.msra.mxu0 0.0
    %2229 = vmatprep.subr.mxu0 0.0
    %2230 = vmatpush1.msra.mxu0 0.0
    %2231 = vmatprep.subr.mxu0 0.0
    %2232 = vmatpush1.msra.mxu0 0.0
    %2233 = vmatprep.subr.mxu0 0.0
    %2234 = vmatpush1.msra.mxu0 0.0
    %2235 = vmatprep.subr.mxu0 0.0
    %2236 = vmatpush1.msra.mxu0 0.0
    %2237 = vmatprep.subr.mxu0 0.0
    %2238 = vmatpush1.msra.mxu0 0.0
    %2239 = vmatprep.subr.mxu0 0.0
    %2240 = vmatpush1.msra.mxu0 0.0
    %2241 = vmatprep.subr.mxu0 0.0
    %2242 = vmatpush1.msra.mxu0 0.0
    %2243 = vmatprep.subr.mxu0 0.0
    %2244 = vmatpush1.msra.mxu0 0.0
    %2245 = vmatprep.subr.mxu0 0.0
    %2246 = vmatpush1.msra.mxu0 0.0
    %2247 = vmatprep.subr.mxu0 0.0
    %2248 = vmatpush1.msra.mxu0 0.0
    %2249 = vmatprep.subr.mxu0 0.0
    %2250 = vmatpush1.msra.mxu0 0.0
    %2251 = vmatprep.subr.mxu0 0.0
    %2252 = vmatpush1.msra.mxu0 0.0
    %2253 = vmatprep.subr.mxu0 0.0
    %2254 = vmatpush1.msra.mxu0 0.0
    %2255 = vmatprep.subr.mxu0 0.0
    %2256 = vmatpush1.msra.mxu0 0.0
    %2257 = vmatprep.subr.mxu0 0.0
    %2258 = vmatpush1.msra.mxu0 0.0
    %2259 = vmatprep.subr.mxu0 0.0
    %2260 = vmatpush1.msra.mxu0 0.0
    %2261 = vmatprep.subr.mxu0 0.0
    %2262 = vmatpush1.msra.mxu0 0.0
    %2263 = vmatprep.subr.mxu0 0.0
    %2264 = vmatpush1.msra.mxu0 0.0
    %2265 = vmatprep.subr.mxu0 0.0
    %2266 = vmatpush1.msra.mxu0 0.0
    %2267 = vmatprep.subr.mxu0 0.0
    %2268 = vmatpush1.msra.mxu0 0.0
    %2269 = vmatprep.subr.mxu0 0.0
    %2270 = vmatpush1.msra.mxu0 0.0
    %2271 = vmatprep.subr.mxu0 0.0
    %2272 = vmatpush1.msra.mxu0 0.0
    %2273 = vmatprep.subr.mxu0 0.0
    %2274 = vmatpush1.msra.mxu0 0.0
    %2275 = vmatprep.subr.mxu0 0.0
    %2276 = vmatpush1.msra.mxu0 0.0
    %2277 = vmatprep.subr.mxu0 0.0
    %2278 = vmatpush1.msra.mxu0 0.0
    %2279 = vmatprep.mubr.f32.mxu0 0.0
    %2280 = vmatmul.mubr.f32.gmra.mrb[0].mxu0 %v2210
    %v2281 = vpop.f32.mrb[0].mxu0
    %v2282 = vadd.f32 0.0, %v2281
    %v2283 = vpop.f32.mrb[0].mxu0
    %2284 = vmatprep.mubr.f32.mxu0 0.0
    %2285 = vmatmul.mubr.f32.gmra.mrb[0].mxu0 %v2213
    %v2286 = vpop.f32.mrb[0].mxu0
    %v2287 = vadd.f32 0.0, %v2286
    %v2288 = vpop.f32.mrb[0].mxu0
    %2289 = vdwg.mxu0
    %2290 = vrot.lane.b32.xlu0 %v1684, 104
    %v2291 = vpop.permute.xlu0 %2290
    %2292 = vrot.lane.b32.xlu0 %v1689, 104
    %v2293 = vpop.permute.xlu0 %2292
    %2294 = vrot.lane.b32.xlu0 %v1684, 72
    %v2295 = vpop.permute.xlu0 %2294
    %2296 = vrot.lane.b32.xlu0 %v1689, 72
    %v2297 = vpop.permute.xlu0 %2296
    %v2298 = vsel %vm367, %v2291, 0
    %v2300 = vsel %vm367, %v2293, 0
    %v2302 = vsel %vm367, %v2295, 0
    %v2304 = vsel %vm367, %v2297, 0
    %2306 = vmatprep.subr.mxu0 0.0
    %2307 = vmatpush1.xpose.msra.mxu0 %v2302
    %2308 = vmatprep.subr.mxu0 0.0
    %2309 = vmatpush1.xpose.msra.mxu0 %v2304
    %2310 = vmatprep.subr.mxu0 0.0
    %2311 = vmatpush1.xpose.msra.mxu0 0.0
    %2312 = vmatprep.subr.mxu0 0.0
    %2313 = vmatpush1.xpose.msra.mxu0 0.0
    %2314 = vmatprep.subr.mxu0 0.0
    %2315 = vmatpush1.xpose.msra.mxu0 0.0
    %2316 = vmatprep.subr.mxu0 0.0
    %2317 = vmatpush1.xpose.msra.mxu0 0.0
    %2318 = vmatprep.subr.mxu0 0.0
    %2319 = vmatpush1.xpose.msra.mxu0 0.0
    %2320 = vmatprep.subr.mxu0 0.0
    %2321 = vmatpush1.xpose.msra.mxu0 0.0
    %2322 = vmatprep.subr.mxu0 0.0
    %2323 = vmatpush1.xpose.msra.mxu0 0.0
    %2324 = vmatprep.subr.mxu0 0.0
    %2325 = vmatpush1.xpose.msra.mxu0 0.0
    %2326 = vmatprep.subr.mxu0 0.0
    %2327 = vmatpush1.xpose.msra.mxu0 0.0
    %2328 = vmatprep.subr.mxu0 0.0
    %2329 = vmatpush1.xpose.msra.mxu0 0.0
    %2330 = vmatprep.subr.mxu0 0.0
    %2331 = vmatpush1.xpose.msra.mxu0 0.0
    %2332 = vmatprep.subr.mxu0 0.0
    %2333 = vmatpush1.xpose.msra.mxu0 0.0
    %2334 = vmatprep.subr.mxu0 0.0
    %2335 = vmatpush1.xpose.msra.mxu0 0.0
    %2336 = vmatprep.subr.mxu0 0.0
    %2337 = vmatpush1.xpose.msra.mxu0 0.0
    %2338 = vmatprep.subr.mxu0 0.0
    %2339 = vmatpush1.xpose.msra.mxu0 0.0
    %2340 = vmatprep.subr.mxu0 0.0
    %2341 = vmatpush1.xpose.msra.mxu0 0.0
    %2342 = vmatprep.subr.mxu0 0.0
    %2343 = vmatpush1.xpose.msra.mxu0 0.0
    %2344 = vmatprep.subr.mxu0 0.0
    %2345 = vmatpush1.xpose.msra.mxu0 0.0
    %2346 = vmatprep.subr.mxu0 0.0
    %2347 = vmatpush1.xpose.msra.mxu0 0.0
    %2348 = vmatprep.subr.mxu0 0.0
    %2349 = vmatpush1.xpose.msra.mxu0 0.0
    %2350 = vmatprep.subr.mxu0 0.0
    %2351 = vmatpush1.xpose.msra.mxu0 0.0
    %2352 = vmatprep.subr.mxu0 0.0
    %2353 = vmatpush1.xpose.msra.mxu0 0.0
    %2354 = vmatprep.subr.mxu0 0.0
    %2355 = vmatpush1.xpose.msra.mxu0 0.0
    %2356 = vmatprep.subr.mxu0 0.0
    %2357 = vmatpush1.xpose.msra.mxu0 0.0
    %2358 = vmatprep.subr.mxu0 0.0
    %2359 = vmatpush1.xpose.msra.mxu0 0.0
    %2360 = vmatprep.subr.mxu0 0.0
    %2361 = vmatpush1.xpose.msra.mxu0 0.0
    %2362 = vmatprep.subr.mxu0 0.0
    %2363 = vmatpush1.xpose.msra.mxu0 0.0
    %2364 = vmatprep.subr.mxu0 0.0
    %2365 = vmatpush1.xpose.msra.mxu0 0.0
    %2366 = vmatprep.subr.mxu0 0.0
    %2367 = vmatpush1.xpose.msra.mxu0 0.0
    %2368 = vmatprep.subr.mxu0 0.0
    %2369 = vmatpush1.xpose.msra.mxu0 0.0
    %2370 = vmatprep.mubr.f32.mxu0 0.0
    %2371 = vmatmul.mubr.f32.gmra.mrb[0].mxu0 %v2298
    %v2372 = vpop.f32.mrb[0].mxu0
    %v2373 = vadd.f32 %v231, %v2372
    %v2374 = vpop.f32.mrb[0].mxu0
    %2375 = vmatprep.mubr.f32.mxu0 0.0
    %2376 = vmatmul.mubr.f32.gmra.mrb[0].mxu0 %v2300
    %v2377 = vpop.f32.mrb[0].mxu0
    %v2378 = vadd.f32 %v232, %v2377
    %v2379 = vpop.f32.mrb[0].mxu0
    %2380 = vdwg.mxu0
    %v2381 = vsel %vm451, %v2373, -inf
    %2382 = vmax.xlane.f32.xlu0 %v2381
    %v2383 = vpop.xlane.xlu0 %2382
    %v2384 = vsel %vm451, %v2378, -inf
    %2385 = vmax.xlane.f32.xlu0 %v2384
    %v2386 = vpop.xlane.xlu0 %2385
    %v2387 = vsub.f32 %v2373, %v2383
    %v2388 = vsub.f32 %v2378, %v2386
    %v2389 = vmul.f32 %v2387, 1.442695
    %v2390 = vpow.pop %v2389
    %v2391 = vmul.f32 %v2388, 1.442695
    %v2392 = vpow.pop %v2391
    %v2393 = vsel %vm451, %v2390, 0.0
    %2394 = vadd.xlane.f32.xlu0 %v2393
    %v2395 = vpop.xlane.xlu0 %2394
    %v2396 = vsel %vm451, %v2392, 0.0
    %2397 = vadd.xlane.f32.xlu0 %v2396
    %v2398 = vpop.xlane.xlu0 %2397
    %v2399 = vrcp.pop %v2395
    %v2400 = vmul.f32 %v2390, %v2399
    %v2401 = vrcp.pop %v2398
    %v2402 = vmul.f32 %v2392, %v2401
    %2403 = vrot.lane.b32.xlu0 %v1684, 40
    %v2404 = vpop.permute.xlu0 %2403
    %2405 = vrot.lane.b32.xlu0 %v1689, 40
    %v2406 = vpop.permute.xlu0 %2405
    %v2410 = vsel %vm451, %v2400, 0
    %v2413 = vsel %vm451, %v2402, 0
    %2415 = vmatprep.subr.mxu0 0.0
    %2416 = vmatpush1.msra.mxu0 %v2404
    %2417 = vmatprep.subr.mxu0 0.0
    %2418 = vmatpush1.msra.mxu0 %v2406
    %2419 = vmatprep.subr.mxu0 0.0
    %2420 = vmatpush1.msra.mxu0 0.0
    %2421 = vmatprep.subr.mxu0 0.0
    %2422 = vmatpush1.msra.mxu0 0.0
    %2423 = vmatprep.subr.mxu0 0.0
    %2424 = vmatpush1.msra.mxu0 0.0
    %2425 = vmatprep.subr.mxu0 0.0
    %2426 = vmatpush1.msra.mxu0 0.0
    %2427 = vmatprep.subr.mxu0 0.0
    %2428 = vmatpush1.msra.mxu0 0.0
    %2429 = vmatprep.subr.mxu0 0.0
    %2430 = vmatpush1.msra.mxu0 0.0
    %2431 = vmatprep.subr.mxu0 0.0
    %2432 = vmatpush1.msra.mxu0 0.0
    %2433 = vmatprep.subr.mxu0 0.0
    %2434 = vmatpush1.msra.mxu0 0.0
    %2435 = vmatprep.subr.mxu0 0.0
    %2436 = vmatpush1.msra.mxu0 0.0
    %2437 = vmatprep.subr.mxu0 0.0
    %2438 = vmatpush1.msra.mxu0 0.0
    %2439 = vmatprep.subr.mxu0 0.0
    %2440 = vmatpush1.msra.mxu0 0.0
    %2441 = vmatprep.subr.mxu0 0.0
    %2442 = vmatpush1.msra.mxu0 0.0
    %2443 = vmatprep.subr.mxu0 0.0
    %2444 = vmatpush1.msra.mxu0 0.0
    %2445 = vmatprep.subr.mxu0 0.0
    %2446 = vmatpush1.msra.mxu0 0.0
    %2447 = vmatprep.subr.mxu0 0.0
    %2448 = vmatpush1.msra.mxu0 0.0
    %2449 = vmatprep.subr.mxu0 0.0
    %2450 = vmatpush1.msra.mxu0 0.0
    %2451 = vmatprep.subr.mxu0 0.0
    %2452 = vmatpush1.msra.mxu0 0.0
    %2453 = vmatprep.subr.mxu0 0.0
    %2454 = vmatpush1.msra.mxu0 0.0
    %2455 = vmatprep.subr.mxu0 0.0
    %2456 = vmatpush1.msra.mxu0 0.0
    %2457 = vmatprep.subr.mxu0 0.0
    %2458 = vmatpush1.msra.mxu0 0.0
    %2459 = vmatprep.subr.mxu0 0.0
    %2460 = vmatpush1.msra.mxu0 0.0
    %2461 = vmatprep.subr.mxu0 0.0
    %2462 = vmatpush1.msra.mxu0 0.0
    %2463 = vmatprep.subr.mxu0 0.0
    %2464 = vmatpush1.msra.mxu0 0.0
    %2465 = vmatprep.subr.mxu0 0.0
    %2466 = vmatpush1.msra.mxu0 0.0
    %2467 = vmatprep.subr.mxu0 0.0
    %2468 = vmatpush1.msra.mxu0 0.0
    %2469 = vmatprep.subr.mxu0 0.0
    %2470 = vmatpush1.msra.mxu0 0.0
    %2471 = vmatprep.subr.mxu0 0.0
    %2472 = vmatpush1.msra.mxu0 0.0
    %2473 = vmatprep.subr.mxu0 0.0
    %2474 = vmatpush1.msra.mxu0 0.0
    %2475 = vmatprep.subr.mxu0 0.0
    %2476 = vmatpush1.msra.mxu0 0.0
    %2477 = vmatprep.subr.mxu0 0.0
    %2478 = vmatpush1.msra.mxu0 0.0
    %2479 = vmatprep.mubr.f32.mxu0 0.0
    %2480 = vmatmul.mubr.f32.gmra.mrb[0].mxu0 %v2410
    %v2481 = vpop.f32.mrb[0].mxu0
    %v2482 = vadd.f32 0.0, %v2481
    %v2483 = vpop.f32.mrb[0].mxu0
    %2484 = vmatprep.mubr.f32.mxu0 0.0
    %2485 = vmatmul.mubr.f32.gmra.mrb[0].mxu0 %v2413
    %v2486 = vpop.f32.mrb[0].mxu0
    %v2487 = vadd.f32 0.0, %v2486
    %v2488 = vpop.f32.mrb[0].mxu0
    %2489 = vdwg.mxu0
    %2492 = vrot.lane.b32.xlu0 %v2082, 8
    %v2493 = vpop.permute.xlu0 %2492
    %2494 = vrot.lane.b32.xlu0 %v2087, 8
    %v2495 = vpop.permute.xlu0 %2494
    %2500 = vrot.lane.b32.xlu0 %v2282, 16
    %v2501 = vpop.permute.xlu0 %2500
    %2502 = vrot.lane.b32.xlu0 %v2287, 16
    %v2503 = vpop.permute.xlu0 %2502
    %2508 = vrot.lane.b32.xlu0 %v2482, 24
    %v2509 = vpop.permute.xlu0 %2508
    %2510 = vrot.lane.b32.xlu0 %v2487, 24
    %v2511 = vpop.permute.xlu0 %2510
    %v2514 = vsel %vm367, %v1882, %v2493
    %v2515 = vsel %vm367, %v1887, %v2495
    %v2516 = vsel %vm451, %v2514, %v2501
    %v2517 = vsel %vm451, %v2515, %v2503
    %v2518 = vsel %vm1189, %v2516, %v2509
    %v2519 = vsel %vm1189, %v2517, %v2511
    %2524 = vrot.lane.b32.xlu0 %v1192, 96
    %v2525 = vpop.permute.xlu0 %2524
    %2526 = vrot.lane.b32.xlu0 %v1193, 96
    %v2527 = vpop.permute.xlu0 %2526
    %2528 = vrot.lane.b32.xlu0 %v1194, 96
    %v2529 = vpop.permute.xlu0 %2528
    %2530 = vrot.lane.b32.xlu0 %v1195, 96
    %v2531 = vpop.permute.xlu0 %2530
    %v2537 = vsel %vm139, %v2518, 0
    %v2540 = vsel %vm139, %v2519, 0
    %2542 = vmatprep.subr.mxu0 0.0
    %2543 = vmatpush1.msra.mxu0 %v2525
    %2544 = vmatprep.subr.mxu0 0.0
    %2545 = vmatpush1.msra.mxu0 %v2527
    %2546 = vmatprep.subr.mxu0 0.0
    %2547 = vmatpush1.msra.mxu0 %v2529
    %2548 = vmatprep.subr.mxu0 0.0
    %2549 = vmatpush1.msra.mxu0 %v2531
    %2550 = vmatprep.subr.mxu0 0.0
    %2551 = vmatpush1.msra.mxu0 0.0
    %2552 = vmatprep.subr.mxu0 0.0
    %2553 = vmatpush1.msra.mxu0 0.0
    %2554 = vmatprep.subr.mxu0 0.0
    %2555 = vmatpush1.msra.mxu0 0.0
    %2556 = vmatprep.subr.mxu0 0.0
    %2557 = vmatpush1.msra.mxu0 0.0
    %2558 = vmatprep.subr.mxu0 0.0
    %2559 = vmatpush1.msra.mxu0 0.0
    %2560 = vmatprep.subr.mxu0 0.0
    %2561 = vmatpush1.msra.mxu0 0.0
    %2562 = vmatprep.subr.mxu0 0.0
    %2563 = vmatpush1.msra.mxu0 0.0
    %2564 = vmatprep.subr.mxu0 0.0
    %2565 = vmatpush1.msra.mxu0 0.0
    %2566 = vmatprep.subr.mxu0 0.0
    %2567 = vmatpush1.msra.mxu0 0.0
    %2568 = vmatprep.subr.mxu0 0.0
    %2569 = vmatpush1.msra.mxu0 0.0
    %2570 = vmatprep.subr.mxu0 0.0
    %2571 = vmatpush1.msra.mxu0 0.0
    %2572 = vmatprep.subr.mxu0 0.0
    %2573 = vmatpush1.msra.mxu0 0.0
    %2574 = vmatprep.subr.mxu0 0.0
    %2575 = vmatpush1.msra.mxu0 0.0
    %2576 = vmatprep.subr.mxu0 0.0
    %2577 = vmatpush1.msra.mxu0 0.0
    %2578 = vmatprep.subr.mxu0 0.0
    %2579 = vmatpush1.msra.mxu0 0.0
    %2580 = vmatprep.subr.mxu0 0.0
    %2581 = vmatpush1.msra.mxu0 0.0
    %2582 = vmatprep.subr.mxu0 0.0
    %2583 = vmatpush1.msra.mxu0 0.0
    %2584 = vmatprep.subr.mxu0 0.0
    %2585 = vmatpush1.msra.mxu0 0.0
    %2586 = vmatprep.subr.mxu0 0.0
    %2587 = vmatpush1.msra.mxu0 0.0
    %2588 = vmatprep.subr.mxu0 0.0
    %2589 = vmatpush1.msra.mxu0 0.0
    %2590 = vmatprep.subr.mxu0 0.0
    %2591 = vmatpush1.msra.mxu0 0.0
    %2592 = vmatprep.subr.mxu0 0.0
    %2593 = vmatpush1.msra.mxu0 0.0
    %2594 = vmatprep.subr.mxu0 0.0
    %2595 = vmatpush1.msra.mxu0 0.0
    %2596 = vmatprep.subr.mxu0 0.0
    %2597 = vmatpush1.msra.mxu0 0.0
    %2598 = vmatprep.subr.mxu0 0.0
    %2599 = vmatpush1.msra.mxu0 0.0
    %2600 = vmatprep.subr.mxu0 0.0
    %2601 = vmatpush1.msra.mxu0 0.0
    %2602 = vmatprep.subr.mxu0 0.0
    %2603 = vmatpush1.msra.mxu0 0.0
    %2604 = vmatprep.subr.mxu0 0.0
    %2605 = vmatpush1.msra.mxu0 0.0
    %2606 = vmatprep.mubr.f32.mxu0 0.0
    %2607 = vmatmul.mubr.f32.gmra.mrb[0].mxu0 %v2537
    %v2608 = vpop.f32.mrb[0].mxu0
    %v2609 = vadd.f32 0.0, %v2608
    %v2610 = vpop.f32.mrb[0].mxu0
    %2611 = vmatprep.mubr.f32.mxu0 0.0
    %2612 = vmatmul.mubr.f32.gmra.mrb[0].mxu0 %v2540
    %v2613 = vpop.f32.mrb[0].mxu0
    %v2614 = vadd.f32 0.0, %v2613
    %v2615 = vpop.f32.mrb[0].mxu0
    %2616 = vdwg.mxu0
    %v2617 = vadd.f32 %v1567, %v2609
    %v2618 = vadd.f32 %v1568, %v2614
    %v2619 = vlaneseq
    %v2620 = vshrl.u32 %v2619, 7
    %v2621 = vsub.s32 3, %v2620
    %v2622 = vrot.slane %v17, %v2621
    %v2623 = vadd.f32 %v2617, %v2622
    %v2624 = vadd.f32 %v2618, %v2622
    %v2625 = vsel %vm139, %v2623, 0.0
    %2626 = vadd.xlane.f32.xlu0 %v2625
    %v2627 = vpop.xlane.xlu0 %2626
    %v2628 = vsel %vm139, %v2624, 0.0
    %2629 = vadd.xlane.f32.xlu0 %v2628
    %v2630 = vpop.xlane.xlu0 %2629
    %v2631 = vmul.f32 %v2627, %v239
    %v2632 = vmul.f32 %v2630, %v239
    %v2633 = vsub.f32 %v2623, %v2631
    %v2634 = vsub.f32 %v2624, %v2632
    %v2635 = vmul.f32 %v2633, %v2633
    %v2636 = vmul.f32 %v2634, %v2634
    %v2637 = vsel %vm139, %v2635, 0.0
    %2638 = vadd.xlane.f32.xlu0 %v2637
    %v2639 = vpop.xlane.xlu0 %2638
    %v2640 = vsel %vm139, %v2636, 0.0
    %2641 = vadd.xlane.f32.xlu0 %v2640
    %v2642 = vpop.xlane.xlu0 %2641
    %v2643 = vmul.f32 %v2639, %v239
    %v2644 = vmul.f32 %v2642, %v239
    %v2645 = vadd.f32 %v2643, 1e-05
    %v2646 = vadd.f32 %v2644, 1e-05
    %v2647 = vrsqrt.pop %v2645
    %v2648 = vrsqrt.pop %v2646
    %v2649 = vmul.f32 %v2633, %v2647
    %v2650 = vmul.f32 %v2634, %v2648
    %v2651 = vlaneseq
    %v2652 = vshrl.u32 %v2651, 7
    %v2653 = vsub.s32 4, %v2652
    %v2654 = vrot.slane %v17, %v2653
    %v2655 = vmul.f32 %v2649, %v2654
    %v2656 = vmul.f32 %v2650, %v2654
    %v2657 = vlaneseq
    %v2658 = vshrl.u32 %v2657, 7
    %v2659 = vsub.s32 5, %v2658
    %v2660 = vrot.slane %v17, %v2659
    %v2661 = vadd.f32 %v2655, %v2660
    %v2662 = vadd.f32 %v2656, %v2660
    %v2663 = vld [vmem:[%s1 + $0xa0] sm:$0xff]
    %v2664 = vld [vmem:[%s1 + $0xa8] sm:$0xff]
    %v2665 = vld [vmem:[%s1 + $0xb0] sm:$0xff]
    %v2666 = vld [vmem:[%s1 + $0xb8] sm:$0xff]
    %v2667 = vlaneseq
    %v2668 = vshrl.u32 %v2667, 7
    %v2669 = vsub.s32 6, %v2668
    %v2670 = vrot.slane %v17, %v2669
    %v2672 = vsel %vm139, %v2661, 0
    %v2675 = vsel %vm139, %v2662, 0
    %2677 = vmatprep.subr.mxu0 0.0
    %2678 = vmatpush1.msra.mxu0 %v2663
    %2679 = vmatprep.subr.mxu0 0.0
    %2680 = vmatpush1.msra.mxu0 %v2664
    %2681 = vmatprep.subr.mxu0 0.0
    %2682 = vmatpush1.msra.mxu0 %v2665
    %2683 = vmatprep.subr.mxu0 0.0
    %2684 = vmatpush1.msra.mxu0 %v2666
    %2685 = vmatprep.subr.mxu0 0.0
    %2686 = vmatpush1.msra.mxu0 0.0
    %2687 = vmatprep.subr.mxu0 0.0
    %2688 = vmatpush1.msra.mxu0 0.0
    %2689 = vmatprep.subr.mxu0 0.0
    %2690 = vmatpush1.msra.mxu0 0.0
    %2691 = vmatprep.subr.mxu0 0.0
    %2692 = vmatpush1.msra.mxu0 0.0
    %2693 = vmatprep.subr.mxu0 0.0
    %2694 = vmatpush1.msra.mxu0 0.0
    %2695 = vmatprep.subr.mxu0 0.0
    %2696 = vmatpush1.msra.mxu0 0.0
    %2697 = vmatprep.subr.mxu0 0.0
    %2698 = vmatpush1.msra.mxu0 0.0
    %2699 = vmatprep.subr.mxu0 0.0
    %2700 = vmatpush1.msra.mxu0 0.0
    %2701 = vmatprep.subr.mxu0 0.0
    %2702 = vmatpush1.msra.mxu0 0.0
    %2703 = vmatprep.subr.mxu0 0.0
    %2704 = vmatpush1.msra.mxu0 0.0
    %2705 = vmatprep.subr.mxu0 0.0
    %2706 = vmatpush1.msra.mxu0 0.0
    %2707 = vmatprep.subr.mxu0 0.0
    %2708 = vmatpush1.msra.mxu0 0.0
    %2709 = vmatprep.subr.mxu0 0.0
    %2710 = vmatpush1.msra.mxu0 0.0
    %2711 = vmatprep.subr.mxu0 0.0
    %2712 = vmatpush1.msra.mxu0 0.0
    %2713 = vmatprep.subr.mxu0 0.0
    %2714 = vmatpush1.msra.mxu0 0.0
    %2715 = vmatprep.subr.mxu0 0.0
    %2716 = vmatpush1.msra.mxu0 0.0
    %2717 = vmatprep.subr.mxu0 0.0
    %2718 = vmatpush1.msra.mxu0 0.0
    %2719 = vmatprep.subr.mxu0 0.0
    %2720 = vmatpush1.msra.mxu0 0.0
    %2721 = vmatprep.subr.mxu0 0.0
    %2722 = vmatpush1.msra.mxu0 0.0
    %2723 = vmatprep.subr.mxu0 0.0
    %2724 = vmatpush1.msra.mxu0 0.0
    %2725 = vmatprep.subr.mxu0 0.0
    %2726 = vmatpush1.msra.mxu0 0.0
    %2727 = vmatprep.subr.mxu0 0.0
    %2728 = vmatpush1.msra.mxu0 0.0
    %2729 = vmatprep.subr.mxu0 0.0
    %2730 = vmatpush1.msra.mxu0 0.0
    %2731 = vmatprep.subr.mxu0 0.0
    %2732 = vmatpush1.msra.mxu0 0.0
    %2733 = vmatprep.subr.mxu0 0.0
    %2734 = vmatpush1.msra.mxu0 0.0
    %2735 = vmatprep.subr.mxu0 0.0
    %2736 = vmatpush1.msra.mxu0 0.0
    %2737 = vmatprep.subr.mxu0 0.0
    %2738 = vmatpush1.msra.mxu0 0.0
    %2739 = vmatprep.subr.mxu0 0.0
    %2740 = vmatpush1.msra.mxu0 0.0
    %2741 = vmatprep.mubr.f32.mxu0 0.0
    %2742 = vmatmul.mubr.f32.gmra.mrb[0].mxu0 %v2672
    %v2743 = vpop.f32.mrb[0].mxu0
    %v2744 = vadd.f32 %v2670, %v2743
    %v2745 = vpop.f32.mrb[0].mxu0
    %2746 = vmatprep.mubr.f32.mxu0 0.0
    %2747 = vmatmul.mubr.f32.gmra.mrb[0].mxu0 %v2675
    %v2748 = vpop.f32.mrb[0].mxu0
    %v2749 = vadd.f32 %v2670, %v2748
    %v2750 = vpop.f32.mrb[0].mxu0
    %2751 = vdwg.mxu0
    %v2752 = vmul.f32 %v2744, 0.5
    %v2753 = vmul.f32 %v2749, 0.5
    %v2754 = vmul.f32 %v2744, 0.70710677
    %v2755 = vmul.f32 %v2749, 0.70710677
    %v2756 = verf.f32.pop %v2754
    %v2757 = verf.f32.pop %v2755
    %v2758 = vadd.f32 %v2756, 1.0
    %v2759 = vadd.f32 %v2757, 1.0
    %v2760 = vmul.f32 %v2752, %v2758
    %v2761 = vmul.f32 %v2753, %v2759
    %2762 = vrot.lane.b32.xlu0 %v20, 64
    %v2763 = vpop.permute.xlu0 %2762
    %2764 = vrot.lane.b32.xlu0 %v21, 64
    %v2765 = vpop.permute.xlu0 %2764
    %2766 = vrot.lane.b32.xlu0 %v22, 64
    %v2767 = vpop.permute.xlu0 %2766
    %2768 = vrot.lane.b32.xlu0 %v23, 64
    %v2769 = vpop.permute.xlu0 %2768
    %2770 = vrot.lane.b32.xlu0 %v24, 64
    %v2771 = vpop.permute.xlu0 %2770
    %2772 = vrot.lane.b32.xlu0 %v25, 64
    %v2773 = vpop.permute.xlu0 %2772
    %2774 = vrot.lane.b32.xlu0 %v26, 64
    %v2775 = vpop.permute.xlu0 %2774
    %2776 = vrot.lane.b32.xlu0 %v27, 64
    %v2777 = vpop.permute.xlu0 %2776
    %2778 = vrot.lane.b32.xlu0 %v28, 64
    %v2779 = vpop.permute.xlu0 %2778
    %2780 = vrot.lane.b32.xlu0 %v29, 64
    %v2781 = vpop.permute.xlu0 %2780
    %2782 = vrot.lane.b32.xlu0 %v30, 64
    %v2783 = vpop.permute.xlu0 %2782
    %2784 = vrot.lane.b32.xlu0 %v31, 64
    %v2785 = vpop.permute.xlu0 %2784
    %2786 = vrot.lane.b32.xlu0 %v32, 64
    %v2787 = vpop.permute.xlu0 %2786
    %2788 = vrot.lane.b32.xlu0 %v33, 64
    %v2789 = vpop.permute.xlu0 %2788
    %2790 = vrot.lane.b32.xlu0 %v34, 64
    %v2791 = vpop.permute.xlu0 %2790
    %2792 = vrot.lane.b32.xlu0 %v35, 64
    %v2793 = vpop.permute.xlu0 %2792
    %2810 = vmatprep.subr.mxu0 0.0
    %2811 = vmatpush1.msra.mxu0 %v2763
    %2812 = vmatprep.subr.mxu0 0.0
    %2813 = vmatpush1.msra.mxu0 %v2765
    %2814 = vmatprep.subr.mxu0 0.0
    %2815 = vmatpush1.msra.mxu0 %v2767
    %2816 = vmatprep.subr.mxu0 0.0
    %2817 = vmatpush1.msra.mxu0 %v2769
    %2818 = vmatprep.subr.mxu0 0.0
    %2819 = vmatpush1.msra.mxu0 %v2771
    %2820 = vmatprep.subr.mxu0 0.0
    %2821 = vmatpush1.msra.mxu0 %v2773
    %2822 = vmatprep.subr.mxu0 0.0
    %2823 = vmatpush1.msra.mxu0 %v2775
    %2824 = vmatprep.subr.mxu0 0.0
    %2825 = vmatpush1.msra.mxu0 %v2777
    %2826 = vmatprep.subr.mxu0 0.0
    %2827 = vmatpush1.msra.mxu0 %v2779
    %2828 = vmatprep.subr.mxu0 0.0
    %2829 = vmatpush1.msra.mxu0 %v2781
    %2830 = vmatprep.subr.mxu0 0.0
    %2831 = vmatpush1.msra.mxu0 %v2783
    %2832 = vmatprep.subr.mxu0 0.0
    %2833 = vmatpush1.msra.mxu0 %v2785
    %2834 = vmatprep.subr.mxu0 0.0
    %2835 = vmatpush1.msra.mxu0 %v2787
    %2836 = vmatprep.subr.mxu0 0.0
    %2837 = vmatpush1.msra.mxu0 %v2789
    %2838 = vmatprep.subr.mxu0 0.0
    %2839 = vmatpush1.msra.mxu0 %v2791
    %2840 = vmatprep.subr.mxu0 0.0
    %2841 = vmatpush1.msra.mxu0 %v2793
    %2842 = vmatprep.subr.mxu0 0.0
    %2843 = vmatpush1.msra.mxu0 0.0
    %2844 = vmatprep.subr.mxu0 0.0
    %2845 = vmatpush1.msra.mxu0 0.0
    %2846 = vmatprep.subr.mxu0 0.0
    %2847 = vmatpush1.msra.mxu0 0.0
    %2848 = vmatprep.subr.mxu0 0.0
    %2849 = vmatpush1.msra.mxu0 0.0
    %2850 = vmatprep.subr.mxu0 0.0
    %2851 = vmatpush1.msra.mxu0 0.0
    %2852 = vmatprep.subr.mxu0 0.0
    %2853 = vmatpush1.msra.mxu0 0.0
    %2854 = vmatprep.subr.mxu0 0.0
    %2855 = vmatpush1.msra.mxu0 0.0
    %2856 = vmatprep.subr.mxu0 0.0
    %2857 = vmatpush1.msra.mxu0 0.0
    %2858 = vmatprep.subr.mxu0 0.0
    %2859 = vmatpush1.msra.mxu0 0.0
    %2860 = vmatprep.subr.mxu0 0.0
    %2861 = vmatpush1.msra.mxu0 0.0
    %2862 = vmatprep.subr.mxu0 0.0
    %2863 = vmatpush1.msra.mxu0 0.0
    %2864 = vmatprep.subr.mxu0 0.0
    %2865 = vmatpush1.msra.mxu0 0.0
    %2866 = vmatprep.subr.mxu0 0.0
    %2867 = vmatpush1.msra.mxu0 0.0
    %2868 = vmatprep.subr.mxu0 0.0
    %2869 = vmatpush1.msra.mxu0 0.0
    %2870 = vmatprep.subr.mxu0 0.0
    %2871 = vmatpush1.msra.mxu0 0.0
    %2872 = vmatprep.subr.mxu0 0.0
    %2873 = vmatpush1.msra.mxu0 0.0
    %2874 = vmatprep.mubr.f32.mxu0 0.0
    %2875 = vmatmul.mubr.f32.gmra.mrb[0].mxu0 %v2760
    %v2876 = vpop.f32.mrb[0].mxu0
    %v2877 = vadd.f32 0.0, %v2876
    %v2878 = vpop.f32.mrb[0].mxu0
    %2879 = vmatprep.mubr.f32.mxu0 0.0
    %2880 = vmatmul.mubr.f32.gmra.mrb[0].mxu0 %v2761
    %v2881 = vpop.f32.mrb[0].mxu0
    %v2882 = vadd.f32 0.0, %v2881
    %v2883 = vpop.f32.mrb[0].mxu0
    %2884 = vdwg.mxu0
    %v2885 = vadd.f32 %v2623, %v2877
    %v2886 = vadd.f32 %v2624, %v2882
    %v2887 = vlaneseq
    %v2888 = vshrl.u32 %v2887, 7
    %v2889 = vsub.s32 7, %v2888
    %v2890 = vrot.slane %v17, %v2889
    %v2891 = vadd.f32 %v2885, %v2890
    %v2892 = vadd.f32 %v2886, %v2890
    %v2893 = vsel %vm139, %v2891, 0.0
    %2894 = vadd.xlane.f32.xlu0 %v2893
    %v2895 = vpop.xlane.xlu0 %2894
    %v2896 = vsel %vm139, %v2892, 0.0
    %2897 = vadd.xlane.f32.xlu0 %v2896
    %v2898 = vpop.xlane.xlu0 %2897
    %v2899 = vmul.f32 %v2895, %v239
    %v2900 = vmul.f32 %v2898, %v239
    %v2901 = vsub.f32 %v2891, %v2899
    %v2902 = vsub.f32 %v2892, %v2900
    %v2903 = vmul.f32 %v2901, %v2901
    %v2904 = vmul.f32 %v2902, %v2902
    %v2905 = vsel %vm139, %v2903, 0.0
    %2906 = vadd.xlane.f32.xlu0 %v2905
    %v2907 = vpop.xlane.xlu0 %2906
    %v2908 = vsel %vm139, %v2904, 0.0
    %2909 = vadd.xlane.f32.xlu0 %v2908
    %v2910 = vpop.xlane.xlu0 %2909
    %v2911 = vmul.f32 %v2907, %v239
    %v2912 = vmul.f32 %v2910, %v239
    %v2913 = vadd.f32 %v2911, 1e-05
    %v2914 = vadd.f32 %v2912, 1e-05
    %v2915 = vrsqrt.pop %v2913
    %v2916 = vrsqrt.pop %v2914
    %v2917 = vmul.f32 %v2901, %v2915
    %v2918 = vmul.f32 %v2902, %v2916
    %v2919 = vlaneseq
    %v2920 = vshrl.u32 %v2919, 7
    %v2921 = vsub.s32 2, %v2920
    %v2922 = vrot.slane %v15, %v2921
    %v2923 = vmul.f32 %v2917, %v2922
    %v2924 = vmul.f32 %v2918, %v2922
    %v2925 = vlaneseq
    %v2926 = vshrl.u32 %v2925, 7
    %v2927 = vsub.s32 3, %v2926
    %v2928 = vrot.slane %v15, %v2927
    %v2929 = vadd.f32 %v2923, %v2928
    %v2930 = vadd.f32 %v2924, %v2928
    %v2931 = vmul.u32 %v222, 8
    %vm2932 = vcmp.ge.s32.totalorder %v225, %v2931
    %v2933 = vadd.s32 %v2931, 8
    %vm2934 = vcmp.lt.s32.totalorder %v225, %v2933
    %vm2935 = vmand %vm2932, %vm2934
    %v2936 = vsel %vm2935, 0.125, 0.0
    %v2938 = vsel %vm451, %v2936, 0
    %2940 = vmatprep.subr.mxu0 0.0
    %2941 = vmatpush1.msra.mxu0 %v2929
    %2942 = vmatprep.subr.mxu0 0.0
    %2943 = vmatpush1.msra.mxu0 %v2930
    %2944 = vmatprep.subr.mxu0 0.0
    %2945 = vmatpush1.msra.mxu0 0.0
    %2946 = vmatprep.subr.mxu0 0.0
    %2947 = vmatpush1.msra.mxu0 0.0
    %2948 = vmatprep.subr.mxu0 0.0
    %2949 = vmatpush1.msra.mxu0 0.0
    %2950 = vmatprep.subr.mxu0 0.0
    %2951 = vmatpush1.msra.mxu0 0.0
    %2952 = vmatprep.subr.mxu0 0.0
    %2953 = vmatpush1.msra.mxu0 0.0
    %2954 = vmatprep.subr.mxu0 0.0
    %2955 = vmatpush1.msra.mxu0 0.0
    %2956 = vmatprep.subr.mxu0 0.0
    %2957 = vmatpush1.msra.mxu0 0.0
    %2958 = vmatprep.subr.mxu0 0.0
    %2959 = vmatpush1.msra.mxu0 0.0
    %2960 = vmatprep.subr.mxu0 0.0
    %2961 = vmatpush1.msra.mxu0 0.0
    %2962 = vmatprep.subr.mxu0 0.0
    %2963 = vmatpush1.msra.mxu0 0.0
    %2964 = vmatprep.subr.mxu0 0.0
    %2965 = vmatpush1.msra.mxu0 0.0
    %2966 = vmatprep.subr.mxu0 0.0
    %2967 = vmatpush1.msra.mxu0 0.0
    %2968 = vmatprep.subr.mxu0 0.0
    %2969 = vmatpush1.msra.mxu0 0.0
    %2970 = vmatprep.subr.mxu0 0.0
    %2971 = vmatpush1.msra.mxu0 0.0
    %2972 = vmatprep.subr.mxu0 0.0
    %2973 = vmatpush1.msra.mxu0 0.0
    %2974 = vmatprep.subr.mxu0 0.0
    %2975 = vmatpush1.msra.mxu0 0.0
    %2976 = vmatprep.subr.mxu0 0.0
    %2977 = vmatpush1.msra.mxu0 0.0
    %2978 = vmatprep.subr.mxu0 0.0
    %2979 = vmatpush1.msra.mxu0 0.0
    %2980 = vmatprep.subr.mxu0 0.0
    %2981 = vmatpush1.msra.mxu0 0.0
    %2982 = vmatprep.subr.mxu0 0.0
    %2983 = vmatpush1.msra.mxu0 0.0
    %2984 = vmatprep.subr.mxu0 0.0
    %2985 = vmatpush1.msra.mxu0 0.0
    %2986 = vmatprep.subr.mxu0 0.0
    %2987 = vmatpush1.msra.mxu0 0.0
    %2988 = vmatprep.subr.mxu0 0.0
    %2989 = vmatpush1.msra.mxu0 0.0
    %2990 = vmatprep.subr.mxu0 0.0
    %2991 = vmatpush1.msra.mxu0 0.0
    %2992 = vmatprep.subr.mxu0 0.0
    %2993 = vmatpush1.msra.mxu0 0.0
    %2994 = vmatprep.subr.mxu0 0.0
    %2995 = vmatpush1.msra.mxu0 0.0
    %2996 = vmatprep.subr.mxu0 0.0
    %2997 = vmatpush1.msra.mxu0 0.0
    %2998 = vmatprep.subr.mxu0 0.0
    %2999 = vmatpush1.msra.mxu0 0.0
    %3000 = vmatprep.subr.mxu0 0.0
    %3001 = vmatpush1.msra.mxu0 0.0
    %3002 = vmatprep.subr.mxu0 0.0
    %3003 = vmatpush1.msra.mxu0 0.0
    %3004 = vmatprep.mubr.f32.mxu0 0.0
    %3005 = vmatmul.mubr.f32.gmra.mrb[0].mxu0 %v2938
    %v3006 = vpop.f32.mrb[0].mxu0
    %v3007 = vadd.f32 0.0, %v3006
    %v3008 = vpop.f32.mrb[0].mxu0
    %3009 = vdwg.mxu0
    %v3010 = vlaneseq
    %v3011 = vshrl.u32 %v3010, 7
    %v3012 = vsub.s32 4, %v3011
    %v3013 = vrot.slane %v15, %v3012
    %3014 = vrot.lane.b32.xlu0 %v1192, 64
    %v3015 = vpop.permute.xlu0 %3014
    %3016 = vrot.lane.b32.xlu0 %v1193, 64
    %v3017 = vpop.permute.xlu0 %3016
    %3018 = vrot.lane.b32.xlu0 %v1194, 64
    %v3019 = vpop.permute.xlu0 %3018
    %3020 = vrot.lane.b32.xlu0 %v1195, 64
    %v3021 = vpop.permute.xlu0 %3020
    %v3027 = vsel %vm139, %v3007, 0
    %3029 = vmatprep.subr.mxu0 0.0
    %3030 = vmatpush1.msra.mxu0 %v3015
    %3031 = vmatprep.subr.mxu0 0.0
    %3032 = vmatpush1.msra.mxu0 %v3017
    %3033 = vmatprep.subr.mxu0 0.0
    %3034 = vmatpush1.msra.mxu0 %v3019
    %3035 = vmatprep.subr.mxu0 0.0
    %3036 = vmatpush1.msra.mxu0 %v3021
    %3037 = vmatprep.subr.mxu0 0.0
    %3038 = vmatpush1.msra.mxu0 0.0
    %3039 = vmatprep.subr.mxu0 0.0
    %3040 = vmatpush1.msra.mxu0 0.0
    %3041 = vmatprep.subr.mxu0 0.0
    %3042 = vmatpush1.msra.mxu0 0.0
    %3043 = vmatprep.subr.mxu0 0.0
    %3044 = vmatpush1.msra.mxu0 0.0
    %3045 = vmatprep.subr.mxu0 0.0
    %3046 = vmatpush1.msra.mxu0 0.0
    %3047 = vmatprep.subr.mxu0 0.0
    %3048 = vmatpush1.msra.mxu0 0.0
    %3049 = vmatprep.subr.mxu0 0.0
    %3050 = vmatpush1.msra.mxu0 0.0
    %3051 = vmatprep.subr.mxu0 0.0
    %3052 = vmatpush1.msra.mxu0 0.0
    %3053 = vmatprep.subr.mxu0 0.0
    %3054 = vmatpush1.msra.mxu0 0.0
    %3055 = vmatprep.subr.mxu0 0.0
    %3056 = vmatpush1.msra.mxu0 0.0
    %3057 = vmatprep.subr.mxu0 0.0
    %3058 = vmatpush1.msra.mxu0 0.0
    %3059 = vmatprep.subr.mxu0 0.0
    %3060 = vmatpush1.msra.mxu0 0.0
    %3061 = vmatprep.subr.mxu0 0.0
    %3062 = vmatpush1.msra.mxu0 0.0
    %3063 = vmatprep.subr.mxu0 0.0
    %3064 = vmatpush1.msra.mxu0 0.0
    %3065 = vmatprep.subr.mxu0 0.0
    %3066 = vmatpush1.msra.mxu0 0.0
    %3067 = vmatprep.subr.mxu0 0.0
    %3068 = vmatpush1.msra.mxu0 0.0
    %3069 = vmatprep.subr.mxu0 0.0
    %3070 = vmatpush1.msra.mxu0 0.0
    %3071 = vmatprep.subr.mxu0 0.0
    %3072 = vmatpush1.msra.mxu0 0.0
    %3073 = vmatprep.subr.mxu0 0.0
    %3074 = vmatpush1.msra.mxu0 0.0
    %3075 = vmatprep.subr.mxu0 0.0
    %3076 = vmatpush1.msra.mxu0 0.0
    %3077 = vmatprep.subr.mxu0 0.0
    %3078 = vmatpush1.msra.mxu0 0.0
    %3079 = vmatprep.subr.mxu0 0.0
    %3080 = vmatpush1.msra.mxu0 0.0
    %3081 = vmatprep.subr.mxu0 0.0
    %3082 = vmatpush1.msra.mxu0 0.0
    %3083 = vmatprep.subr.mxu0 0.0
    %3084 = vmatpush1.msra.mxu0 0.0
    %3085 = vmatprep.subr.mxu0 0.0
    %3086 = vmatpush1.msra.mxu0 0.0
    %3087 = vmatprep.subr.mxu0 0.0
    %3088 = vmatpush1.msra.mxu0 0.0
    %3089 = vmatprep.subr.mxu0 0.0
    %3090 = vmatpush1.msra.mxu0 0.0
    %3091 = vmatprep.subr.mxu0 0.0
    %3092 = vmatpush1.msra.mxu0 0.0
    %3093 = vmatprep.mubr.f32.mxu0 0.0
    %3094 = vmatmul.mubr.f32.gmra.mrb[0].mxu0 %v3027
    %v3095 = vpop.f32.mrb[0].mxu0
    %v3096 = vadd.f32 %v3013, %v3095
    %v3097 = vpop.f32.mrb[0].mxu0
    %3098 = vdwg.mxu0
    %vm3099 = vcmask 41984
    %3100 = vst.msk [vmem:[#allocation2] sm:$0x3] %vm3099, %v3096
    // Predicated region
    $region14: #{vit_radiology_forward.1} parent=1 // pred_check
      _
    $region15: #{vit_radiology_forward.1} parent=1 // pred_check_branch
      %3102 = sbr.rel (0) target = $region17
    $region16: #{vit_radiology_forward.1} parent=1 // pred_region
      %s3104 = ssub.s32 32, 32
      %3105 = vsyncadd [#allocation3], %s3104
      %s3107 = sshll.u32 [#allocation2], 4
      %s3108 = int_to_ptr.vmem [resolvable:$true] %s3107
      %3110 = dma.vmem_to_hbm [thread:$0]  %s3108, 32, %s3, [#allocation3]
    $region17: #{vit_radiology_forward.1} parent=1 // pred_fallthru
      _
    // Predicated region
    $region18: #{vit_radiology_forward.1} parent=1 // pred_check
      _
    $region19: #{vit_radiology_forward.1} parent=1 // pred_check_branch
      %3112 = sbr.rel (0) target = $region21
    $region20: #{vit_radiology_forward.1} parent=1 // pred_region
      %3113 = dma.done [#allocation3], 32
    $region21: #{vit_radiology_forward.1} parent=1 // pred_fallthru
      _
    %3114 = vsyncpa [#allocation3], 1

</llo_original>
